<compile_context>
chip_gen: v6e
topology: v6e:2x2x1
jax: 0.10.0
libtpu: 0.0.40
codegen_flags: <defaults>
</compile_context>

<pallas_src>
import functools

import jax
import jax.numpy as jnp
from jax.experimental import pallas as pl
from jax.experimental.pallas import tpu as pltpu

BN_EPS = 0.0                          # nn.BatchNorm2d(n, False) -> eps == float(False) == 0.0
_VMEM_LIMIT = 32 * 1024 * 1024        # explicit budget: safe on v5e/v6e (128 MiB) and v7x (64 MiB)


def _elu(x):
    return jnp.where(x > 0, x, jnp.exp(jnp.minimum(x, 0.0)) - 1.0)


def _compiler_params():
    return pltpu.CompilerParams(
        dimension_semantics=("parallel",),
        vmem_limit_bytes=_VMEM_LIMIT,
    )


def _pick_nb(batch):
    """Samples per grid step: amortize ~0.35us/step overhead but keep grid extent >= 2
    (two TensorCores on v7x)."""
    return max(1, min(8, batch // 2))


# ----------------- Kernel 1: conv1 (1xC spatial filter) + ELU + BN1 -----------------
def _conv1_bn_kernel(x_ref, w_ref, b_ref, sc_ref, sh_ref, o_ref):
    # x_ref: (C, NB*Tpad) f32, samples folded into the lane axis.
    y = jnp.dot(w_ref[...], x_ref[...], preferred_element_type=jnp.float32)   # (16, NB*Tpad)
    y = _elu(y + b_ref[...])
    o_ref[...] = (y * sc_ref[...] + sh_ref[...]).astype(o_ref.dtype)


def conv1_stage(x_flat, w1r, b1, sc1, sh1, nb, tpad):
    C, L = x_flat.shape                     # L = Bpad * tpad
    F1 = w1r.shape[0]
    lanes = nb * tpad
    num_tiles = L // lanes
    return pl.pallas_call(
        _conv1_bn_kernel,
        out_shape=jax.ShapeDtypeStruct((F1, L), jnp.bfloat16),
        grid=(num_tiles,),
        in_specs=[
            pl.BlockSpec((C, lanes), lambda i: (0, i)),
            pl.BlockSpec((F1, C), lambda i: (0, 0)),
            pl.BlockSpec((F1, 1), lambda i: (0, 0)),
            pl.BlockSpec((F1, 1), lambda i: (0, 0)),
            pl.BlockSpec((F1, 1), lambda i: (0, 0)),
        ],
        out_specs=pl.BlockSpec((F1, lanes), lambda i: (0, i)),
        compiler_params=_compiler_params(),
    )(x_flat, w1r, b1, sc1, sh1)


# ---------- Kernel 2: conv2 + ELU + BN2 + MaxPool2d(2, stride 4), fully fused ----------
def _conv2_bn_pool_kernel(p_ref, w_ref, b_ref, sc_ref, sh_ref, o_ref, *, nb, npos, windows):
    # p_ref: (128, windows*nb*npos) bf16, lane order [pool-window position][sample][pool pos]
    z = jnp.dot(w_ref[...], p_ref[...], preferred_element_type=jnp.float32)   # (4, windows*nb*npos)
    slab = nb * npos
    zmax = z[:, 0:slab]
    zmin = z[:, 0:slab]
    for j in range(1, windows):
        zj = z[:, j * slab:(j + 1) * slab]
        zmax = jnp.maximum(zmax, zj)
        zmin = jnp.minimum(zmin, zj)
    sc = sc_ref[...]
    # torch order is pool(BN(ELU(conv + b))).  ELU(.+b) is monotone increasing, so the max
    # commutes with it; BN flips the order when its folded scale is negative -> select.
    zsel = jnp.where(sc >= 0, zmax, zmin)
    y = _elu(zsel + b_ref[...])
    o_ref[...] = (y * sc + sh_ref[...]).astype(o_ref.dtype)


def conv2_stage(p2, w2f, b2, sc2, sh2, nb, npos):
    K2, L = p2.shape
    CO = w2f.shape[0]
    lanes_in = 4 * nb * npos
    lanes_out = nb * npos
    num_tiles = L // lanes_in
    kern = functools.partial(_conv2_bn_pool_kernel, nb=nb, npos=npos, windows=4)
    return pl.pallas_call(
        kern,
        out_shape=jax.ShapeDtypeStruct((CO, num_tiles * lanes_out), jnp.bfloat16),
        grid=(num_tiles,),
        in_specs=[
            pl.BlockSpec((K2, lanes_in), lambda i: (0, i)),
            pl.BlockSpec((CO, K2), lambda i: (0, 0)),
            pl.BlockSpec((CO, 1), lambda i: (0, 0)),
            pl.BlockSpec((CO, 1), lambda i: (0, 0)),
            pl.BlockSpec((CO, 1), lambda i: (0, 0)),
        ],
        out_specs=pl.BlockSpec((CO, lanes_out), lambda i: (0, i)),
        compiler_params=_compiler_params(),
    )(p2, w2f, b2, sc2, sh2)


# --- Kernel 3: conv3 + ELU + BN3 + MaxPool2d((2,4)) + Linear(128,20) + sigmoid, fused ---
def _conv3_bn_pool_fc_kernel(p_ref, w3_ref, b3_ref, sc_ref, sh_ref,
                             wfc_ref, bfc_ref, o_ref, *, nb, npos, windows, nchan):
    # p_ref: (1024, windows*nb*npos) bf16, lane order [pool-window position][sample][pool pos]
    z = jnp.dot(w3_ref[...], p_ref[...], preferred_element_type=jnp.float32)  # (4, windows*nb*npos)
    slab = nb * npos
    zmax = z[:, 0:slab]
    zmin = z[:, 0:slab]
    for j in range(1, windows):
        zj = z[:, j * slab:(j + 1) * slab]
        zmax = jnp.maximum(zmax, zj)
        zmin = jnp.minimum(zmin, zj)
    sc = sc_ref[...]
    zsel = jnp.where(sc >= 0, zmax, zmin)                          # exact pool(BN(ELU(.)))
    pooled = _elu(zsel + b3_ref[...]) * sc + sh_ref[...]           # (4, nb*npos), f32

    # fc1: build (nb, 4*npos) feature rows in torch flatten order (channel-major) and do a
    # single (nb,128)x(128,20) matmul instead of per-channel M=1 matmuls.
    rows = []
    for s in range(nb):
        rows.append(jnp.concatenate(
            [pooled[c:c + 1, s * npos:(s + 1) * npos] for c in range(nchan)], axis=1))
    feat = rows[0] if nb == 1 else jnp.concatenate(rows, axis=0)   # (nb, 128)
    acc = jnp.dot(feat, wfc_ref[...], preferred_element_type=jnp.float32) + bfc_ref[...]
    expz = jnp.exp(jnp.minimum(-acc, 60.0))                        # exact sigmoid
    o_ref[0] = 1.0 / (1.0 + expz)


def conv3_fc_stage(p3, w3f, b3, sc3, sh3, wfc_k, bfc, nb, npos):
    K3, L = p3.shape
    CO = w3f.shape[0]
    NOUT = wfc_k.shape[1]
    lanes_in = 8 * nb * npos
    num_tiles = L // lanes_in
    kern = functools.partial(_conv3_bn_pool_fc_kernel, nb=nb, npos=npos, windows=8, nchan=CO)
    out = pl.pallas_call(
        kern,
        out_shape=jax.ShapeDtypeStruct((num_tiles, nb, NOUT), jnp.float32),
        grid=(num_tiles,),
        in_specs=[
            pl.BlockSpec((K3, lanes_in), lambda i: (0, i)),
            pl.BlockSpec((CO, K3), lambda i: (0, 0)),
            pl.BlockSpec((CO, 1), lambda i: (0, 0)),
            pl.BlockSpec((CO, 1), lambda i: (0, 0)),
            pl.BlockSpec((CO, 1), lambda i: (0, 0)),
            pl.BlockSpec((CO * npos, NOUT), lambda i: (0, 0)),
            pl.BlockSpec((1, NOUT), lambda i: (0, 0)),
        ],
        out_specs=pl.BlockSpec((1, nb, NOUT), lambda i: (i, 0, 0)),
        compiler_params=_compiler_params(),
    )(p3, w3f, b3, sc3, sh3, wfc_k, bfc)
    return out.reshape(num_tiles * nb, NOUT)


# ------------------------------ wrapper-side layout plumbing ------------------------------
def _bn_fold(gamma, beta, mean, var):
    scale = gamma / jnp.sqrt(var + BN_EPS)
    shift = beta - mean * scale
    return scale.reshape(-1, 1).astype(jnp.float32), shift.reshape(-1, 1).astype(jnp.float32)


def _patches_conv2(xp1, p2h, p2w, npos, nb):
    """xp1: (Bpad, 17, W1p) padded conv2 input (bf16).
    Returns (128, Bpad*4*npos) bf16 whose per-batch-tile lane order is
    [pool-window position (jh,jw)][sample][pool window (ph-major)]."""
    bpad = xp1.shape[0]
    num_tiles = bpad // nb
    kk = jnp.arange(2 * 64)
    jj = jnp.arange(4)
    nn = jnp.minimum(jnp.arange(npos), p2h * p2w - 1)      # clamp lane padding (sliced away later)
    dh, dw = kk // 64, kk % 64
    jh, jw = jj // 2, jj % 2
    ph, pw = nn // p2w, nn % p2w
    rows = 4 * ph[None, None, :] + jh[None, :, None] + dh[:, None, None]     # (128, 4, npos)
    cols = 4 * pw[None, None, :] + jw[None, :, None] + dw[:, None, None]
    g = xp1[:, rows, cols]                                                   # (Bpad, 128, 4, npos)
    g = g.reshape(num_tiles, nb, 128, 4, npos)
    g = jnp.transpose(g, (2, 0, 3, 1, 4))                                    # (128, T, 4, nb, npos)
    return g.reshape(128, num_tiles * 4 * nb * npos)


def _patches_conv3(xp2, p3h, p3w, nb):
    """xp2: (Bpad, 4, 11, W2p) padded conv3 input (bf16).
    Returns (1024, Bpad*8*p3h*p3w) bf16, lane order [window (jh,jw)][sample][pool (qh-major)]."""
    bpad = xp2.shape[0]
    num_tiles = bpad // nb
    npos = p3h * p3w
    kk = jnp.arange(4 * 8 * 32)
    jj = jnp.arange(8)
    pp = jnp.arange(npos)
    ci, dh, dw = kk // 256, (kk // 32) % 8, kk % 32
    jh, jw = jj // 4, jj % 4
    qh, qw = pp // p3w, pp % p3w
    ci_b = ci[:, None, None]
    rows = 2 * qh[None, None, :] + jh[None, :, None] + dh[:, None, None]     # (1024, 8, npos)
    cols = 4 * qw[None, None, :] + jw[None, :, None] + dw[:, None, None]
    g = xp2[:, ci_b, rows, cols]                                             # (Bpad, 1024, 8, npos)
    g = g.reshape(num_tiles, nb, 1024, 8, npos)
    g = jnp.transpose(g, (2, 0, 3, 1, 4))
    return g.reshape(1024, num_tiles * 8 * nb * npos)


def s_backbone_forward(x, params):
    """x: (B, C, T) with C == kernel_length. Returns sigmoid logits (B, 20)."""
    B, C, T = x.shape
    nb = _pick_nb(B)
    bpad = ((B + nb - 1) // nb) * nb

    # derived spatial sizes (architecture requires 4*2*16 == 128 features into fc1)
    w2_w = (T + 16 + 17) - 64 + 1                          # conv2 output width
    p2h, p2w = (16 - 2) // 4 + 1, (w2_w - 2) // 4 + 1      # MaxPool2d(2, stride 4)
    c3_w = (p2w + 2 + 1) - 32 + 1                          # conv3 output width (H is 11-8+1=4)
    p3h, p3w = (4 - 2) // 2 + 1, (c3_w - 4) // 4 + 1       # MaxPool2d((2,4))
    assert 4 * p3h * p3w == 128, "input length T incompatible with fc1(4*2*16, 20)"

    tpad = ((T + 127) // 128) * 128                        # lane-dense conv1 time axis (400 -> 512)
    npos2 = ((p2h * p2w + 127) // 128) * 128               # lane-dense pool positions (372 -> 384)
    npos3 = p3h * p3w                                      # 32

    # ---- stage 1: conv1 + ELU + BN1 (one wide matmul per batch tile) ----
    x_t = jnp.transpose(x, (1, 0, 2)).astype(jnp.float32)                  # (C, B, T)
    x_t = jnp.pad(x_t, ((0, 0), (0, bpad - B), (0, tpad - T)))
    x_flat = x_t.reshape(C, bpad * tpad)
    w1r = params["w1"].reshape(16, C).astype(jnp.float32)
    sc1, sh1 = _bn_fold(params["g1"], params["be1"], params["m1"], params["v1"])
    h1 = conv1_stage(x_flat, w1r, params["b1"].reshape(16, 1), sc1, sh1, nb, tpad)  # (16, Bpad*tpad) bf16

    # ---- stage 2: pad1 + conv2 + ELU + BN2 + pool2 ----
    h1 = jnp.transpose(h1.reshape(16, bpad, tpad)[:, :, :T], (1, 0, 2))    # (Bpad, 16, T)
    xp1 = jnp.pad(h1, ((0, 0), (0, 1), (16, 17)))                          # (Bpad, 17, T+33) bf16
    p2 = _patches_conv2(xp1, p2h, p2w, npos2, nb)                          # bf16 patches
    sc2, sh2 = _bn_fold(params["g2"], params["be2"], params["m2"], params["v2"])
    w2f = params["w2"].reshape(4, 128).astype(jnp.bfloat16)
    pooled2 = conv2_stage(p2, w2f, params["b2"].reshape(4, 1), sc2, sh2, nb, npos2)
    # (4, Bpad*npos2) bf16, sample-major lanes

    # ---- stage 3: pad2 + conv3 + ELU + BN3 + pool3 + fc1 + sigmoid ----
    pooled2 = pooled2.reshape(4, bpad, npos2)[:, :, :p2h * p2w]
    pooled2 = jnp.transpose(pooled2, (1, 0, 2)).reshape(bpad, 4, p2h, p2w)
    xp2 = jnp.pad(pooled2, ((0, 0), (0, 0), (4, 3), (2, 1)))               # (Bpad, 4, 11, 96) bf16
    p3 = _patches_conv3(xp2, p3h, p3w, nb)                                 # bf16 patches
    sc3, sh3 = _bn_fold(params["g3"], params["be3"], params["m3"], params["v3"])
    w3f = params["w3"].reshape(4, 4 * 8 * 32).astype(jnp.bfloat16)
    wfc_k = params["wfc"].T.astype(jnp.float32)                            # (128, 20), kept f32
    out = conv3_fc_stage(p3, w3f, params["b3"].reshape(4, 1), sc3, sh3,
                         wfc_k, params["bfc"].reshape(1, 20), nb, npos3)   # (Bpad, 20)
    return out[:B]


# ------------------------------------ pure-JAX reference ------------------------------------
def _bn_ref(y, g, be, m, v):
    return (y - m[None, :, None, None]) / jnp.sqrt(v + BN_EPS)[None, :, None, None] \
        * g[None, :, None, None] + be[None, :, None, None]


def reference_forward(x, p):
    prec = jax.lax.Precision.HIGHEST
    dn = ("NCHW", "OIHW", "NCHW")
    y = jnp.transpose(x[:, None, :, :], (0, 1, 3, 2))                      # (B,1,T,C)
    y = jax.lax.conv_general_dilated(y, p["w1"], (1, 1), "VALID",
                                     dimension_numbers=dn, precision=prec)
    y = jax.nn.elu(y + p["b1"][None, :, None, None])
    y = _bn_ref(y, p["g1"], p["be1"], p["m1"], p["v1"])
    y = jnp.transpose(y, (0, 3, 1, 2))                                     # (B,1,16,T)
    y = jnp.pad(y, ((0, 0), (0, 0), (0, 1), (16, 17)))
    y = jax.lax.conv_general_dilated(y, p["w2"], (1, 1), "VALID",
                                     dimension_numbers=dn, precision=prec)
    y = jax.nn.elu(y + p["b2"][None, :, None, None])
    y = _bn_ref(y, p["g2"], p["be2"], p["m2"], p["v2"])
    y = jax.lax.reduce_window(y, -jnp.inf, jax.lax.max,
                              (1, 1, 2, 2), (1, 1, 4, 4), "VALID")
    y = jnp.pad(y, ((0, 0), (0, 0), (4, 3), (2, 1)))
    y = jax.lax.conv_general_dilated(y, p["w3"], (1, 1), "VALID",
                                     dimension_numbers=dn, precision=prec)
    y = jax.nn.elu(y + p["b3"][None, :, None, None])
    y = _bn_ref(y, p["g3"], p["be3"], p["m3"], p["v3"])
    y = jax.lax.reduce_window(y, -jnp.inf, jax.lax.max,
                              (1, 1, 2, 4), (1, 1, 2, 4), "VALID")
    y = y.reshape(y.shape[0], -1)                                          # (B,128)
    return jax.nn.sigmoid(jnp.dot(y, p["wfc"].T, precision=prec) + p["bfc"][None, :])


if __name__ == "__main__":
    B, KERNEL_LENGTH, T = 2, 8, 400        # T=400 is what the fc1(4*2*16, 20) geometry implies
    key = jax.random.PRNGKey(0)
    ks = jax.random.split(key, 21)

    def nrm(k, shape, s=0.1):
        return (s * jax.random.normal(k, shape)).astype(jnp.float32)

    params = {
        "w1": nrm(ks[0], (16, 1, 1, KERNEL_LENGTH)), "b1": nrm(ks[1], (16,)),
        "g1": 1.0 + nrm(ks[2], (16,)), "be1": nrm(ks[3], (16,)), "m1": nrm(ks[4], (16,)),
        "v1": jax.random.uniform(ks[5], (16,), minval=0.5, maxval=1.5).astype(jnp.float32),
        "w2": nrm(ks[6], (4, 1, 2, 64)), "b2": nrm(ks[7], (4,)),
        "g2": 1.0 + nrm(ks[8], (4,)), "be2": nrm(ks[9], (4,)), "m2": nrm(ks[10], (4,)),
        "v2": jax.random.uniform(ks[11], (4,), minval=0.5, maxval=1.5).astype(jnp.float32),
        "w3": nrm(ks[12], (4, 4, 8, 32)), "b3": nrm(ks[13], (4,)),
        "g3": 1.0 + nrm(ks[14], (4,)), "be3": nrm(ks[15], (4,)), "m3": nrm(ks[16], (4,)),
        "v3": jax.random.uniform(ks[17], (4,), minval=0.5, maxval=1.5).astype(jnp.float32),
        "wfc": nrm(ks[18], (20, 128)), "bfc": nrm(ks[19], (20,)),
    }
    x = jax.random.normal(ks[20], (B, KERNEL_LENGTH, T), dtype=jnp.float32)

    fwd = jax.jit(s_backbone_forward)
    out = jax.block_until_ready(fwd(x, params))
    assert out.shape == (B, 20)

    ref = jax.block_until_ready(reference_forward(x, params))
    max_diff = float(jnp.max(jnp.abs(out - ref)))
    # bf16 matmul operands in stages 2/3 (f32 accumulate) -> ~1e-3 level error vs f32 reference
    assert jnp.allclose(out, ref, atol=1.5e-2, rtol=1.5e-2), f"mismatch vs reference: {max_diff}"

    print("KERNEL_OK")
</pallas_src>

<mosaic_0001>
module attributes {stable_mosaic.version = 11 : i64} {
  func.func @_conv1_bn_kernel(%arg0: i32, %arg1: memref<8x512xf32, #tpu.memory_space<vmem>>, %arg2: memref<16x8xf32, #tpu.memory_space<vmem>>, %arg3: memref<16x1xf32, #tpu.memory_space<vmem>>, %arg4: memref<16x1xf32, #tpu.memory_space<vmem>>, %arg5: memref<16x1xf32, #tpu.memory_space<vmem>>, %arg6: memref<16x512xbf16, #tpu.memory_space<vmem>>) attributes {dimension_semantics = [#tpu.dimension_semantics<parallel>], iteration_bounds = array<i64: 2>, scalar_prefetch = 0 : i64, scratch_operands = 0 : i64, tpu.core_type = #tpu.core_type<tc>, window_params = [{transform_indices = @transform_0, window_bounds = array<i64: 8, 512>}, {pipeline_mode = #tpu.pipeline_mode<synchronous>, transform_indices = @transform_1, window_bounds = array<i64: 16, 8>}, {pipeline_mode = #tpu.pipeline_mode<synchronous>, transform_indices = @transform_2, window_bounds = array<i64: 16, 1>}, {pipeline_mode = #tpu.pipeline_mode<synchronous>, transform_indices = @transform_3, window_bounds = array<i64: 16, 1>}, {pipeline_mode = #tpu.pipeline_mode<synchronous>, transform_indices = @transform_4, window_bounds = array<i64: 16, 1>}, {transform_indices = @transform_5, window_bounds = array<i64: 16, 512>}]} {
    %c0 = arith.constant 0 : index
    %c0_0 = arith.constant 0 : index
    %0 = vector.load %arg2[%c0, %c0_0] : memref<16x8xf32, #tpu.memory_space<vmem>>, vector<16x8xf32>
    %c0_1 = arith.constant 0 : index
    %c0_2 = arith.constant 0 : index
    %1 = vector.load %arg1[%c0_1, %c0_2] : memref<8x512xf32, #tpu.memory_space<vmem>>, vector<8x512xf32>
    %cst = arith.constant dense<0.000000e+00> : vector<16x512xf32>
    %2 = tpu.matmul %0, %1, %cst {dimension_numbers = #tpu.dot_dimension_numbers<[1], [0], [0], [1], [0, 0, 1, 1], [], []>} : vector<16x8xf32>, vector<8x512xf32>, vector<16x512xf32> -> vector<16x512xf32>
    %c0_3 = arith.constant 0 : index
    %c0_4 = arith.constant 0 : index
    %3 = vector.load %arg3[%c0_3, %c0_4] : memref<16x1xf32, #tpu.memory_space<vmem>>, vector<16x1xf32>
    %4 = vector.broadcast %3 : vector<16x1xf32> to vector<16x512xf32>
    %5 = arith.addf %2, %4 : vector<16x512xf32>
    %cst_5 = arith.constant 0.000000e+00 : f32
    %6 = vector.broadcast %cst_5 : f32 to vector<16x512xf32>
    %7 = arith.cmpf ogt, %5, %6 : vector<16x512xf32>
    %cst_6 = arith.constant 0.000000e+00 : f32
    %8 = vector.broadcast %cst_6 : f32 to vector<16x512xf32>
    %9 = arith.minimumf %5, %8 : vector<16x512xf32>
    %10 = math.exp %9 : vector<16x512xf32>
    %cst_7 = arith.constant 1.000000e+00 : f32
    %11 = vector.broadcast %cst_7 : f32 to vector<16x512xf32>
    %12 = arith.subf %10, %11 : vector<16x512xf32>
    %13 = arith.select %7, %5, %12 : vector<16x512xi1>, vector<16x512xf32>
    %c0_8 = arith.constant 0 : index
    %c0_9 = arith.constant 0 : index
    %14 = vector.load %arg4[%c0_8, %c0_9] : memref<16x1xf32, #tpu.memory_space<vmem>>, vector<16x1xf32>
    %15 = vector.broadcast %14 : vector<16x1xf32> to vector<16x512xf32>
    %16 = arith.mulf %13, %15 : vector<16x512xf32>
    %c0_10 = arith.constant 0 : index
    %c0_11 = arith.constant 0 : index
    %17 = vector.load %arg5[%c0_10, %c0_11] : memref<16x1xf32, #tpu.memory_space<vmem>>, vector<16x1xf32>
    %18 = vector.broadcast %17 : vector<16x1xf32> to vector<16x512xf32>
    %19 = arith.addf %16, %18 : vector<16x512xf32>
    %20 = arith.truncf %19 : vector<16x512xf32> to vector<16x512xbf16>
    %c0_12 = arith.constant 0 : index
    %c0_13 = arith.constant 0 : index
    %21 = vector.load %arg6[%c0_12, %c0_13] : memref<16x512xbf16, #tpu.memory_space<vmem>>, vector<16x512xbf16>
    tpu.vector_store %arg6[%c0_12, %c0_13], %20 {strides = array<i32>} : memref<16x512xbf16, #tpu.memory_space<vmem>>, vector<16x512xbf16>,
    return
  }
  func.func @transform_0(%arg0: i32) -> (i32, i32) {
    %c0_i32 = arith.constant 0 : i32
    %c0_i32_0 = arith.constant 0 : i32
    return %c0_i32, %arg0 : i32, i32
  }
  func.func @transform_1(%arg0: i32) -> (i32, i32) {
    %c0_i32 = arith.constant 0 : i32
    %c0_i32_0 = arith.constant 0 : i32
    %c0_i32_1 = arith.constant 0 : i32
    return %c0_i32, %c0_i32_0 : i32, i32
  }
  func.func @transform_2(%arg0: i32) -> (i32, i32) {
    %c0_i32 = arith.constant 0 : i32
    %c0_i32_0 = arith.constant 0 : i32
    %c0_i32_1 = arith.constant 0 : i32
    return %c0_i32, %c0_i32_0 : i32, i32
  }
  func.func @transform_3(%arg0: i32) -> (i32, i32) {
    %c0_i32 = arith.constant 0 : i32
    %c0_i32_0 = arith.constant 0 : i32
    %c0_i32_1 = arith.constant 0 : i32
    return %c0_i32, %c0_i32_0 : i32, i32
  }
  func.func @transform_4(%arg0: i32) -> (i32, i32) {
    %c0_i32 = arith.constant 0 : i32
    %c0_i32_0 = arith.constant 0 : i32
    %c0_i32_1 = arith.constant 0 : i32
    return %c0_i32, %c0_i32_0 : i32, i32
  }
  func.func @transform_5(%arg0: i32) -> (i32, i32) {
    %c0_i32 = arith.constant 0 : i32
    %c0_i32_0 = arith.constant 0 : i32
    return %c0_i32, %arg0 : i32, i32
  }
}

module attributes {stable_mosaic.version = 11 : i64} {
  func.func @_conv2_bn_pool_kernel(%arg0: i32, %arg1: memref<128x1536xbf16, #tpu.memory_space<vmem>>, %arg2: memref<4x128xbf16, #tpu.memory_space<vmem>>, %arg3: memref<4x1xf32, #tpu.memory_space<vmem>>, %arg4: memref<4x1xf32, #tpu.memory_space<vmem>>, %arg5: memref<4x1xf32, #tpu.memory_space<vmem>>, %arg6: memref<4x384xbf16, #tpu.memory_space<vmem>>) attributes {dimension_semantics = [#tpu.dimension_semantics<parallel>], iteration_bounds = array<i64: 2>, scalar_prefetch = 0 : i64, scratch_operands = 0 : i64, tpu.core_type = #tpu.core_type<tc>, window_params = [{transform_indices = @transform_0, window_bounds = array<i64: 128, 1536>}, {pipeline_mode = #tpu.pipeline_mode<synchronous>, transform_indices = @transform_1, window_bounds = array<i64: 4, 128>}, {pipeline_mode = #tpu.pipeline_mode<synchronous>, transform_indices = @transform_2, window_bounds = array<i64: 4, 1>}, {pipeline_mode = #tpu.pipeline_mode<synchronous>, transform_indices = @transform_3, window_bounds = array<i64: 4, 1>}, {pipeline_mode = #tpu.pipeline_mode<synchronous>, transform_indices = @transform_4, window_bounds = array<i64: 4, 1>}, {transform_indices = @transform_5, window_bounds = array<i64: 4, 384>}]} {
    %c0 = arith.constant 0 : index
    %c0_0 = arith.constant 0 : index
    %0 = vector.load %arg2[%c0, %c0_0] : memref<4x128xbf16, #tpu.memory_space<vmem>>, vector<4x128xbf16>
    %c0_1 = arith.constant 0 : index
    %c0_2 = arith.constant 0 : index
    %1 = vector.load %arg1[%c0_1, %c0_2] : memref<128x1536xbf16, #tpu.memory_space<vmem>>, vector<128x1536xbf16>
    %cst = arith.constant dense<0.000000e+00> : vector<4x1536xf32>
    %2 = tpu.matmul %0, %1, %cst {dimension_numbers = #tpu.dot_dimension_numbers<[1], [0], [0], [1], [0, 0, 1, 1], [], []>} : vector<4x128xbf16>, vector<128x1536xbf16>, vector<4x1536xf32> -> vector<4x1536xf32>
    %3 = vector.extract_strided_slice %2 {offsets = [0, 0], sizes = [4, 384], strides = [1, 1]} : vector<4x1536xf32> to vector<4x384xf32>
    %4 = vector.extract_strided_slice %2 {offsets = [0, 0], sizes = [4, 384], strides = [1, 1]} : vector<4x1536xf32> to vector<4x384xf32>
    %5 = vector.extract_strided_slice %2 {offsets = [0, 384], sizes = [4, 384], strides = [1, 1]} : vector<4x1536xf32> to vector<4x384xf32>
    %6 = arith.maximumf %3, %5 : vector<4x384xf32>
    %7 = arith.minimumf %4, %5 : vector<4x384xf32>
    %8 = vector.extract_strided_slice %2 {offsets = [0, 768], sizes = [4, 384], strides = [1, 1]} : vector<4x1536xf32> to vector<4x384xf32>
    %9 = arith.maximumf %6, %8 : vector<4x384xf32>
    %10 = arith.minimumf %7, %8 : vector<4x384xf32>
    %11 = vector.extract_strided_slice %2 {offsets = [0, 1152], sizes = [4, 384], strides = [1, 1]} : vector<4x1536xf32> to vector<4x384xf32>
    %12 = arith.maximumf %9, %11 : vector<4x384xf32>
    %13 = arith.minimumf %10, %11 : vector<4x384xf32>
    %c0_3 = arith.constant 0 : index
    %c0_4 = arith.constant 0 : index
    %14 = vector.load %arg4[%c0_3, %c0_4] : memref<4x1xf32, #tpu.memory_space<vmem>>, vector<4x1xf32>
    %cst_5 = arith.constant 0.000000e+00 : f32
    %15 = vector.broadcast %cst_5 : f32 to vector<4x1xf32>
    %16 = arith.cmpf oge, %14, %15 : vector<4x1xf32>
    %17 = vector.shape_cast %16 : vector<4x1xi1> to vector<4x1xi1>
    %18 = vector.broadcast %17 : vector<4x1xi1> to vector<4x384xi1>
    %19 = arith.select %18, %12, %13 : vector<4x384xi1>, vector<4x384xf32>
    %c0_6 = arith.constant 0 : index
    %c0_7 = arith.constant 0 : index
    %20 = vector.load %arg3[%c0_6, %c0_7] : memref<4x1xf32, #tpu.memory_space<vmem>>, vector<4x1xf32>
    %21 = vector.broadcast %20 : vector<4x1xf32> to vector<4x384xf32>
    %22 = arith.addf %19, %21 : vector<4x384xf32>
    %cst_8 = arith.constant 0.000000e+00 : f32
    %23 = vector.broadcast %cst_8 : f32 to vector<4x384xf32>
    %24 = arith.cmpf ogt, %22, %23 : vector<4x384xf32>
    %cst_9 = arith.constant 0.000000e+00 : f32
    %25 = vector.broadcast %cst_9 : f32 to vector<4x384xf32>
    %26 = arith.minimumf %22, %25 : vector<4x384xf32>
    %27 = math.exp %26 : vector<4x384xf32>
    %cst_10 = arith.constant 1.000000e+00 : f32
    %28 = vector.broadcast %cst_10 : f32 to vector<4x384xf32>
    %29 = arith.subf %27, %28 : vector<4x384xf32>
    %30 = arith.select %24, %22, %29 : vector<4x384xi1>, vector<4x384xf32>
    %31 = vector.broadcast %14 : vector<4x1xf32> to vector<4x384xf32>
    %32 = arith.mulf %30, %31 : vector<4x384xf32>
    %c0_11 = arith.constant 0 : index
    %c0_12 = arith.constant 0 : index
    %33 = vector.load %arg5[%c0_11, %c0_12] : memref<4x1xf32, #tpu.memory_space<vmem>>, vector<4x1xf32>
    %34 = vector.broadcast %33 : vector<4x1xf32> to vector<4x384xf32>
    %35 = arith.addf %32, %34 : vector<4x384xf32>
    %36 = arith.truncf %35 : vector<4x384xf32> to vector<4x384xbf16>
    %c0_13 = arith.constant 0 : index
    %c0_14 = arith.constant 0 : index
    %37 = vector.load %arg6[%c0_13, %c0_14] : memref<4x384xbf16, #tpu.memory_space<vmem>>, vector<4x384xbf16>
    tpu.vector_store %arg6[%c0_13, %c0_14], %36 {strides = array<i32>} : memref<4x384xbf16, #tpu.memory_space<vmem>>, vector<4x384xbf16>,
    return
  }
  func.func @transform_0(%arg0: i32) -> (i32, i32) {
    %c0_i32 = arith.constant 0 : i32
    %c0_i32_0 = arith.constant 0 : i32
    return %c0_i32, %arg0 : i32, i32
  }
  func.func @transform_1(%arg0: i32) -> (i32, i32) {
    %c0_i32 = arith.constant 0 : i32
    %c0_i32_0 = arith.constant 0 : i32
    %c0_i32_1 = arith.constant 0 : i32
    return %c0_i32, %c0_i32_0 : i32, i32
  }
  func.func @transform_2(%arg0: i32) -> (i32, i32) {
    %c0_i32 = arith.constant 0 : i32
    %c0_i32_0 = arith.constant 0 : i32
    %c0_i32_1 = arith.constant 0 : i32
    return %c0_i32, %c0_i32_0 : i32, i32
  }
  func.func @transform_3(%arg0: i32) -> (i32, i32) {
    %c0_i32 = arith.constant 0 : i32
    %c0_i32_0 = arith.constant 0 : i32
    %c0_i32_1 = arith.constant 0 : i32
    return %c0_i32, %c0_i32_0 : i32, i32
  }
  func.func @transform_4(%arg0: i32) -> (i32, i32) {
    %c0_i32 = arith.constant 0 : i32
    %c0_i32_0 = arith.constant 0 : i32
    %c0_i32_1 = arith.constant 0 : i32
    return %c0_i32, %c0_i32_0 : i32, i32
  }
  func.func @transform_5(%arg0: i32) -> (i32, i32) {
    %c0_i32 = arith.constant 0 : i32
    %c0_i32_0 = arith.constant 0 : i32
    return %c0_i32, %arg0 : i32, i32
  }
}

module attributes {stable_mosaic.version = 11 : i64} {
  func.func @_conv3_bn_pool_fc_kernel(%arg0: i32, %arg1: memref<1024x256xbf16, #tpu.memory_space<vmem>>, %arg2: memref<4x1024xbf16, #tpu.memory_space<vmem>>, %arg3: memref<4x1xf32, #tpu.memory_space<vmem>>, %arg4: memref<4x1xf32, #tpu.memory_space<vmem>>, %arg5: memref<4x1xf32, #tpu.memory_space<vmem>>, %arg6: memref<128x20xf32, #tpu.memory_space<vmem>>, %arg7: memref<1x20xf32, #tpu.memory_space<vmem>>, %arg8: memref<1x1x20xf32, #tpu.memory_space<vmem>>) attributes {dimension_semantics = [#tpu.dimension_semantics<parallel>], iteration_bounds = array<i64: 2>, scalar_prefetch = 0 : i64, scratch_operands = 0 : i64, tpu.core_type = #tpu.core_type<tc>, window_params = [{transform_indices = @transform_0, window_bounds = array<i64: 1024, 256>}, {pipeline_mode = #tpu.pipeline_mode<synchronous>, transform_indices = @transform_1, window_bounds = array<i64: 4, 1024>}, {pipeline_mode = #tpu.pipeline_mode<synchronous>, transform_indices = @transform_2, window_bounds = array<i64: 4, 1>}, {pipeline_mode = #tpu.pipeline_mode<synchronous>, transform_indices = @transform_3, window_bounds = array<i64: 4, 1>}, {pipeline_mode = #tpu.pipeline_mode<synchronous>, transform_indices = @transform_4, window_bounds = array<i64: 4, 1>}, {pipeline_mode = #tpu.pipeline_mode<synchronous>, transform_indices = @transform_5, window_bounds = array<i64: 128, 20>}, {pipeline_mode = #tpu.pipeline_mode<synchronous>, transform_indices = @transform_6, window_bounds = array<i64: 1, 20>}, {transform_indices = @transform_7, window_bounds = array<i64: 1, 1, 20>}]} {
    %c0 = arith.constant 0 : index
    %c0_0 = arith.constant 0 : index
    %0 = vector.load %arg2[%c0, %c0_0] : memref<4x1024xbf16, #tpu.memory_space<vmem>>, vector<4x1024xbf16>
    %c0_1 = arith.constant 0 : index
    %c0_2 = arith.constant 0 : index
    %1 = vector.load %arg1[%c0_1, %c0_2] : memref<1024x256xbf16, #tpu.memory_space<vmem>>, vector<1024x256xbf16>
    %cst = arith.constant dense<0.000000e+00> : vector<4x256xf32>
    %2 = tpu.matmul %0, %1, %cst {dimension_numbers = #tpu.dot_dimension_numbers<[1], [0], [0], [1], [0, 0, 1, 1], [], []>} : vector<4x1024xbf16>, vector<1024x256xbf16>, vector<4x256xf32> -> vector<4x256xf32>
    %3 = vector.extract_strided_slice %2 {offsets = [0, 0], sizes = [4, 32], strides = [1, 1]} : vector<4x256xf32> to vector<4x32xf32>
    %4 = vector.extract_strided_slice %2 {offsets = [0, 0], sizes = [4, 32], strides = [1, 1]} : vector<4x256xf32> to vector<4x32xf32>
    %5 = vector.extract_strided_slice %2 {offsets = [0, 32], sizes = [4, 32], strides = [1, 1]} : vector<4x256xf32> to vector<4x32xf32>
    %6 = arith.maximumf %3, %5 : vector<4x32xf32>
    %7 = arith.minimumf %4, %5 : vector<4x32xf32>
    %8 = vector.extract_strided_slice %2 {offsets = [0, 64], sizes = [4, 32], strides = [1, 1]} : vector<4x256xf32> to vector<4x32xf32>
    %9 = arith.maximumf %6, %8 : vector<4x32xf32>
    %10 = arith.minimumf %7, %8 : vector<4x32xf32>
    %11 = vector.extract_strided_slice %2 {offsets = [0, 96], sizes = [4, 32], strides = [1, 1]} : vector<4x256xf32> to vector<4x32xf32>
    %12 = arith.maximumf %9, %11 : vector<4x32xf32>
    %13 = arith.minimumf %10, %11 : vector<4x32xf32>
    %14 = vector.extract_strided_slice %2 {offsets = [0, 128], sizes = [4, 32], strides = [1, 1]} : vector<4x256xf32> to vector<4x32xf32>
    %15 = arith.maximumf %12, %14 : vector<4x32xf32>
    %16 = arith.minimumf %13, %14 : vector<4x32xf32>
    %17 = vector.extract_strided_slice %2 {offsets = [0, 160], sizes = [4, 32], strides = [1, 1]} : vector<4x256xf32> to vector<4x32xf32>
    %18 = arith.maximumf %15, %17 : vector<4x32xf32>
    %19 = arith.minimumf %16, %17 : vector<4x32xf32>
    %20 = vector.extract_strided_slice %2 {offsets = [0, 192], sizes = [4, 32], strides = [1, 1]} : vector<4x256xf32> to vector<4x32xf32>
    %21 = arith.maximumf %18, %20 : vector<4x32xf32>
    %22 = arith.minimumf %19, %20 : vector<4x32xf32>
    %23 = vector.extract_strided_slice %2 {offsets = [0, 224], sizes = [4, 32], strides = [1, 1]} : vector<4x256xf32> to vector<4x32xf32>
    %24 = arith.maximumf %21, %23 : vector<4x32xf32>
    %25 = arith.minimumf %22, %23 : vector<4x32xf32>
    %c0_3 = arith.constant 0 : index
    %c0_4 = arith.constant 0 : index
    %26 = vector.load %arg4[%c0_3, %c0_4] : memref<4x1xf32, #tpu.memory_space<vmem>>, vector<4x1xf32>
    %cst_5 = arith.constant 0.000000e+00 : f32
    %27 = vector.broadcast %cst_5 : f32 to vector<4x1xf32>
    %28 = arith.cmpf oge, %26, %27 : vector<4x1xf32>
    %29 = vector.shape_cast %28 : vector<4x1xi1> to vector<4x1xi1>
    %30 = vector.broadcast %29 : vector<4x1xi1> to vector<4x32xi1>
    %31 = arith.select %30, %24, %25 : vector<4x32xi1>, vector<4x32xf32>
    %c0_6 = arith.constant 0 : index
    %c0_7 = arith.constant 0 : index
    %32 = vector.load %arg3[%c0_6, %c0_7] : memref<4x1xf32, #tpu.memory_space<vmem>>, vector<4x1xf32>
    %33 = vector.broadcast %32 : vector<4x1xf32> to vector<4x32xf32>
    %34 = arith.addf %31, %33 : vector<4x32xf32>
    %cst_8 = arith.constant 0.000000e+00 : f32
    %35 = vector.broadcast %cst_8 : f32 to vector<4x32xf32>
    %36 = arith.cmpf ogt, %34, %35 : vector<4x32xf32>
    %cst_9 = arith.constant 0.000000e+00 : f32
    %37 = vector.broadcast %cst_9 : f32 to vector<4x32xf32>
    %38 = arith.minimumf %34, %37 : vector<4x32xf32>
    %39 = math.exp %38 : vector<4x32xf32>
    %cst_10 = arith.constant 1.000000e+00 : f32
    %40 = vector.broadcast %cst_10 : f32 to vector<4x32xf32>
    %41 = arith.subf %39, %40 : vector<4x32xf32>
    %42 = arith.select %36, %34, %41 : vector<4x32xi1>, vector<4x32xf32>
    %43 = vector.broadcast %26 : vector<4x1xf32> to vector<4x32xf32>
    %44 = arith.mulf %42, %43 : vector<4x32xf32>
    %c0_11 = arith.constant 0 : index
    %c0_12 = arith.constant 0 : index
    %45 = vector.load %arg5[%c0_11, %c0_12] : memref<4x1xf32, #tpu.memory_space<vmem>>, vector<4x1xf32>
    %46 = vector.broadcast %45 : vector<4x1xf32> to vector<4x32xf32>
    %47 = arith.addf %44, %46 : vector<4x32xf32>
    %48 = vector.extract_strided_slice %47 {offsets = [0, 0], sizes = [1, 32], strides = [1, 1]} : vector<4x32xf32> to vector<1x32xf32>
    %49 = vector.extract_strided_slice %47 {offsets = [1, 0], sizes = [1, 32], strides = [1, 1]} : vector<4x32xf32> to vector<1x32xf32>
    %50 = vector.extract_strided_slice %47 {offsets = [2, 0], sizes = [1, 32], strides = [1, 1]} : vector<4x32xf32> to vector<1x32xf32>
    %51 = vector.extract_strided_slice %47 {offsets = [3, 0], sizes = [1, 32], strides = [1, 1]} : vector<4x32xf32> to vector<1x32xf32>
    %52 = tpu.concatenate %48, %49, %50, %51 in 1 : vector<1x32xf32>, vector<1x32xf32>, vector<1x32xf32>, vector<1x32xf32> -> vector<1x128xf32>
    %c0_13 = arith.constant 0 : index
    %c0_14 = arith.constant 0 : index
    %53 = vector.load %arg6[%c0_13, %c0_14] : memref<128x20xf32, #tpu.memory_space<vmem>>, vector<128x20xf32>
    %cst_15 = arith.constant dense<0.000000e+00> : vector<1x20xf32>
    %54 = tpu.matmul %52, %53, %cst_15 {dimension_numbers = #tpu.dot_dimension_numbers<[1], [0], [0], [1], [0, 0, 1, 1], [], []>} : vector<1x128xf32>, vector<128x20xf32>, vector<1x20xf32> -> vector<1x20xf32>
    %c0_16 = arith.constant 0 : index
    %c0_17 = arith.constant 0 : index
    %55 = vector.load %arg7[%c0_16, %c0_17] : memref<1x20xf32, #tpu.memory_space<vmem>>, vector<1x20xf32>
    %56 = arith.addf %54, %55 : vector<1x20xf32>
    %cst_18 = arith.constant 0.000000e+00 : f32
    %57 = vector.broadcast %cst_18 : f32 to vector<1x20xf32>
    %58 = arith.subf %57, %56 : vector<1x20xf32>
    %cst_19 = arith.constant 6.000000e+01 : f32
    %59 = vector.broadcast %cst_19 : f32 to vector<1x20xf32>
    %60 = arith.minimumf %58, %59 : vector<1x20xf32>
    %61 = math.exp %60 : vector<1x20xf32>
    %cst_20 = arith.constant 1.000000e+00 : f32
    %62 = vector.broadcast %cst_20 : f32 to vector<1x20xf32>
    %63 = arith.addf %62, %61 : vector<1x20xf32>
    %cst_21 = arith.constant 1.000000e+00 : f32
    %64 = vector.broadcast %cst_21 : f32 to vector<1x20xf32>
    %65 = arith.divf %64, %63 : vector<1x20xf32>
    %c0_22 = arith.constant 0 : index
    %c0_23 = arith.constant 0 : index
    %c0_24 = arith.constant 0 : index
    %66 = vector.load %arg8[%c0_22, %c0_23, %c0_24] : memref<1x1x20xf32, #tpu.memory_space<vmem>>, vector<1x1x20xf32>
    %67 = vector.shape_cast %66 : vector<1x1x20xf32> to vector<1x20xf32>
    %68 = vector.shape_cast %65 : vector<1x20xf32> to vector<1x1x20xf32>
    tpu.vector_store %arg8[%c0_22, %c0_23, %c0_24], %68 {strides = array<i32>} : memref<1x1x20xf32, #tpu.memory_space<vmem>>, vector<1x1x20xf32>,
    return
  }
  func.func @transform_0(%arg0: i32) -> (i32, i32) {
    %c0_i32 = arith.constant 0 : i32
    %c0_i32_0 = arith.constant 0 : i32
    return %c0_i32, %arg0 : i32, i32
  }
  func.func @transform_1(%arg0: i32) -> (i32, i32) {
    %c0_i32 = arith.constant 0 : i32
    %c0_i32_0 = arith.constant 0 : i32
    %c0_i32_1 = arith.constant 0 : i32
    return %c0_i32, %c0_i32_0 : i32, i32
  }
  func.func @transform_2(%arg0: i32) -> (i32, i32) {
    %c0_i32 = arith.constant 0 : i32
    %c0_i32_0 = arith.constant 0 : i32
    %c0_i32_1 = arith.constant 0 : i32
    return %c0_i32, %c0_i32_0 : i32, i32
  }
  func.func @transform_3(%arg0: i32) -> (i32, i32) {
    %c0_i32 = arith.constant 0 : i32
    %c0_i32_0 = arith.constant 0 : i32
    %c0_i32_1 = arith.constant 0 : i32
    return %c0_i32, %c0_i32_0 : i32, i32
  }
  func.func @transform_4(%arg0: i32) -> (i32, i32) {
    %c0_i32 = arith.constant 0 : i32
    %c0_i32_0 = arith.constant 0 : i32
    %c0_i32_1 = arith.constant 0 : i32
    return %c0_i32, %c0_i32_0 : i32, i32
  }
  func.func @transform_5(%arg0: i32) -> (i32, i32) {
    %c0_i32 = arith.constant 0 : i32
    %c0_i32_0 = arith.constant 0 : i32
    %c0_i32_1 = arith.constant 0 : i32
    return %c0_i32, %c0_i32_0 : i32, i32
  }
  func.func @transform_6(%arg0: i32) -> (i32, i32) {
    %c0_i32 = arith.constant 0 : i32
    %c0_i32_0 = arith.constant 0 : i32
    %c0_i32_1 = arith.constant 0 : i32
    return %c0_i32, %c0_i32_0 : i32, i32
  }
  func.func @transform_7(%arg0: i32) -> (i32, i32, i32) {
    %c0_i32 = arith.constant 0 : i32
    %c0_i32_0 = arith.constant 0 : i32
    %c0_i32_1 = arith.constant 0 : i32
    return %arg0, %c0_i32, %c0_i32_0 : i32, i32, i32
  }
}

</mosaic_0001>

<llo_original>
// kernel: s_backbone_forward.3
$region0: #{s_backbone_forward.3}
  #allocation0 [shape = 'u32[]', space=smem, size = 0x4, offset = 0x4, fixed_abs, tag = 'smem constant byte address 0x4 - core index']
  #allocation1 [shape = 'u32[144,128]{1,0:T(1,128)}', space=vmem, size = 0x12000, scoped, tag = 'internal scratch']
  %s0 = inlined_call_operand.vmem [shape: f32[8,1024], index: 0, kind: input, shape index: {}]
  %s1 = inlined_call_operand.vmem [shape: f32[16,8], index: 1, kind: input, shape index: {}]
  %s2 = inlined_call_operand.vmem [shape: f32[16,1], index: 2, kind: input, shape index: {}]
  %s3 = inlined_call_operand.vmem [shape: f32[16,1], index: 3, kind: input, shape index: {}]
  %s4 = inlined_call_operand.vmem [shape: f32[16,1], index: 4, kind: input, shape index: {}]
  %s5 = inlined_call_operand.vmem [shape: bf16[16,1024], index: 5, kind: output, shape index: {}]
  %s6 = sld [smem:[#allocation0]]
  $region72: #{s_backbone_forward.3} parent=0
    _
  %s8 = ssub.s32 1, %s6
  %s9 = scalar_select 0, %s8, %s6
  $region1: #{s_backbone_forward.3} parent=0
    #allocation2 [shape = 'u8[32768]{0}', space=vmem, size = 0x8000, scoped, tag = 'output window, operand 0']
    loop: start=0, step=1, limit=4
    $region2: #{s_backbone_forward.3} parent=1 // loop_pre_header
      _
    $region3: #{s_backbone_forward.3} parent=1 // loop_header
      %s11 = sphi 0, %s15
      %p12 = scmp.ge.s32.totalorder %s11, 4
      %s21 = sphi 0, %s23
      %s24 = sphi 0, %s21
      %s25 = sphi 0, %s24
      %s41 = sphi 0, %s25
      %s45 = sphi 0, %s45
      %s47 = sphi 0, %s45
      %s48 = sphi 0, %s47
      %s62 = sphi 0, %s48
      %s66 = sphi 0, %s66
      %s68 = sphi 0, %s66
      %s69 = sphi 0, %s68
      %s83 = sphi 0, %s69
      %s87 = sphi 0, %s87
      %s89 = sphi 0, %s87
      %s90 = sphi 0, %s89
      %s104 = sphi 0, %s90
      %s108 = sphi 0, %s108
      %s110 = sphi 0, %s108
      %s111 = sphi 0, %s110
      %s125 = sphi 0, %s111
      %s131 = sphi 0, %s133
      %s134 = sphi 0, %s131
      %s135 = sphi 0, %s134
      %s151 = sphi 0, %s135
    $region4: #{s_backbone_forward.3} parent=1 // loop_header_branch
      %14 = sbr.rel (%p12) target = $region8
    $region5: #{s_backbone_forward.3} parent=1 // loop_body
      %s16 = ssub.s32 %s11, 1
      %s17 = ssub.s32 %s11, 2
      %s18 = sadd.s32 %s11, 1
      %s19 = ssub.s32 %s11, %s18
      %p20 = scmp.eq.s32.totalorder %s19, 0
      %s22 = sadd.s32 %s21, 1
      %s23 = scalar_select %p20, %s21, %s22
      %p26 = pneg %p20
      %p27 = scmp.eq.s32.totalorder %s11, 1
      %p28 = por %p26, %p27
      %p29 = scmp.ne.s32.totalorder %s21, %s24
      %p30 = scmp.eq.s32.totalorder %s11, 0
      %p31 = por %p29, %p30
      %p32 = scmp.ne.s32.totalorder %s21, %s24
      %p33 = scmp.eq.s32.totalorder %s16, 1
      %p34 = por %p32, %p33
      %p35 = scmp.ne.s32.totalorder %s24, %s25
      %p36 = scmp.eq.s32.totalorder %s16, 0
      %p37 = por %p35, %p36
      %p38 = scmp.ne.s32.totalorder %s24, %s25
      %p39 = scmp.eq.s32.totalorder %s17, 1
      %p40 = por %p38, %p39
      %p42 = scmp.ne.s32.totalorder %s25, %s41
      %p43 = scmp.eq.s32.totalorder %s17, 0
      %p44 = por %p42, %p43
      %s46 = sadd.s32 %s45, 1
      %p49 = scmp.eq.s32.totalorder %s11, 1
      %p50 = scmp.ne.s32.totalorder %s45, %s47
      %p51 = scmp.eq.s32.totalorder %s11, 0
      %p52 = por %p50, %p51
      %p53 = scmp.ne.s32.totalorder %s45, %s47
      %p54 = scmp.eq.s32.totalorder %s16, 1
      %p55 = por %p53, %p54
      %p56 = scmp.ne.s32.totalorder %s47, %s48
      %p57 = scmp.eq.s32.totalorder %s16, 0
      %p58 = por %p56, %p57
      %p59 = scmp.ne.s32.totalorder %s47, %s48
      %p60 = scmp.eq.s32.totalorder %s17, 1
      %p61 = por %p59, %p60
      %p63 = scmp.ne.s32.totalorder %s48, %s62
      %p64 = scmp.eq.s32.totalorder %s17, 0
      %p65 = por %p63, %p64
      %s67 = sadd.s32 %s66, 1
      %p70 = scmp.eq.s32.totalorder %s11, 1
      %p71 = scmp.ne.s32.totalorder %s66, %s68
      %p72 = scmp.eq.s32.totalorder %s11, 0
      %p73 = por %p71, %p72
      %p74 = scmp.ne.s32.totalorder %s66, %s68
      %p75 = scmp.eq.s32.totalorder %s16, 1
      %p76 = por %p74, %p75
      %p77 = scmp.ne.s32.totalorder %s68, %s69
      %p78 = scmp.eq.s32.totalorder %s16, 0
      %p79 = por %p77, %p78
      %p80 = scmp.ne.s32.totalorder %s68, %s69
      %p81 = scmp.eq.s32.totalorder %s17, 1
      %p82 = por %p80, %p81
      %p84 = scmp.ne.s32.totalorder %s69, %s83
      %p85 = scmp.eq.s32.totalorder %s17, 0
      %p86 = por %p84, %p85
      %s88 = sadd.s32 %s87, 1
      %p91 = scmp.eq.s32.totalorder %s11, 1
      %p92 = scmp.ne.s32.totalorder %s87, %s89
      %p93 = scmp.eq.s32.totalorder %s11, 0
      %p94 = por %p92, %p93
      %p95 = scmp.ne.s32.totalorder %s87, %s89
      %p96 = scmp.eq.s32.totalorder %s16, 1
      %p97 = por %p95, %p96
      %p98 = scmp.ne.s32.totalorder %s89, %s90
      %p99 = scmp.eq.s32.totalorder %s16, 0
      %p100 = por %p98, %p99
      %p101 = scmp.ne.s32.totalorder %s89, %s90
      %p102 = scmp.eq.s32.totalorder %s17, 1
      %p103 = por %p101, %p102
      %p105 = scmp.ne.s32.totalorder %s90, %s104
      %p106 = scmp.eq.s32.totalorder %s17, 0
      %p107 = por %p105, %p106
      %s109 = sadd.s32 %s108, 1
      %p112 = scmp.eq.s32.totalorder %s11, 1
      %p113 = scmp.ne.s32.totalorder %s108, %s110
      %p114 = scmp.eq.s32.totalorder %s11, 0
      %p115 = por %p113, %p114
      %p116 = scmp.ne.s32.totalorder %s108, %s110
      %p117 = scmp.eq.s32.totalorder %s16, 1
      %p118 = por %p116, %p117
      %p119 = scmp.ne.s32.totalorder %s110, %s111
      %p120 = scmp.eq.s32.totalorder %s16, 0
      %p121 = por %p119, %p120
      %p122 = scmp.ne.s32.totalorder %s110, %s111
      %p123 = scmp.eq.s32.totalorder %s17, 1
      %p124 = por %p122, %p123
      %p126 = scmp.ne.s32.totalorder %s111, %s125
      %p127 = scmp.eq.s32.totalorder %s17, 0
      %p128 = por %p126, %p127
      %s129 = ssub.s32 %s11, %s18
      %p130 = scmp.eq.s32.totalorder %s129, 0
      %s132 = sadd.s32 %s131, 1
      %s133 = scalar_select %p130, %s131, %s132
      %p136 = pneg %p130
      %p137 = scmp.eq.s32.totalorder %s11, 1
      %p138 = por %p136, %p137
      %p139 = scmp.ne.s32.totalorder %s131, %s134
      %p140 = scmp.eq.s32.totalorder %s11, 0
      %p141 = por %p139, %p140
      %p142 = scmp.ne.s32.totalorder %s131, %s134
      %p143 = scmp.eq.s32.totalorder %s16, 1
      %p144 = por %p142, %p143
      %p145 = scmp.ne.s32.totalorder %s134, %s135
      %p146 = scmp.eq.s32.totalorder %s16, 0
      %p147 = por %p145, %p146
      %p148 = scmp.ne.s32.totalorder %s134, %s135
      %p149 = scmp.eq.s32.totalorder %s17, 1
      %p150 = por %p148, %p149
      %p152 = scmp.ne.s32.totalorder %s135, %s151
      %p153 = scmp.eq.s32.totalorder %s17, 0
      %p154 = por %p152, %p153
      %p155 = scmp.le.s32.totalorder 1, %s11
      %p156 = scmp.lt.s32.totalorder %s11, 3
      %p157 = pnand %p155, %p156
      %p158 = pneg %p157
      // Predicated region
      $region9: #{s_backbone_forward.3} parent=5 // pred_check
        _
      $region10: #{s_backbone_forward.3} parent=5 // pred_check_branch
        %160 = sbr.rel (%p157) target = $region12
      $region11: #{s_backbone_forward.3} parent=5 // pred_region
        %s161 = ssub.s32 %s11, 1
        // Predicated region
        $region13: #{s_backbone_forward.3} parent=11 // pred_check
          %p162 = pneg %p58
        $region14: #{s_backbone_forward.3} parent=11 // pred_check_branch
          %164 = sbr.rel (%p162) target = $region16
        $region15: #{s_backbone_forward.3} parent=11 // pred_region
          _
        $region16: #{s_backbone_forward.3} parent=11 // pred_fallthru
          _
        // Predicated region
        $region17: #{s_backbone_forward.3} parent=11 // pred_check
          %p165 = pneg %p79
        $region18: #{s_backbone_forward.3} parent=11 // pred_check_branch
          %167 = sbr.rel (%p165) target = $region20
        $region19: #{s_backbone_forward.3} parent=11 // pred_region
          _
        $region20: #{s_backbone_forward.3} parent=11 // pred_fallthru
          _
        // Predicated region
        $region21: #{s_backbone_forward.3} parent=11 // pred_check
          %p168 = pneg %p100
        $region22: #{s_backbone_forward.3} parent=11 // pred_check_branch
          %170 = sbr.rel (%p168) target = $region24
        $region23: #{s_backbone_forward.3} parent=11 // pred_region
          _
        $region24: #{s_backbone_forward.3} parent=11 // pred_fallthru
          _
        // Predicated region
        $region25: #{s_backbone_forward.3} parent=11 // pred_check
          %p171 = pneg %p121
        $region26: #{s_backbone_forward.3} parent=11 // pred_check_branch
          %173 = sbr.rel (%p171) target = $region28
        $region27: #{s_backbone_forward.3} parent=11 // pred_region
          _
        $region28: #{s_backbone_forward.3} parent=11 // pred_fallthru
          _
      $region12: #{s_backbone_forward.3} parent=5 // pred_fallthru
        _
      %p174 = scmp.lt.s32.totalorder %s11, 2
      // Predicated region
      $region29: #{s_backbone_forward.3} parent=5 // pred_check
        %p175 = pneg %p174
      $region30: #{s_backbone_forward.3} parent=5 // pred_check_branch
        %177 = sbr.rel (%p175) target = $region32
      $region31: #{s_backbone_forward.3} parent=5 // pred_region
        // Predicated region
        $region33: #{s_backbone_forward.3} parent=31 // pred_check
          %p178 = pneg %p31
        $region34: #{s_backbone_forward.3} parent=31 // pred_check_branch
          %180 = sbr.rel (%p178) target = $region36
        $region35: #{s_backbone_forward.3} parent=31 // pred_region
          %s181 = smul.u32 4, %s11
          %p182 = scmp.lt.s32.totalorder %s181, 7
          %s183 = scalar_select %p182, %s181, 7
          %s184 = smul.addr %s183, 8
          %s185 = scalar_lea.vmem %s0, %s184
          %s186 = smul.u32 4, %s11
        $region36: #{s_backbone_forward.3} parent=31 // pred_fallthru
          _
      $region32: #{s_backbone_forward.3} parent=5 // pred_fallthru
        _
      %p187 = scmp.le.s32.totalorder 1, %s11
      %p188 = scmp.lt.s32.totalorder %s11, 3
      %p189 = pnand %p187, %p188
      %p190 = pneg %p189
      // Predicated region
      $region37: #{s_backbone_forward.3} parent=5 // pred_check
        _
      $region38: #{s_backbone_forward.3} parent=5 // pred_check_branch
        %192 = sbr.rel (%p189) target = $region40
      $region39: #{s_backbone_forward.3} parent=5 // pred_region
        %s193 = ssub.s32 %s11, 1
        %s194 = smul.u32 4, %s16
        %p195 = scmp.lt.s32.totalorder %s194, 7
        %s196 = scalar_select %p195, %s194, 7
        %s197 = smul.addr %s196, 8
        %s198 = scalar_lea.vmem %s0, %s197
        %p199 = pneg %p37
        %p200 = pneg %p34
        %p201 = pneg %p58
        %p202 = pneg %p55
        %p203 = pneg %p79
        %p204 = pneg %p76
        %p205 = pneg %p100
        %p206 = pneg %p97
        %p207 = pneg %p121
        %p208 = pneg %p118
        %p209 = pneg %p147
        %p210 = pneg %p144
        %s211 = sand.u32 %s134, 1
        %s212 = sand.u32 %s134, 1
        %s213 = smul.addr %s212, 32
        %s214 = scalar_lea.vmem [#allocation2], %s213
        %s215 = smul.u32 4, %s16
        %p216 = scmp.lt.s32.totalorder %s215, 7
        %s217 = scalar_select %p216, %s215, 7
        %s218 = smul.addr %s217, 8
        %s219 = scalar_lea.vmem %s0, %s218
        %s220 = smul.u32 4, %s16
        %s221 = smul.u32 4, %s16
        %v222 = vld [vmem:[%s1] sm:$0xff]
        %v223 = vld [vmem:[%s1 + $0x8] sm:$0xff]
        %v224 = vld [vmem:[%s219] sm:$0xff]
        %v225 = vld [vmem:[%s219 + $0x8] sm:$0xff]
        %v226 = vld [vmem:[%s219 + $0x10] sm:$0xff]
        %v227 = vld [vmem:[%s219 + $0x18] sm:$0xff]
        %v228 = vld [vmem:[%s2] sm:$0xff]
        %v229 = vld [vmem:[%s2 + $0x8] sm:$0xff]
        %231 = vset.pattern.permute.xlu0 0
        %232 = vperm.xlu0 %231, %v228
        %v233 = vpop.permute.xlu0 %232
        %236 = vset.pattern.permute.xlu0 0
        %237 = vperm.xlu0 %236, %v229
        %v238 = vpop.permute.xlu0 %237
        %vm240 = vcmask 64512
        %v242 = vsel %vm240, %v222, 0
        %v245 = vsel %vm240, %v223, 0
        %247 = vmatprep.subr.mxu0 0.0
        %248 = vmatpush1.msra.mxu0 0.0
        %249 = vmatprep.subr.mxu0 0.0
        %250 = vmatpush1.msra.mxu0 0.0
        %251 = vmatprep.subr.mxu0 0.0
        %252 = vmatpush1.msra.mxu0 0.0
        %253 = vmatprep.subr.mxu0 0.0
        %254 = vmatpush1.msra.mxu0 0.0
        %255 = vmatprep.subr.mxu0 0.0
        %256 = vmatpush1.msra.mxu0 0.0
        %257 = vmatprep.subr.mxu0 0.0
        %258 = vmatpush1.msra.mxu0 0.0
        %259 = vmatprep.subr.mxu0 0.0
        %260 = vmatpush1.msra.mxu0 0.0
        %261 = vmatprep.subr.mxu0 0.0
        %262 = vmatpush1.msra.mxu0 0.0
        %263 = vmatprep.subr.mxu0 0.0
        %264 = vmatpush1.msra.mxu0 0.0
        %265 = vmatprep.subr.mxu0 0.0
        %266 = vmatpush1.msra.mxu0 0.0
        %267 = vmatprep.subr.mxu0 0.0
        %268 = vmatpush1.msra.mxu0 0.0
        %269 = vmatprep.subr.mxu0 0.0
        %270 = vmatpush1.msra.mxu0 0.0
        %271 = vmatprep.subr.mxu0 0.0
        %272 = vmatpush1.msra.mxu0 0.0
        %273 = vmatprep.subr.mxu0 0.0
        %274 = vmatpush1.msra.mxu0 0.0
        %275 = vmatprep.subr.mxu0 0.0
        %276 = vmatpush1.msra.mxu0 0.0
        %277 = vmatprep.subr.mxu0 %v225
        %278 = vmatpush1.msra.mxu0 %v224
        %279 = vmatprep.subr.mxu0 0.0
        %280 = vmatpush2.msra.mxu0 0.0
        %281 = vmatprep.subr.mxu0 0.0
        %282 = vmatpush2.msra.mxu0 0.0
        %283 = vmatprep.subr.mxu0 0.0
        %284 = vmatpush2.msra.mxu0 0.0
        %285 = vmatprep.subr.mxu0 0.0
        %286 = vmatpush2.msra.mxu0 0.0
        %287 = vmatprep.subr.mxu0 0.0
        %288 = vmatpush2.msra.mxu0 0.0
        %289 = vmatprep.subr.mxu0 0.0
        %290 = vmatpush2.msra.mxu0 0.0
        %291 = vmatprep.subr.mxu0 0.0
        %292 = vmatpush2.msra.mxu0 0.0
        %293 = vmatprep.subr.mxu0 0.0
        %294 = vmatpush2.msra.mxu0 0.0
        %295 = vmatprep.subr.mxu0 0.0
        %296 = vmatpush2.msra.mxu0 0.0
        %297 = vmatprep.subr.mxu0 0.0
        %298 = vmatpush2.msra.mxu0 0.0
        %299 = vmatprep.subr.mxu0 0.0
        %300 = vmatpush2.msra.mxu0 0.0
        %301 = vmatprep.subr.mxu0 0.0
        %302 = vmatpush2.msra.mxu0 0.0
        %303 = vmatprep.subr.mxu0 0.0
        %304 = vmatpush2.msra.mxu0 0.0
        %305 = vmatprep.subr.mxu0 0.0
        %306 = vmatpush2.msra.mxu0 0.0
        %307 = vmatprep.subr.mxu0 0.0
        %308 = vmatpush2.msra.mxu0 0.0
        %309 = vmatprep.subr.mxu0 0.0
        %310 = vmatpush2.msra.mxu0 0.0
        %311 = vmatprep.mubr.f32.mxu0 0.0
        %312 = vmatmul.mubr.f32.gmra.mxu0 %v242
        %v313 = vpop.f32.mrf.mxu0
        %v314 = vadd.f32 %v233, %v313
        %v315 = vpop.f32.mrf.mxu0
        %v316 = vadd.f32 %v233, %v315
        %317 = vmatprep.mubr.f32.mxu0 0.0
        %318 = vmatmul.mubr.f32.gmra.mxu0 %v245
        %v319 = vpop.f32.mrf.mxu0
        %v320 = vadd.f32 %v238, %v319
        %v321 = vpop.f32.mrf.mxu0
        %v322 = vadd.f32 %v238, %v321
        %323 = vdwg.mxu0
        %324 = vmatprep.subr.mxu0 0.0
        %325 = vmatpush1.msra.mxu0 0.0
        %326 = vmatprep.subr.mxu0 0.0
        %327 = vmatpush1.msra.mxu0 0.0
        %328 = vmatprep.subr.mxu0 0.0
        %329 = vmatpush1.msra.mxu0 0.0
        %330 = vmatprep.subr.mxu0 0.0
        %331 = vmatpush1.msra.mxu0 0.0
        %332 = vmatprep.subr.mxu0 0.0
        %333 = vmatpush1.msra.mxu0 0.0
        %334 = vmatprep.subr.mxu0 0.0
        %335 = vmatpush1.msra.mxu0 0.0
        %336 = vmatprep.subr.mxu0 0.0
        %337 = vmatpush1.msra.mxu0 0.0
        %338 = vmatprep.subr.mxu0 0.0
        %339 = vmatpush1.msra.mxu0 0.0
        %340 = vmatprep.subr.mxu0 0.0
        %341 = vmatpush1.msra.mxu0 0.0
        %342 = vmatprep.subr.mxu0 0.0
        %343 = vmatpush1.msra.mxu0 0.0
        %344 = vmatprep.subr.mxu0 0.0
        %345 = vmatpush1.msra.mxu0 0.0
        %346 = vmatprep.subr.mxu0 0.0
        %347 = vmatpush1.msra.mxu0 0.0
        %348 = vmatprep.subr.mxu0 0.0
        %349 = vmatpush1.msra.mxu0 0.0
        %350 = vmatprep.subr.mxu0 0.0
        %351 = vmatpush1.msra.mxu0 0.0
        %352 = vmatprep.subr.mxu0 0.0
        %353 = vmatpush1.msra.mxu0 0.0
        %354 = vmatprep.subr.mxu0 %v227
        %355 = vmatpush1.msra.mxu0 %v226
        %356 = vmatprep.subr.mxu0 0.0
        %357 = vmatpush2.msra.mxu0 0.0
        %358 = vmatprep.subr.mxu0 0.0
        %359 = vmatpush2.msra.mxu0 0.0
        %360 = vmatprep.subr.mxu0 0.0
        %361 = vmatpush2.msra.mxu0 0.0
        %362 = vmatprep.subr.mxu0 0.0
        %363 = vmatpush2.msra.mxu0 0.0
        %364 = vmatprep.subr.mxu0 0.0
        %365 = vmatpush2.msra.mxu0 0.0
        %366 = vmatprep.subr.mxu0 0.0
        %367 = vmatpush2.msra.mxu0 0.0
        %368 = vmatprep.subr.mxu0 0.0
        %369 = vmatpush2.msra.mxu0 0.0
        %370 = vmatprep.subr.mxu0 0.0
        %371 = vmatpush2.msra.mxu0 0.0
        %372 = vmatprep.subr.mxu0 0.0
        %373 = vmatpush2.msra.mxu0 0.0
        %374 = vmatprep.subr.mxu0 0.0
        %375 = vmatpush2.msra.mxu0 0.0
        %376 = vmatprep.subr.mxu0 0.0
        %377 = vmatpush2.msra.mxu0 0.0
        %378 = vmatprep.subr.mxu0 0.0
        %379 = vmatpush2.msra.mxu0 0.0
        %380 = vmatprep.subr.mxu0 0.0
        %381 = vmatpush2.msra.mxu0 0.0
        %382 = vmatprep.subr.mxu0 0.0
        %383 = vmatpush2.msra.mxu0 0.0
        %384 = vmatprep.subr.mxu0 0.0
        %385 = vmatpush2.msra.mxu0 0.0
        %386 = vmatprep.subr.mxu0 0.0
        %387 = vmatpush2.msra.mxu0 0.0
        %388 = vmatprep.mubr.f32.mxu0 0.0
        %389 = vmatmul.mubr.f32.gmra.mxu0 %v242
        %v390 = vpop.f32.mrf.mxu0
        %v391 = vadd.f32 %v233, %v390
        %v392 = vpop.f32.mrf.mxu0
        %v393 = vadd.f32 %v233, %v392
        %394 = vmatprep.mubr.f32.mxu0 0.0
        %395 = vmatmul.mubr.f32.gmra.mxu0 %v245
        %v396 = vpop.f32.mrf.mxu0
        %v397 = vadd.f32 %v238, %v396
        %v398 = vpop.f32.mrf.mxu0
        %v399 = vadd.f32 %v238, %v398
        %400 = vdwg.mxu0
        %vm401 = vcmp.gt.f32.partialorder %v314, 0.0
        %vm402 = vcmp.gt.f32.partialorder %v316, 0.0
        %vm403 = vcmp.gt.f32.partialorder %v391, 0.0
        %vm404 = vcmp.gt.f32.partialorder %v393, 0.0
        %vm405 = vcmp.gt.f32.partialorder %v320, 0.0
        %vm406 = vcmp.gt.f32.partialorder %v322, 0.0
        %vm407 = vcmp.gt.f32.partialorder %v397, 0.0
        %vm408 = vcmp.gt.f32.partialorder %v399, 0.0
        %v409 = vmin.f32 %v314, 0.0
        %v410 = vmin.f32 %v316, 0.0
        %v411 = vmin.f32 %v391, 0.0
        %v412 = vmin.f32 %v393, 0.0
        %v413 = vmin.f32 %v320, 0.0
        %v414 = vmin.f32 %v322, 0.0
        %v415 = vmin.f32 %v397, 0.0
        %v416 = vmin.f32 %v399, 0.0
        %v417 = vmul.f32 %v409, 1.442695
        %v418 = vpow.pop %v417
        %v419 = vmul.f32 %v410, 1.442695
        %v420 = vpow.pop %v419
        %v421 = vmul.f32 %v411, 1.442695
        %v422 = vpow.pop %v421
        %v423 = vmul.f32 %v412, 1.442695
        %v424 = vpow.pop %v423
        %v425 = vmul.f32 %v413, 1.442695
        %v426 = vpow.pop %v425
        %v427 = vmul.f32 %v414, 1.442695
        %v428 = vpow.pop %v427
        %v429 = vmul.f32 %v415, 1.442695
        %v430 = vpow.pop %v429
        %v431 = vmul.f32 %v416, 1.442695
        %v432 = vpow.pop %v431
        %v433 = vsub.f32 %v418, 1.0
        %v434 = vsub.f32 %v420, 1.0
        %v435 = vsub.f32 %v422, 1.0
        %v436 = vsub.f32 %v424, 1.0
        %v437 = vsub.f32 %v426, 1.0
        %v438 = vsub.f32 %v428, 1.0
        %v439 = vsub.f32 %v430, 1.0
        %v440 = vsub.f32 %v432, 1.0
        %v441 = vsel %vm401, %v314, %v433
        %v442 = vsel %vm402, %v316, %v434
        %v443 = vsel %vm403, %v391, %v435
        %v444 = vsel %vm404, %v393, %v436
        %v445 = vsel %vm405, %v320, %v437
        %v446 = vsel %vm406, %v322, %v438
        %v447 = vsel %vm407, %v397, %v439
        %v448 = vsel %vm408, %v399, %v440
        %v449 = vld [vmem:[%s3] sm:$0xff]
        %v450 = vld [vmem:[%s3 + $0x8] sm:$0xff]
        %452 = vset.pattern.permute.xlu0 0
        %453 = vperm.xlu0 %452, %v449
        %v454 = vpop.permute.xlu0 %453
        %457 = vset.pattern.permute.xlu0 0
        %458 = vperm.xlu0 %457, %v450
        %v459 = vpop.permute.xlu0 %458
        %v461 = vmul.f32 %v441, %v454
        %v462 = vmul.f32 %v442, %v454
        %v463 = vmul.f32 %v443, %v454
        %v464 = vmul.f32 %v444, %v454
        %v465 = vmul.f32 %v445, %v459
        %v466 = vmul.f32 %v446, %v459
        %v467 = vmul.f32 %v447, %v459
        %v468 = vmul.f32 %v448, %v459
        %v469 = vld [vmem:[%s4] sm:$0xff]
        %v470 = vld [vmem:[%s4 + $0x8] sm:$0xff]
        %472 = vset.pattern.permute.xlu0 0
        %473 = vperm.xlu0 %472, %v469
        %v474 = vpop.permute.xlu0 %473
        %477 = vset.pattern.permute.xlu0 0
        %478 = vperm.xlu0 %477, %v470
        %v479 = vpop.permute.xlu0 %478
        %v481 = vadd.f32 %v461, %v474
        %v482 = vadd.f32 %v462, %v474
        %v483 = vadd.f32 %v463, %v474
        %v484 = vadd.f32 %v464, %v474
        %v485 = vadd.f32 %v465, %v479
        %v486 = vadd.f32 %v466, %v479
        %v487 = vadd.f32 %v467, %v479
        %v488 = vadd.f32 %v468, %v479
        %v489 = vpack.c.bf16 %v485, %v481
        %v490 = vpack.c.bf16 %v486, %v482
        %v491 = vpack.c.bf16 %v487, %v483
        %v492 = vpack.c.bf16 %v488, %v484
        %v497 = vunpack.c.l.b16 %v489
        %v498 = vunpack.c.l.b16 %v490
        %v499 = vunpack.c.l.b16 %v491
        %v500 = vunpack.c.l.b16 %v492
        %v501 = vunpack.c.h.b16 %v489
        %v502 = vunpack.c.h.b16 %v490
        %v503 = vunpack.c.h.b16 %v491
        %v504 = vunpack.c.h.b16 %v492
        %v505 = vpack.c.b16 %v498, %v497
        %v506 = vpack.c.b16 %v500, %v499
        %v507 = vpack.c.b16 %v502, %v501
        %v508 = vpack.c.b16 %v504, %v503
        %513 = vst [vmem:[%s214] sm:$0xff] %v505
        %514 = vst [vmem:[%s214 + $0x8] sm:$0xff] %v506
        %515 = vst [vmem:[%s214 + $0x10] sm:$0xff] %v507
        %516 = vst [vmem:[%s214 + $0x18] sm:$0xff] %v508
        %s517 = sand.u32 %s134, 1
        %s518 = sand.u32 %s134, 1
        %s519 = smul.addr %s518, 32
        %s520 = scalar_lea.vmem [#allocation2], %s519
        // Predicated region
        $region41: #{s_backbone_forward.3} parent=39 // pred_check
          %p521 = pneg %p144
        $region42: #{s_backbone_forward.3} parent=39 // pred_check_branch
          %523 = sbr.rel (%p521) target = $region44
        $region43: #{s_backbone_forward.3} parent=39 // pred_region
          %s524 = smul.u32 4, %s16
          %s525 = smul.addr %s524, 4
          %s526 = scalar_lea.vmem %s5, %s525
          // Predicated region
          $region45: #{s_backbone_forward.3} parent=43 // pred_check
            _
          $region46: #{s_backbone_forward.3} parent=43 // pred_check_branch
            %528 = sbr.rel (0) target = $region48
          $region47: #{s_backbone_forward.3} parent=43 // pred_region
            // Predicated region
            $region49: #{s_backbone_forward.3} parent=47 // pred_check
              _
            $region50: #{s_backbone_forward.3} parent=47 // pred_check_branch
              %530 = sbr.rel (0) target = $region52
            $region51: #{s_backbone_forward.3} parent=47 // pred_region
              loop: start=0, step=1, limit=1
              $region53: #{s_backbone_forward.3} parent=51 // loop_pre_header
                _
              $region54: #{s_backbone_forward.3} parent=51 // loop_header
                %s532 = sphi 0, %s536
                %p533 = scmp.ge.s32.totalorder %s532, 1
                %s537 = sphi %s520, %s520
                %s538 = sphi %s526, %s526
              $region55: #{s_backbone_forward.3} parent=51 // loop_header_branch
                %535 = sbr.rel (%p533) target = $region59
              $region56: #{s_backbone_forward.3} parent=51 // loop_body
                %v539 = vld [vmem:[%s537] sm:$0xff]
                %540 = vst [vmem:[%s538] sm:$0xff] %v539
                %v541 = vld [vmem:[%s537 + $0x8] sm:$0xff]
                %542 = vst [vmem:[%s538 + $0x8] sm:$0xff] %v541
                %v543 = vld [vmem:[%s537 + $0x10] sm:$0xff]
                %544 = vst [vmem:[%s538 + $0x20] sm:$0xff] %v543
                %v545 = vld [vmem:[%s537 + $0x18] sm:$0xff]
                %546 = vst [vmem:[%s538 + $0x28] sm:$0xff] %v545
              $region57: #{s_backbone_forward.3} parent=51 // loop_footer
                %s536 = sadd.s32 1, %s532
              $region58: #{s_backbone_forward.3} parent=51 // loop_footer_branch
                %531 = sbr.rel target = $region54
              $region59: #{s_backbone_forward.3} parent=51 // loop_exit
                _
            $region52: #{s_backbone_forward.3} parent=47 // pred_fallthru
              _
            // Predicated region
            $region60: #{s_backbone_forward.3} parent=47 // pred_check
              _
            $region61: #{s_backbone_forward.3} parent=47 // pred_check_branch
              %548 = sbr.rel target = $region63
            $region62: #{s_backbone_forward.3} parent=47 // pred_region
              _
            $region63: #{s_backbone_forward.3} parent=47 // pred_fallthru
              _
          $region48: #{s_backbone_forward.3} parent=43 // pred_fallthru
            _
          %549 = vnop
        $region44: #{s_backbone_forward.3} parent=39 // pred_fallthru
          _
      $region40: #{s_backbone_forward.3} parent=5 // pred_fallthru
        _
      %p550 = scmp.le.s32.totalorder 2, %s11
      // Predicated region
      $region64: #{s_backbone_forward.3} parent=5 // pred_check
        %p551 = pneg %p550
      $region65: #{s_backbone_forward.3} parent=5 // pred_check_branch
        %553 = sbr.rel (%p551) target = $region67
      $region66: #{s_backbone_forward.3} parent=5 // pred_region
        %s554 = ssub.s32 %s11, 2
        // Predicated region
        $region68: #{s_backbone_forward.3} parent=66 // pred_check
          %p555 = pneg %p150
        $region69: #{s_backbone_forward.3} parent=66 // pred_check_branch
          %557 = sbr.rel (%p555) target = $region71
        $region70: #{s_backbone_forward.3} parent=66 // pred_region
          %s558 = sand.u32 %s135, 1
          %s559 = sand.u32 %s135, 1
          %s560 = smul.addr %s559, 32
          %s561 = scalar_lea.vmem [#allocation2], %s560
        $region71: #{s_backbone_forward.3} parent=66 // pred_fallthru
          _
      $region67: #{s_backbone_forward.3} parent=5 // pred_fallthru
        _
    $region6: #{s_backbone_forward.3} parent=1 // loop_footer
      %s15 = sadd.s32 1, %s11
    $region7: #{s_backbone_forward.3} parent=1 // loop_footer_branch
      %10 = sbr.rel target = $region3
    $region8: #{s_backbone_forward.3} parent=1 // loop_exit
      _

// kernel: s_backbone_forward.4
$region0: #{s_backbone_forward.4}
  #allocation0 [shape = 'u32[]', space=smem, size = 0x4, offset = 0x4, fixed_abs, tag = 'smem constant byte address 0x4 - core index']
  #allocation1 [shape = 'u32[144,128]{1,0:T(1,128)}', space=vmem, size = 0x12000, scoped, tag = 'internal scratch']
  %s0 = inlined_call_operand.vmem [shape: bf16[128,3072], index: 0, kind: input, shape index: {}]
  %s1 = inlined_call_operand.vmem [shape: bf16[4,128], index: 1, kind: input, shape index: {}]
  %s2 = inlined_call_operand.vmem [shape: f32[4,1], index: 2, kind: input, shape index: {}]
  %s3 = inlined_call_operand.vmem [shape: f32[4,1], index: 3, kind: input, shape index: {}]
  %s4 = inlined_call_operand.vmem [shape: f32[4,1], index: 4, kind: input, shape index: {}]
  %s5 = inlined_call_operand.vmem [shape: bf16[4,768], index: 5, kind: output, shape index: {}]
  %s6 = sld [smem:[#allocation0]]
  $region76: #{s_backbone_forward.4} parent=0
    _
  %s8 = ssub.s32 1, %s6
  %s9 = scalar_select 0, %s8, %s6
  $region1: #{s_backbone_forward.4} parent=0
    #allocation2 [shape = 'u8[786432]{0}', space=vmem, size = 0xc0000, scoped, tag = 'input window, operand 0']
    loop: start=0, step=1, limit=4
    $region2: #{s_backbone_forward.4} parent=1 // loop_pre_header
      _
    $region3: #{s_backbone_forward.4} parent=1 // loop_header
      %s11 = sphi 0, %s15
      %p12 = scmp.ge.s32.totalorder %s11, 4
      %s21 = sphi 0, %s23
      %s24 = sphi 0, %s21
      %s25 = sphi 0, %s24
      %s41 = sphi 0, %s25
      %s45 = sphi 0, %s45
      %s47 = sphi 0, %s45
      %s48 = sphi 0, %s47
      %s62 = sphi 0, %s48
      %s66 = sphi 0, %s66
      %s68 = sphi 0, %s66
      %s69 = sphi 0, %s68
      %s83 = sphi 0, %s69
      %s87 = sphi 0, %s87
      %s89 = sphi 0, %s87
      %s90 = sphi 0, %s89
      %s104 = sphi 0, %s90
      %s108 = sphi 0, %s108
      %s110 = sphi 0, %s108
      %s111 = sphi 0, %s110
      %s125 = sphi 0, %s111
      %s131 = sphi 0, %s133
      %s134 = sphi 0, %s131
      %s135 = sphi 0, %s134
      %s151 = sphi 0, %s135
    $region4: #{s_backbone_forward.4} parent=1 // loop_header_branch
      %14 = sbr.rel (%p12) target = $region8
    $region5: #{s_backbone_forward.4} parent=1 // loop_body
      %s16 = ssub.s32 %s11, 1
      %s17 = ssub.s32 %s11, 2
      %s18 = sadd.s32 %s11, 1
      %s19 = ssub.s32 %s11, %s18
      %p20 = scmp.eq.s32.totalorder %s19, 0
      %s22 = sadd.s32 %s21, 1
      %s23 = scalar_select %p20, %s21, %s22
      %p26 = pneg %p20
      %p27 = scmp.eq.s32.totalorder %s11, 1
      %p28 = por %p26, %p27
      %p29 = scmp.ne.s32.totalorder %s21, %s24
      %p30 = scmp.eq.s32.totalorder %s11, 0
      %p31 = por %p29, %p30
      %p32 = scmp.ne.s32.totalorder %s21, %s24
      %p33 = scmp.eq.s32.totalorder %s16, 1
      %p34 = por %p32, %p33
      %p35 = scmp.ne.s32.totalorder %s24, %s25
      %p36 = scmp.eq.s32.totalorder %s16, 0
      %p37 = por %p35, %p36
      %p38 = scmp.ne.s32.totalorder %s24, %s25
      %p39 = scmp.eq.s32.totalorder %s17, 1
      %p40 = por %p38, %p39
      %p42 = scmp.ne.s32.totalorder %s25, %s41
      %p43 = scmp.eq.s32.totalorder %s17, 0
      %p44 = por %p42, %p43
      %s46 = sadd.s32 %s45, 1
      %p49 = scmp.eq.s32.totalorder %s11, 1
      %p50 = scmp.ne.s32.totalorder %s45, %s47
      %p51 = scmp.eq.s32.totalorder %s11, 0
      %p52 = por %p50, %p51
      %p53 = scmp.ne.s32.totalorder %s45, %s47
      %p54 = scmp.eq.s32.totalorder %s16, 1
      %p55 = por %p53, %p54
      %p56 = scmp.ne.s32.totalorder %s47, %s48
      %p57 = scmp.eq.s32.totalorder %s16, 0
      %p58 = por %p56, %p57
      %p59 = scmp.ne.s32.totalorder %s47, %s48
      %p60 = scmp.eq.s32.totalorder %s17, 1
      %p61 = por %p59, %p60
      %p63 = scmp.ne.s32.totalorder %s48, %s62
      %p64 = scmp.eq.s32.totalorder %s17, 0
      %p65 = por %p63, %p64
      %s67 = sadd.s32 %s66, 1
      %p70 = scmp.eq.s32.totalorder %s11, 1
      %p71 = scmp.ne.s32.totalorder %s66, %s68
      %p72 = scmp.eq.s32.totalorder %s11, 0
      %p73 = por %p71, %p72
      %p74 = scmp.ne.s32.totalorder %s66, %s68
      %p75 = scmp.eq.s32.totalorder %s16, 1
      %p76 = por %p74, %p75
      %p77 = scmp.ne.s32.totalorder %s68, %s69
      %p78 = scmp.eq.s32.totalorder %s16, 0
      %p79 = por %p77, %p78
      %p80 = scmp.ne.s32.totalorder %s68, %s69
      %p81 = scmp.eq.s32.totalorder %s17, 1
      %p82 = por %p80, %p81
      %p84 = scmp.ne.s32.totalorder %s69, %s83
      %p85 = scmp.eq.s32.totalorder %s17, 0
      %p86 = por %p84, %p85
      %s88 = sadd.s32 %s87, 1
      %p91 = scmp.eq.s32.totalorder %s11, 1
      %p92 = scmp.ne.s32.totalorder %s87, %s89
      %p93 = scmp.eq.s32.totalorder %s11, 0
      %p94 = por %p92, %p93
      %p95 = scmp.ne.s32.totalorder %s87, %s89
      %p96 = scmp.eq.s32.totalorder %s16, 1
      %p97 = por %p95, %p96
      %p98 = scmp.ne.s32.totalorder %s89, %s90
      %p99 = scmp.eq.s32.totalorder %s16, 0
      %p100 = por %p98, %p99
      %p101 = scmp.ne.s32.totalorder %s89, %s90
      %p102 = scmp.eq.s32.totalorder %s17, 1
      %p103 = por %p101, %p102
      %p105 = scmp.ne.s32.totalorder %s90, %s104
      %p106 = scmp.eq.s32.totalorder %s17, 0
      %p107 = por %p105, %p106
      %s109 = sadd.s32 %s108, 1
      %p112 = scmp.eq.s32.totalorder %s11, 1
      %p113 = scmp.ne.s32.totalorder %s108, %s110
      %p114 = scmp.eq.s32.totalorder %s11, 0
      %p115 = por %p113, %p114
      %p116 = scmp.ne.s32.totalorder %s108, %s110
      %p117 = scmp.eq.s32.totalorder %s16, 1
      %p118 = por %p116, %p117
      %p119 = scmp.ne.s32.totalorder %s110, %s111
      %p120 = scmp.eq.s32.totalorder %s16, 0
      %p121 = por %p119, %p120
      %p122 = scmp.ne.s32.totalorder %s110, %s111
      %p123 = scmp.eq.s32.totalorder %s17, 1
      %p124 = por %p122, %p123
      %p126 = scmp.ne.s32.totalorder %s111, %s125
      %p127 = scmp.eq.s32.totalorder %s17, 0
      %p128 = por %p126, %p127
      %s129 = ssub.s32 %s11, %s18
      %p130 = scmp.eq.s32.totalorder %s129, 0
      %s132 = sadd.s32 %s131, 1
      %s133 = scalar_select %p130, %s131, %s132
      %p136 = pneg %p130
      %p137 = scmp.eq.s32.totalorder %s11, 1
      %p138 = por %p136, %p137
      %p139 = scmp.ne.s32.totalorder %s131, %s134
      %p140 = scmp.eq.s32.totalorder %s11, 0
      %p141 = por %p139, %p140
      %p142 = scmp.ne.s32.totalorder %s131, %s134
      %p143 = scmp.eq.s32.totalorder %s16, 1
      %p144 = por %p142, %p143
      %p145 = scmp.ne.s32.totalorder %s134, %s135
      %p146 = scmp.eq.s32.totalorder %s16, 0
      %p147 = por %p145, %p146
      %p148 = scmp.ne.s32.totalorder %s134, %s135
      %p149 = scmp.eq.s32.totalorder %s17, 1
      %p150 = por %p148, %p149
      %p152 = scmp.ne.s32.totalorder %s135, %s151
      %p153 = scmp.eq.s32.totalorder %s17, 0
      %p154 = por %p152, %p153
      %p155 = scmp.le.s32.totalorder 1, %s11
      %p156 = scmp.lt.s32.totalorder %s11, 3
      %p157 = pnand %p155, %p156
      %p158 = pneg %p157
      // Predicated region
      $region9: #{s_backbone_forward.4} parent=5 // pred_check
        _
      $region10: #{s_backbone_forward.4} parent=5 // pred_check_branch
        %160 = sbr.rel (%p157) target = $region12
      $region11: #{s_backbone_forward.4} parent=5 // pred_region
        %s161 = ssub.s32 %s11, 1
        // Predicated region
        $region13: #{s_backbone_forward.4} parent=11 // pred_check
          %p162 = pneg %p58
        $region14: #{s_backbone_forward.4} parent=11 // pred_check_branch
          %164 = sbr.rel (%p162) target = $region16
        $region15: #{s_backbone_forward.4} parent=11 // pred_region
          _
        $region16: #{s_backbone_forward.4} parent=11 // pred_fallthru
          _
        // Predicated region
        $region17: #{s_backbone_forward.4} parent=11 // pred_check
          %p165 = pneg %p79
        $region18: #{s_backbone_forward.4} parent=11 // pred_check_branch
          %167 = sbr.rel (%p165) target = $region20
        $region19: #{s_backbone_forward.4} parent=11 // pred_region
          _
        $region20: #{s_backbone_forward.4} parent=11 // pred_fallthru
          _
        // Predicated region
        $region21: #{s_backbone_forward.4} parent=11 // pred_check
          %p168 = pneg %p100
        $region22: #{s_backbone_forward.4} parent=11 // pred_check_branch
          %170 = sbr.rel (%p168) target = $region24
        $region23: #{s_backbone_forward.4} parent=11 // pred_region
          _
        $region24: #{s_backbone_forward.4} parent=11 // pred_fallthru
          _
        // Predicated region
        $region25: #{s_backbone_forward.4} parent=11 // pred_check
          %p171 = pneg %p121
        $region26: #{s_backbone_forward.4} parent=11 // pred_check_branch
          %173 = sbr.rel (%p171) target = $region28
        $region27: #{s_backbone_forward.4} parent=11 // pred_region
          _
        $region28: #{s_backbone_forward.4} parent=11 // pred_fallthru
          _
      $region12: #{s_backbone_forward.4} parent=5 // pred_fallthru
        _
      %p174 = scmp.lt.s32.totalorder %s11, 2
      // Predicated region
      $region29: #{s_backbone_forward.4} parent=5 // pred_check
        %p175 = pneg %p174
      $region30: #{s_backbone_forward.4} parent=5 // pred_check_branch
        %177 = sbr.rel (%p175) target = $region32
      $region31: #{s_backbone_forward.4} parent=5 // pred_region
        // Predicated region
        $region33: #{s_backbone_forward.4} parent=31 // pred_check
          %p178 = pneg %p31
        $region34: #{s_backbone_forward.4} parent=31 // pred_check_branch
          %180 = sbr.rel (%p178) target = $region36
        $region35: #{s_backbone_forward.4} parent=31 // pred_region
          %s181 = sand.u32 %s21, 1
          %s182 = sand.u32 %s21, 1
          %s183 = smul.addr %s182, 768
          %s184 = scalar_lea.vmem [#allocation2], %s183
          %s185 = smul.u32 12, %s11
          %s186 = smul.addr %s185, 4
          %s187 = scalar_lea.vmem %s0, %s186
          // Predicated region
          $region37: #{s_backbone_forward.4} parent=35 // pred_check
            _
          $region38: #{s_backbone_forward.4} parent=35 // pred_check_branch
            %189 = sbr.rel (0) target = $region40
          $region39: #{s_backbone_forward.4} parent=35 // pred_region
            // Predicated region
            $region41: #{s_backbone_forward.4} parent=39 // pred_check
              _
            $region42: #{s_backbone_forward.4} parent=39 // pred_check_branch
              %191 = sbr.rel (0) target = $region44
            $region43: #{s_backbone_forward.4} parent=39 // pred_region
              loop: start=0, step=1, limit=1
              $region45: #{s_backbone_forward.4} parent=43 // loop_pre_header
                _
              $region46: #{s_backbone_forward.4} parent=43 // loop_header
                %s193 = sphi 0, %s197
                %p194 = scmp.ge.s32.totalorder %s193, 1
                %s198 = sphi %s187, %s187
                %s199 = sphi %s184, %s184
              $region47: #{s_backbone_forward.4} parent=43 // loop_header_branch
                %196 = sbr.rel (%p194) target = $region51
              $region48: #{s_backbone_forward.4} parent=43 // loop_body
                %v200 = vld [vmem:[%s198] sm:$0xff]
                %201 = vst [vmem:[%s199] sm:$0xff] %v200
                %v202 = vld [vmem:[%s198 + $0x8] sm:$0xff]
                %203 = vst [vmem:[%s199 + $0x8] sm:$0xff] %v202
                %v204 = vld [vmem:[%s198 + $0x10] sm:$0xff]
                %205 = vst [vmem:[%s199 + $0x10] sm:$0xff] %v204
                %v206 = vld [vmem:[%s198 + $0x18] sm:$0xff]
                %207 = vst [vmem:[%s199 + $0x18] sm:$0xff] %v206
                %v208 = vld [vmem:[%s198 + $0x20] sm:$0xff]
                %209 = vst [vmem:[%s199 + $0x20] sm:$0xff] %v208
                %v210 = vld [vmem:[%s198 + $0x28] sm:$0xff]
                %211 = vst [vmem:[%s199 + $0x28] sm:$0xff] %v210
                %v212 = vld [vmem:[%s198 + $0x60] sm:$0xff]
                %213 = vst [vmem:[%s199 + $0x30] sm:$0xff] %v212
                %v214 = vld [vmem:[%s198 + $0x68] sm:$0xff]
                %215 = vst [vmem:[%s199 + $0x38] sm:$0xff] %v214
                %v216 = vld [vmem:[%s198 + $0x70] sm:$0xff]
                %217 = vst [vmem:[%s199 + $0x40] sm:$0xff] %v216
                %v218 = vld [vmem:[%s198 + $0x78] sm:$0xff]
                %219 = vst [vmem:[%s199 + $0x48] sm:$0xff] %v218
                %v220 = vld [vmem:[%s198 + $0x80] sm:$0xff]
                %221 = vst [vmem:[%s199 + $0x50] sm:$0xff] %v220
                %v222 = vld [vmem:[%s198 + $0x88] sm:$0xff]
                %223 = vst [vmem:[%s199 + $0x58] sm:$0xff] %v222
                %v224 = vld [vmem:[%s198 + $0xc0] sm:$0xff]
                %225 = vst [vmem:[%s199 + $0x60] sm:$0xff] %v224
                %v226 = vld [vmem:[%s198 + $0xc8] sm:$0xff]
                %227 = vst [vmem:[%s199 + $0x68] sm:$0xff] %v226
                %v228 = vld [vmem:[%s198 + $0xd0] sm:$0xff]
                %229 = vst [vmem:[%s199 + $0x70] sm:$0xff] %v228
                %v230 = vld [vmem:[%s198 + $0xd8] sm:$0xff]
                %231 = vst [vmem:[%s199 + $0x78] sm:$0xff] %v230
                %v232 = vld [vmem:[%s198 + $0xe0] sm:$0xff]
                %233 = vst [vmem:[%s199 + $0x80] sm:$0xff] %v232
                %v234 = vld [vmem:[%s198 + $0xe8] sm:$0xff]
                %235 = vst [vmem:[%s199 + $0x88] sm:$0xff] %v234
                %v236 = vld [vmem:[%s198 + $0x120] sm:$0xff]
                %237 = vst [vmem:[%s199 + $0x90] sm:$0xff] %v236
                %v238 = vld [vmem:[%s198 + $0x128] sm:$0xff]
                %239 = vst [vmem:[%s199 + $0x98] sm:$0xff] %v238
                %v240 = vld [vmem:[%s198 + $0x130] sm:$0xff]
                %241 = vst [vmem:[%s199 + $0xa0] sm:$0xff] %v240
                %v242 = vld [vmem:[%s198 + $0x138] sm:$0xff]
                %243 = vst [vmem:[%s199 + $0xa8] sm:$0xff] %v242
                %v244 = vld [vmem:[%s198 + $0x140] sm:$0xff]
                %245 = vst [vmem:[%s199 + $0xb0] sm:$0xff] %v244
                %v246 = vld [vmem:[%s198 + $0x148] sm:$0xff]
                %247 = vst [vmem:[%s199 + $0xb8] sm:$0xff] %v246
                %v248 = vld [vmem:[%s198 + $0x180] sm:$0xff]
                %249 = vst [vmem:[%s199 + $0xc0] sm:$0xff] %v248
                %v250 = vld [vmem:[%s198 + $0x188] sm:$0xff]
                %251 = vst [vmem:[%s199 + $0xc8] sm:$0xff] %v250
                %v252 = vld [vmem:[%s198 + $0x190] sm:$0xff]
                %253 = vst [vmem:[%s199 + $0xd0] sm:$0xff] %v252
                %v254 = vld [vmem:[%s198 + $0x198] sm:$0xff]
                %255 = vst [vmem:[%s199 + $0xd8] sm:$0xff] %v254
                %v256 = vld [vmem:[%s198 + $0x1a0] sm:$0xff]
                %257 = vst [vmem:[%s199 + $0xe0] sm:$0xff] %v256
                %v258 = vld [vmem:[%s198 + $0x1a8] sm:$0xff]
                %259 = vst [vmem:[%s199 + $0xe8] sm:$0xff] %v258
                %v260 = vld [vmem:[%s198 + $0x1e0] sm:$0xff]
                %261 = vst [vmem:[%s199 + $0xf0] sm:$0xff] %v260
                %v262 = vld [vmem:[%s198 + $0x1e8] sm:$0xff]
                %263 = vst [vmem:[%s199 + $0xf8] sm:$0xff] %v262
                %v264 = vld [vmem:[%s198 + $0x1f0] sm:$0xff]
                %265 = vst [vmem:[%s199 + $0x100] sm:$0xff] %v264
                %v266 = vld [vmem:[%s198 + $0x1f8] sm:$0xff]
                %267 = vst [vmem:[%s199 + $0x108] sm:$0xff] %v266
                %v268 = vld [vmem:[%s198 + $0x200] sm:$0xff]
                %269 = vst [vmem:[%s199 + $0x110] sm:$0xff] %v268
                %v270 = vld [vmem:[%s198 + $0x208] sm:$0xff]
                %271 = vst [vmem:[%s199 + $0x118] sm:$0xff] %v270
                %v272 = vld [vmem:[%s198 + $0x240] sm:$0xff]
                %273 = vst [vmem:[%s199 + $0x120] sm:$0xff] %v272
                %v274 = vld [vmem:[%s198 + $0x248] sm:$0xff]
                %275 = vst [vmem:[%s199 + $0x128] sm:$0xff] %v274
                %v276 = vld [vmem:[%s198 + $0x250] sm:$0xff]
                %277 = vst [vmem:[%s199 + $0x130] sm:$0xff] %v276
                %v278 = vld [vmem:[%s198 + $0x258] sm:$0xff]
                %279 = vst [vmem:[%s199 + $0x138] sm:$0xff] %v278
                %v280 = vld [vmem:[%s198 + $0x260] sm:$0xff]
                %281 = vst [vmem:[%s199 + $0x140] sm:$0xff] %v280
                %v282 = vld [vmem:[%s198 + $0x268] sm:$0xff]
                %283 = vst [vmem:[%s199 + $0x148] sm:$0xff] %v282
                %v284 = vld [vmem:[%s198 + $0x2a0] sm:$0xff]
                %285 = vst [vmem:[%s199 + $0x150] sm:$0xff] %v284
                %v286 = vld [vmem:[%s198 + $0x2a8] sm:$0xff]
                %287 = vst [vmem:[%s199 + $0x158] sm:$0xff] %v286
                %v288 = vld [vmem:[%s198 + $0x2b0] sm:$0xff]
                %289 = vst [vmem:[%s199 + $0x160] sm:$0xff] %v288
                %v290 = vld [vmem:[%s198 + $0x2b8] sm:$0xff]
                %291 = vst [vmem:[%s199 + $0x168] sm:$0xff] %v290
                %v292 = vld [vmem:[%s198 + $0x2c0] sm:$0xff]
                %293 = vst [vmem:[%s199 + $0x170] sm:$0xff] %v292
                %v294 = vld [vmem:[%s198 + $0x2c8] sm:$0xff]
                %295 = vst [vmem:[%s199 + $0x178] sm:$0xff] %v294
                %v296 = vld [vmem:[%s198 + $0x300] sm:$0xff]
                %297 = vst [vmem:[%s199 + $0x180] sm:$0xff] %v296
                %v298 = vld [vmem:[%s198 + $0x308] sm:$0xff]
                %299 = vst [vmem:[%s199 + $0x188] sm:$0xff] %v298
                %v300 = vld [vmem:[%s198 + $0x310] sm:$0xff]
                %301 = vst [vmem:[%s199 + $0x190] sm:$0xff] %v300
                %v302 = vld [vmem:[%s198 + $0x318] sm:$0xff]
                %303 = vst [vmem:[%s199 + $0x198] sm:$0xff] %v302
                %v304 = vld [vmem:[%s198 + $0x320] sm:$0xff]
                %305 = vst [vmem:[%s199 + $0x1a0] sm:$0xff] %v304
                %v306 = vld [vmem:[%s198 + $0x328] sm:$0xff]
                %307 = vst [vmem:[%s199 + $0x1a8] sm:$0xff] %v306
                %v308 = vld [vmem:[%s198 + $0x360] sm:$0xff]
                %309 = vst [vmem:[%s199 + $0x1b0] sm:$0xff] %v308
                %v310 = vld [vmem:[%s198 + $0x368] sm:$0xff]
                %311 = vst [vmem:[%s199 + $0x1b8] sm:$0xff] %v310
                %v312 = vld [vmem:[%s198 + $0x370] sm:$0xff]
                %313 = vst [vmem:[%s199 + $0x1c0] sm:$0xff] %v312
                %v314 = vld [vmem:[%s198 + $0x378] sm:$0xff]
                %315 = vst [vmem:[%s199 + $0x1c8] sm:$0xff] %v314
                %v316 = vld [vmem:[%s198 + $0x380] sm:$0xff]
                %317 = vst [vmem:[%s199 + $0x1d0] sm:$0xff] %v316
                %v318 = vld [vmem:[%s198 + $0x388] sm:$0xff]
                %319 = vst [vmem:[%s199 + $0x1d8] sm:$0xff] %v318
                %v320 = vld [vmem:[%s198 + $0x3c0] sm:$0xff]
                %321 = vst [vmem:[%s199 + $0x1e0] sm:$0xff] %v320
                %v322 = vld [vmem:[%s198 + $0x3c8] sm:$0xff]
                %323 = vst [vmem:[%s199 + $0x1e8] sm:$0xff] %v322
                %v324 = vld [vmem:[%s198 + $0x3d0] sm:$0xff]
                %325 = vst [vmem:[%s199 + $0x1f0] sm:$0xff] %v324
                %v326 = vld [vmem:[%s198 + $0x3d8] sm:$0xff]
                %327 = vst [vmem:[%s199 + $0x1f8] sm:$0xff] %v326
                %v328 = vld [vmem:[%s198 + $0x3e0] sm:$0xff]
                %329 = vst [vmem:[%s199 + $0x200] sm:$0xff] %v328
                %v330 = vld [vmem:[%s198 + $0x3e8] sm:$0xff]
                %331 = vst [vmem:[%s199 + $0x208] sm:$0xff] %v330
                %v332 = vld [vmem:[%s198 + $0x420] sm:$0xff]
                %333 = vst [vmem:[%s199 + $0x210] sm:$0xff] %v332
                %v334 = vld [vmem:[%s198 + $0x428] sm:$0xff]
                %335 = vst [vmem:[%s199 + $0x218] sm:$0xff] %v334
                %v336 = vld [vmem:[%s198 + $0x430] sm:$0xff]
                %337 = vst [vmem:[%s199 + $0x220] sm:$0xff] %v336
                %v338 = vld [vmem:[%s198 + $0x438] sm:$0xff]
                %339 = vst [vmem:[%s199 + $0x228] sm:$0xff] %v338
                %v340 = vld [vmem:[%s198 + $0x440] sm:$0xff]
                %341 = vst [vmem:[%s199 + $0x230] sm:$0xff] %v340
                %v342 = vld [vmem:[%s198 + $0x448] sm:$0xff]
                %343 = vst [vmem:[%s199 + $0x238] sm:$0xff] %v342
                %v344 = vld [vmem:[%s198 + $0x480] sm:$0xff]
                %345 = vst [vmem:[%s199 + $0x240] sm:$0xff] %v344
                %v346 = vld [vmem:[%s198 + $0x488] sm:$0xff]
                %347 = vst [vmem:[%s199 + $0x248] sm:$0xff] %v346
                %v348 = vld [vmem:[%s198 + $0x490] sm:$0xff]
                %349 = vst [vmem:[%s199 + $0x250] sm:$0xff] %v348
                %v350 = vld [vmem:[%s198 + $0x498] sm:$0xff]
                %351 = vst [vmem:[%s199 + $0x258] sm:$0xff] %v350
                %v352 = vld [vmem:[%s198 + $0x4a0] sm:$0xff]
                %353 = vst [vmem:[%s199 + $0x260] sm:$0xff] %v352
                %v354 = vld [vmem:[%s198 + $0x4a8] sm:$0xff]
                %355 = vst [vmem:[%s199 + $0x268] sm:$0xff] %v354
                %v356 = vld [vmem:[%s198 + $0x4e0] sm:$0xff]
                %357 = vst [vmem:[%s199 + $0x270] sm:$0xff] %v356
                %v358 = vld [vmem:[%s198 + $0x4e8] sm:$0xff]
                %359 = vst [vmem:[%s199 + $0x278] sm:$0xff] %v358
                %v360 = vld [vmem:[%s198 + $0x4f0] sm:$0xff]
                %361 = vst [vmem:[%s199 + $0x280] sm:$0xff] %v360
                %v362 = vld [vmem:[%s198 + $0x4f8] sm:$0xff]
                %363 = vst [vmem:[%s199 + $0x288] sm:$0xff] %v362
                %v364 = vld [vmem:[%s198 + $0x500] sm:$0xff]
                %365 = vst [vmem:[%s199 + $0x290] sm:$0xff] %v364
                %v366 = vld [vmem:[%s198 + $0x508] sm:$0xff]
                %367 = vst [vmem:[%s199 + $0x298] sm:$0xff] %v366
                %v368 = vld [vmem:[%s198 + $0x540] sm:$0xff]
                %369 = vst [vmem:[%s199 + $0x2a0] sm:$0xff] %v368
                %v370 = vld [vmem:[%s198 + $0x548] sm:$0xff]
                %371 = vst [vmem:[%s199 + $0x2a8] sm:$0xff] %v370
                %v372 = vld [vmem:[%s198 + $0x550] sm:$0xff]
                %373 = vst [vmem:[%s199 + $0x2b0] sm:$0xff] %v372
                %v374 = vld [vmem:[%s198 + $0x558] sm:$0xff]
                %375 = vst [vmem:[%s199 + $0x2b8] sm:$0xff] %v374
                %v376 = vld [vmem:[%s198 + $0x560] sm:$0xff]
                %377 = vst [vmem:[%s199 + $0x2c0] sm:$0xff] %v376
                %v378 = vld [vmem:[%s198 + $0x568] sm:$0xff]
                %379 = vst [vmem:[%s199 + $0x2c8] sm:$0xff] %v378
                %v380 = vld [vmem:[%s198 + $0x5a0] sm:$0xff]
                %381 = vst [vmem:[%s199 + $0x2d0] sm:$0xff] %v380
                %v382 = vld [vmem:[%s198 + $0x5a8] sm:$0xff]
                %383 = vst [vmem:[%s199 + $0x2d8] sm:$0xff] %v382
                %v384 = vld [vmem:[%s198 + $0x5b0] sm:$0xff]
                %385 = vst [vmem:[%s199 + $0x2e0] sm:$0xff] %v384
                %v386 = vld [vmem:[%s198 + $0x5b8] sm:$0xff]
                %387 = vst [vmem:[%s199 + $0x2e8] sm:$0xff] %v386
                %v388 = vld [vmem:[%s198 + $0x5c0] sm:$0xff]
                %389 = vst [vmem:[%s199 + $0x2f0] sm:$0xff] %v388
                %v390 = vld [vmem:[%s198 + $0x5c8] sm:$0xff]
                %391 = vst [vmem:[%s199 + $0x2f8] sm:$0xff] %v390
              $region49: #{s_backbone_forward.4} parent=43 // loop_footer
                %s197 = sadd.s32 1, %s193
              $region50: #{s_backbone_forward.4} parent=43 // loop_footer_branch
                %192 = sbr.rel target = $region46
              $region51: #{s_backbone_forward.4} parent=43 // loop_exit
                _
            $region44: #{s_backbone_forward.4} parent=39 // pred_fallthru
              _
            // Predicated region
            $region52: #{s_backbone_forward.4} parent=39 // pred_check
              _
            $region53: #{s_backbone_forward.4} parent=39 // pred_check_branch
              %393 = sbr.rel target = $region55
            $region54: #{s_backbone_forward.4} parent=39 // pred_region
              _
            $region55: #{s_backbone_forward.4} parent=39 // pred_fallthru
              _
          $region40: #{s_backbone_forward.4} parent=35 // pred_fallthru
            _
          %394 = vnop
        $region36: #{s_backbone_forward.4} parent=31 // pred_fallthru
          _
      $region32: #{s_backbone_forward.4} parent=5 // pred_fallthru
        _
      %p395 = scmp.le.s32.totalorder 1, %s11
      %p396 = scmp.lt.s32.totalorder %s11, 3
      %p397 = pnand %p395, %p396
      %p398 = pneg %p397
      // Predicated region
      $region56: #{s_backbone_forward.4} parent=5 // pred_check
        _
      $region57: #{s_backbone_forward.4} parent=5 // pred_check_branch
        %400 = sbr.rel (%p397) target = $region59
      $region58: #{s_backbone_forward.4} parent=5 // pred_region
        %s401 = ssub.s32 %s11, 1
        %s402 = sand.u32 %s24, 1
        %s403 = sand.u32 %s24, 1
        %s404 = smul.addr %s403, 768
        %s405 = scalar_lea.vmem [#allocation2], %s404
        // Predicated region
        $region60: #{s_backbone_forward.4} parent=58 // pred_check
          %p406 = pneg %p37
        $region61: #{s_backbone_forward.4} parent=58 // pred_check_branch
          %408 = sbr.rel (%p406) target = $region63
        $region62: #{s_backbone_forward.4} parent=58 // pred_region
          _
        $region63: #{s_backbone_forward.4} parent=58 // pred_fallthru
          _
        %s409 = sand.u32 %s24, 1
        %s410 = sand.u32 %s24, 1
        %s411 = smul.addr %s410, 768
        %s412 = scalar_lea.vmem [#allocation2], %s411
        %p413 = pneg %p37
        %p414 = pneg %p34
        %p415 = pneg %p58
        %p416 = pneg %p55
        %p417 = pneg %p79
        %p418 = pneg %p76
        %p419 = pneg %p100
        %p420 = pneg %p97
        %p421 = pneg %p121
        %p422 = pneg %p118
        %p423 = pneg %p147
        %p424 = pneg %p144
        %s425 = smul.u32 3, %s16
        %p426 = scmp.lt.s32.totalorder %s425, 5
        %s427 = scalar_select %p426, %s425, 5
        %s428 = smul.addr %s427, 2
        %s429 = scalar_lea.vmem %s5, %s428
        %s430 = smul.u32 12, %s16
        %s431 = smul.u32 3, %s16
        %p432 = scmp.lt.s32.totalorder %s431, 5
        %s433 = scalar_select %p432, %s431, 5
        %s434 = smul.addr %s433, 2
        %s435 = scalar_lea.vmem %s5, %s434
        %s436 = smul.u32 3, %s16
        %v438 = vld [vmem:[%s1] sm:$0x3]
        %v439 = vld [vmem:[%s405] sm:$0xff]
        %v440 = vld [vmem:[%s405 + $0x8] sm:$0xff]
        %v441 = vld [vmem:[%s405 + $0x10] sm:$0xff]
        %v442 = vld [vmem:[%s405 + $0x18] sm:$0xff]
        %v443 = vld [vmem:[%s405 + $0x20] sm:$0xff]
        %v444 = vld [vmem:[%s405 + $0x28] sm:$0xff]
        %v445 = vld [vmem:[%s405 + $0x30] sm:$0xff]
        %v446 = vld [vmem:[%s405 + $0x38] sm:$0xff]
        %v447 = vld [vmem:[%s405 + $0x40] sm:$0xff]
        %v448 = vld [vmem:[%s405 + $0x48] sm:$0xff]
        %v449 = vld [vmem:[%s405 + $0x50] sm:$0xff]
        %v450 = vld [vmem:[%s405 + $0x58] sm:$0xff]
        %v451 = vld [vmem:[%s405 + $0x60] sm:$0xff]
        %v452 = vld [vmem:[%s405 + $0x68] sm:$0xff]
        %v453 = vld [vmem:[%s405 + $0x70] sm:$0xff]
        %v454 = vld [vmem:[%s405 + $0x78] sm:$0xff]
        %v455 = vld [vmem:[%s405 + $0x80] sm:$0xff]
        %v456 = vld [vmem:[%s405 + $0x88] sm:$0xff]
        %v457 = vld [vmem:[%s405 + $0x90] sm:$0xff]
        %v458 = vld [vmem:[%s405 + $0x98] sm:$0xff]
        %v459 = vld [vmem:[%s405 + $0xa0] sm:$0xff]
        %v460 = vld [vmem:[%s405 + $0xa8] sm:$0xff]
        %v461 = vld [vmem:[%s405 + $0xb0] sm:$0xff]
        %v462 = vld [vmem:[%s405 + $0xb8] sm:$0xff]
        %v463 = vld [vmem:[%s405 + $0xc0] sm:$0xff]
        %v464 = vld [vmem:[%s405 + $0xc8] sm:$0xff]
        %v465 = vld [vmem:[%s405 + $0xd0] sm:$0xff]
        %v466 = vld [vmem:[%s405 + $0xd8] sm:$0xff]
        %v467 = vld [vmem:[%s405 + $0xe0] sm:$0xff]
        %v468 = vld [vmem:[%s405 + $0xe8] sm:$0xff]
        %v469 = vld [vmem:[%s405 + $0xf0] sm:$0xff]
        %v470 = vld [vmem:[%s405 + $0xf8] sm:$0xff]
        %v471 = vld [vmem:[%s405 + $0x100] sm:$0xff]
        %v472 = vld [vmem:[%s405 + $0x108] sm:$0xff]
        %v473 = vld [vmem:[%s405 + $0x110] sm:$0xff]
        %v474 = vld [vmem:[%s405 + $0x118] sm:$0xff]
        %v475 = vld [vmem:[%s405 + $0x120] sm:$0xff]
        %v476 = vld [vmem:[%s405 + $0x128] sm:$0xff]
        %v477 = vld [vmem:[%s405 + $0x130] sm:$0xff]
        %v478 = vld [vmem:[%s405 + $0x138] sm:$0xff]
        %v479 = vld [vmem:[%s405 + $0x140] sm:$0xff]
        %v480 = vld [vmem:[%s405 + $0x148] sm:$0xff]
        %v481 = vld [vmem:[%s405 + $0x150] sm:$0xff]
        %v482 = vld [vmem:[%s405 + $0x158] sm:$0xff]
        %v483 = vld [vmem:[%s405 + $0x160] sm:$0xff]
        %v484 = vld [vmem:[%s405 + $0x168] sm:$0xff]
        %v485 = vld [vmem:[%s405 + $0x170] sm:$0xff]
        %v486 = vld [vmem:[%s405 + $0x178] sm:$0xff]
        %v487 = vld [vmem:[%s405 + $0x180] sm:$0xff]
        %v488 = vld [vmem:[%s405 + $0x188] sm:$0xff]
        %v489 = vld [vmem:[%s405 + $0x190] sm:$0xff]
        %v490 = vld [vmem:[%s405 + $0x198] sm:$0xff]
        %v491 = vld [vmem:[%s405 + $0x1a0] sm:$0xff]
        %v492 = vld [vmem:[%s405 + $0x1a8] sm:$0xff]
        %v493 = vld [vmem:[%s405 + $0x1b0] sm:$0xff]
        %v494 = vld [vmem:[%s405 + $0x1b8] sm:$0xff]
        %v495 = vld [vmem:[%s405 + $0x1c0] sm:$0xff]
        %v496 = vld [vmem:[%s405 + $0x1c8] sm:$0xff]
        %v497 = vld [vmem:[%s405 + $0x1d0] sm:$0xff]
        %v498 = vld [vmem:[%s405 + $0x1d8] sm:$0xff]
        %v499 = vld [vmem:[%s405 + $0x1e0] sm:$0xff]
        %v500 = vld [vmem:[%s405 + $0x1e8] sm:$0xff]
        %v501 = vld [vmem:[%s405 + $0x1f0] sm:$0xff]
        %v502 = vld [vmem:[%s405 + $0x1f8] sm:$0xff]
        %v503 = vld [vmem:[%s405 + $0x200] sm:$0xff]
        %v504 = vld [vmem:[%s405 + $0x208] sm:$0xff]
        %v505 = vld [vmem:[%s405 + $0x210] sm:$0xff]
        %v506 = vld [vmem:[%s405 + $0x218] sm:$0xff]
        %v507 = vld [vmem:[%s405 + $0x220] sm:$0xff]
        %v508 = vld [vmem:[%s405 + $0x228] sm:$0xff]
        %v509 = vld [vmem:[%s405 + $0x230] sm:$0xff]
        %v510 = vld [vmem:[%s405 + $0x238] sm:$0xff]
        %v511 = vld [vmem:[%s405 + $0x240] sm:$0xff]
        %v512 = vld [vmem:[%s405 + $0x248] sm:$0xff]
        %v513 = vld [vmem:[%s405 + $0x250] sm:$0xff]
        %v514 = vld [vmem:[%s405 + $0x258] sm:$0xff]
        %v515 = vld [vmem:[%s405 + $0x260] sm:$0xff]
        %v516 = vld [vmem:[%s405 + $0x268] sm:$0xff]
        %v517 = vld [vmem:[%s405 + $0x270] sm:$0xff]
        %v518 = vld [vmem:[%s405 + $0x278] sm:$0xff]
        %v519 = vld [vmem:[%s405 + $0x280] sm:$0xff]
        %v520 = vld [vmem:[%s405 + $0x288] sm:$0xff]
        %v521 = vld [vmem:[%s405 + $0x290] sm:$0xff]
        %v522 = vld [vmem:[%s405 + $0x298] sm:$0xff]
        %v523 = vld [vmem:[%s405 + $0x2a0] sm:$0xff]
        %v524 = vld [vmem:[%s405 + $0x2a8] sm:$0xff]
        %v525 = vld [vmem:[%s405 + $0x2b0] sm:$0xff]
        %v526 = vld [vmem:[%s405 + $0x2b8] sm:$0xff]
        %v527 = vld [vmem:[%s405 + $0x2c0] sm:$0xff]
        %v528 = vld [vmem:[%s405 + $0x2c8] sm:$0xff]
        %v529 = vld [vmem:[%s405 + $0x2d0] sm:$0xff]
        %v530 = vld [vmem:[%s405 + $0x2d8] sm:$0xff]
        %v531 = vld [vmem:[%s405 + $0x2e0] sm:$0xff]
        %v532 = vld [vmem:[%s405 + $0x2e8] sm:$0xff]
        %v533 = vld [vmem:[%s405 + $0x2f0] sm:$0xff]
        %v534 = vld [vmem:[%s405 + $0x2f8] sm:$0xff]
        %v631 = vunpack.c.l.b16 %v439
        %v632 = vunpack.c.h.b16 %v439
        %v633 = vunpack.c.l.b16 %v440
        %v634 = vunpack.c.h.b16 %v440
        %v635 = vunpack.c.l.b16 %v441
        %v636 = vunpack.c.h.b16 %v441
        %v637 = vunpack.c.l.b16 %v442
        %v638 = vunpack.c.h.b16 %v442
        %v639 = vunpack.c.l.b16 %v443
        %v640 = vunpack.c.h.b16 %v443
        %v641 = vunpack.c.l.b16 %v444
        %v642 = vunpack.c.h.b16 %v444
        %v643 = vunpack.c.l.b16 %v445
        %v644 = vunpack.c.h.b16 %v445
        %v645 = vunpack.c.l.b16 %v446
        %v646 = vunpack.c.h.b16 %v446
        %v647 = vunpack.c.l.b16 %v447
        %v648 = vunpack.c.h.b16 %v447
        %v649 = vunpack.c.l.b16 %v448
        %v650 = vunpack.c.h.b16 %v448
        %v651 = vunpack.c.l.b16 %v449
        %v652 = vunpack.c.h.b16 %v449
        %v653 = vunpack.c.l.b16 %v450
        %v654 = vunpack.c.h.b16 %v450
        %v655 = vunpack.c.l.b16 %v451
        %v656 = vunpack.c.h.b16 %v451
        %v657 = vunpack.c.l.b16 %v452
        %v658 = vunpack.c.h.b16 %v452
        %v659 = vunpack.c.l.b16 %v453
        %v660 = vunpack.c.h.b16 %v453
        %v661 = vunpack.c.l.b16 %v454
        %v662 = vunpack.c.h.b16 %v454
        %v663 = vunpack.c.l.b16 %v455
        %v664 = vunpack.c.h.b16 %v455
        %v665 = vunpack.c.l.b16 %v456
        %v666 = vunpack.c.h.b16 %v456
        %v667 = vunpack.c.l.b16 %v457
        %v668 = vunpack.c.h.b16 %v457
        %v669 = vunpack.c.l.b16 %v458
        %v670 = vunpack.c.h.b16 %v458
        %v671 = vunpack.c.l.b16 %v459
        %v672 = vunpack.c.h.b16 %v459
        %v673 = vunpack.c.l.b16 %v460
        %v674 = vunpack.c.h.b16 %v460
        %v675 = vunpack.c.l.b16 %v461
        %v676 = vunpack.c.h.b16 %v461
        %v677 = vunpack.c.l.b16 %v462
        %v678 = vunpack.c.h.b16 %v462
        %v679 = vunpack.c.l.b16 %v463
        %v680 = vunpack.c.h.b16 %v463
        %v681 = vunpack.c.l.b16 %v464
        %v682 = vunpack.c.h.b16 %v464
        %v683 = vunpack.c.l.b16 %v465
        %v684 = vunpack.c.h.b16 %v465
        %v685 = vunpack.c.l.b16 %v466
        %v686 = vunpack.c.h.b16 %v466
        %v687 = vunpack.c.l.b16 %v467
        %v688 = vunpack.c.h.b16 %v467
        %v689 = vunpack.c.l.b16 %v468
        %v690 = vunpack.c.h.b16 %v468
        %v691 = vunpack.c.l.b16 %v469
        %v692 = vunpack.c.h.b16 %v469
        %v693 = vunpack.c.l.b16 %v470
        %v694 = vunpack.c.h.b16 %v470
        %v695 = vunpack.c.l.b16 %v471
        %v696 = vunpack.c.h.b16 %v471
        %v697 = vunpack.c.l.b16 %v472
        %v698 = vunpack.c.h.b16 %v472
        %v699 = vunpack.c.l.b16 %v473
        %v700 = vunpack.c.h.b16 %v473
        %v701 = vunpack.c.l.b16 %v474
        %v702 = vunpack.c.h.b16 %v474
        %v703 = vunpack.c.l.b16 %v475
        %v704 = vunpack.c.h.b16 %v475
        %v705 = vunpack.c.l.b16 %v476
        %v706 = vunpack.c.h.b16 %v476
        %v707 = vunpack.c.l.b16 %v477
        %v708 = vunpack.c.h.b16 %v477
        %v709 = vunpack.c.l.b16 %v478
        %v710 = vunpack.c.h.b16 %v478
        %v711 = vunpack.c.l.b16 %v479
        %v712 = vunpack.c.h.b16 %v479
        %v713 = vunpack.c.l.b16 %v480
        %v714 = vunpack.c.h.b16 %v480
        %v715 = vunpack.c.l.b16 %v481
        %v716 = vunpack.c.h.b16 %v481
        %v717 = vunpack.c.l.b16 %v482
        %v718 = vunpack.c.h.b16 %v482
        %v719 = vunpack.c.l.b16 %v483
        %v720 = vunpack.c.h.b16 %v483
        %v721 = vunpack.c.l.b16 %v484
        %v722 = vunpack.c.h.b16 %v484
        %v723 = vunpack.c.l.b16 %v485
        %v724 = vunpack.c.h.b16 %v485
        %v725 = vunpack.c.l.b16 %v486
        %v726 = vunpack.c.h.b16 %v486
        %v727 = vunpack.c.l.b16 %v487
        %v728 = vunpack.c.h.b16 %v487
        %v729 = vunpack.c.l.b16 %v488
        %v730 = vunpack.c.h.b16 %v488
        %v731 = vunpack.c.l.b16 %v489
        %v732 = vunpack.c.h.b16 %v489
        %v733 = vunpack.c.l.b16 %v490
        %v734 = vunpack.c.h.b16 %v490
        %v735 = vunpack.c.l.b16 %v491
        %v736 = vunpack.c.h.b16 %v491
        %v737 = vunpack.c.l.b16 %v492
        %v738 = vunpack.c.h.b16 %v492
        %v739 = vunpack.c.l.b16 %v493
        %v740 = vunpack.c.h.b16 %v493
        %v741 = vunpack.c.l.b16 %v494
        %v742 = vunpack.c.h.b16 %v494
        %v743 = vunpack.c.l.b16 %v495
        %v744 = vunpack.c.h.b16 %v495
        %v745 = vunpack.c.l.b16 %v496
        %v746 = vunpack.c.h.b16 %v496
        %v747 = vunpack.c.l.b16 %v497
        %v748 = vunpack.c.h.b16 %v497
        %v749 = vunpack.c.l.b16 %v498
        %v750 = vunpack.c.h.b16 %v498
        %v751 = vunpack.c.l.b16 %v499
        %v752 = vunpack.c.h.b16 %v499
        %v753 = vunpack.c.l.b16 %v500
        %v754 = vunpack.c.h.b16 %v500
        %v755 = vunpack.c.l.b16 %v501
        %v756 = vunpack.c.h.b16 %v501
        %v757 = vunpack.c.l.b16 %v502
        %v758 = vunpack.c.h.b16 %v502
        %v759 = vunpack.c.l.b16 %v503
        %v760 = vunpack.c.h.b16 %v503
        %v761 = vunpack.c.l.b16 %v504
        %v762 = vunpack.c.h.b16 %v504
        %v763 = vunpack.c.l.b16 %v505
        %v764 = vunpack.c.h.b16 %v505
        %v765 = vunpack.c.l.b16 %v506
        %v766 = vunpack.c.h.b16 %v506
        %v767 = vunpack.c.l.b16 %v507
        %v768 = vunpack.c.h.b16 %v507
        %v769 = vunpack.c.l.b16 %v508
        %v770 = vunpack.c.h.b16 %v508
        %v771 = vunpack.c.l.b16 %v509
        %v772 = vunpack.c.h.b16 %v509
        %v773 = vunpack.c.l.b16 %v510
        %v774 = vunpack.c.h.b16 %v510
        %v775 = vunpack.c.l.b16 %v511
        %v776 = vunpack.c.h.b16 %v511
        %v777 = vunpack.c.l.b16 %v512
        %v778 = vunpack.c.h.b16 %v512
        %v779 = vunpack.c.l.b16 %v513
        %v780 = vunpack.c.h.b16 %v513
        %v781 = vunpack.c.l.b16 %v514
        %v782 = vunpack.c.h.b16 %v514
        %v783 = vunpack.c.l.b16 %v515
        %v784 = vunpack.c.h.b16 %v515
        %v785 = vunpack.c.l.b16 %v516
        %v786 = vunpack.c.h.b16 %v516
        %v787 = vunpack.c.l.b16 %v517
        %v788 = vunpack.c.h.b16 %v517
        %v789 = vunpack.c.l.b16 %v518
        %v790 = vunpack.c.h.b16 %v518
        %v791 = vunpack.c.l.b16 %v519
        %v792 = vunpack.c.h.b16 %v519
        %v793 = vunpack.c.l.b16 %v520
        %v794 = vunpack.c.h.b16 %v520
        %v795 = vunpack.c.l.b16 %v521
        %v796 = vunpack.c.h.b16 %v521
        %v797 = vunpack.c.l.b16 %v522
        %v798 = vunpack.c.h.b16 %v522
        %v799 = vunpack.c.l.b16 %v523
        %v800 = vunpack.c.h.b16 %v523
        %v801 = vunpack.c.l.b16 %v524
        %v802 = vunpack.c.h.b16 %v524
        %v803 = vunpack.c.l.b16 %v525
        %v804 = vunpack.c.h.b16 %v525
        %v805 = vunpack.c.l.b16 %v526
        %v806 = vunpack.c.h.b16 %v526
        %v807 = vunpack.c.l.b16 %v527
        %v808 = vunpack.c.h.b16 %v527
        %v809 = vunpack.c.l.b16 %v528
        %v810 = vunpack.c.h.b16 %v528
        %v811 = vunpack.c.l.b16 %v529
        %v812 = vunpack.c.h.b16 %v529
        %v813 = vunpack.c.l.b16 %v530
        %v814 = vunpack.c.h.b16 %v530
        %v815 = vunpack.c.l.b16 %v531
        %v816 = vunpack.c.h.b16 %v531
        %v817 = vunpack.c.l.b16 %v532
        %v818 = vunpack.c.h.b16 %v532
        %v819 = vunpack.c.l.b16 %v533
        %v820 = vunpack.c.h.b16 %v533
        %v821 = vunpack.c.l.b16 %v534
        %v822 = vunpack.c.h.b16 %v534
        %v823 = vpack.c.b16 %v643, %v631
        %v824 = vpack.c.b16 %v644, %v632
        %v825 = vpack.c.b16 %v645, %v633
        %v826 = vpack.c.b16 %v646, %v634
        %v827 = vpack.c.b16 %v647, %v635
        %v828 = vpack.c.b16 %v648, %v636
        %v829 = vpack.c.b16 %v649, %v637
        %v830 = vpack.c.b16 %v650, %v638
        %v831 = vpack.c.b16 %v651, %v639
        %v832 = vpack.c.b16 %v652, %v640
        %v833 = vpack.c.b16 %v653, %v641
        %v834 = vpack.c.b16 %v654, %v642
        %v835 = vpack.c.b16 %v667, %v655
        %v836 = vpack.c.b16 %v668, %v656
        %v837 = vpack.c.b16 %v669, %v657
        %v838 = vpack.c.b16 %v670, %v658
        %v839 = vpack.c.b16 %v671, %v659
        %v840 = vpack.c.b16 %v672, %v660
        %v841 = vpack.c.b16 %v673, %v661
        %v842 = vpack.c.b16 %v674, %v662
        %v843 = vpack.c.b16 %v675, %v663
        %v844 = vpack.c.b16 %v676, %v664
        %v845 = vpack.c.b16 %v677, %v665
        %v846 = vpack.c.b16 %v678, %v666
        %v847 = vpack.c.b16 %v691, %v679
        %v848 = vpack.c.b16 %v692, %v680
        %v849 = vpack.c.b16 %v693, %v681
        %v850 = vpack.c.b16 %v694, %v682
        %v851 = vpack.c.b16 %v695, %v683
        %v852 = vpack.c.b16 %v696, %v684
        %v853 = vpack.c.b16 %v697, %v685
        %v854 = vpack.c.b16 %v698, %v686
        %v855 = vpack.c.b16 %v699, %v687
        %v856 = vpack.c.b16 %v700, %v688
        %v857 = vpack.c.b16 %v701, %v689
        %v858 = vpack.c.b16 %v702, %v690
        %v859 = vpack.c.b16 %v715, %v703
        %v860 = vpack.c.b16 %v716, %v704
        %v861 = vpack.c.b16 %v717, %v705
        %v862 = vpack.c.b16 %v718, %v706
        %v863 = vpack.c.b16 %v719, %v707
        %v864 = vpack.c.b16 %v720, %v708
        %v865 = vpack.c.b16 %v721, %v709
        %v866 = vpack.c.b16 %v722, %v710
        %v867 = vpack.c.b16 %v723, %v711
        %v868 = vpack.c.b16 %v724, %v712
        %v869 = vpack.c.b16 %v725, %v713
        %v870 = vpack.c.b16 %v726, %v714
        %v871 = vpack.c.b16 %v739, %v727
        %v872 = vpack.c.b16 %v740, %v728
        %v873 = vpack.c.b16 %v741, %v729
        %v874 = vpack.c.b16 %v742, %v730
        %v875 = vpack.c.b16 %v743, %v731
        %v876 = vpack.c.b16 %v744, %v732
        %v877 = vpack.c.b16 %v745, %v733
        %v878 = vpack.c.b16 %v746, %v734
        %v879 = vpack.c.b16 %v747, %v735
        %v880 = vpack.c.b16 %v748, %v736
        %v881 = vpack.c.b16 %v749, %v737
        %v882 = vpack.c.b16 %v750, %v738
        %v883 = vpack.c.b16 %v763, %v751
        %v884 = vpack.c.b16 %v764, %v752
        %v885 = vpack.c.b16 %v765, %v753
        %v886 = vpack.c.b16 %v766, %v754
        %v887 = vpack.c.b16 %v767, %v755
        %v888 = vpack.c.b16 %v768, %v756
        %v889 = vpack.c.b16 %v769, %v757
        %v890 = vpack.c.b16 %v770, %v758
        %v891 = vpack.c.b16 %v771, %v759
        %v892 = vpack.c.b16 %v772, %v760
        %v893 = vpack.c.b16 %v773, %v761
        %v894 = vpack.c.b16 %v774, %v762
        %v895 = vpack.c.b16 %v787, %v775
        %v896 = vpack.c.b16 %v788, %v776
        %v897 = vpack.c.b16 %v789, %v777
        %v898 = vpack.c.b16 %v790, %v778
        %v899 = vpack.c.b16 %v791, %v779
        %v900 = vpack.c.b16 %v792, %v780
        %v901 = vpack.c.b16 %v793, %v781
        %v902 = vpack.c.b16 %v794, %v782
        %v903 = vpack.c.b16 %v795, %v783
        %v904 = vpack.c.b16 %v796, %v784
        %v905 = vpack.c.b16 %v797, %v785
        %v906 = vpack.c.b16 %v798, %v786
        %v907 = vpack.c.b16 %v811, %v799
        %v908 = vpack.c.b16 %v812, %v800
        %v909 = vpack.c.b16 %v813, %v801
        %v910 = vpack.c.b16 %v814, %v802
        %v911 = vpack.c.b16 %v815, %v803
        %v912 = vpack.c.b16 %v816, %v804
        %v913 = vpack.c.b16 %v817, %v805
        %v914 = vpack.c.b16 %v818, %v806
        %v915 = vpack.c.b16 %v819, %v807
        %v916 = vpack.c.b16 %v820, %v808
        %v917 = vpack.c.b16 %v821, %v809
        %v918 = vpack.c.b16 %v822, %v810
        %1015 = vmatprep.subr.bf16.mxu0 %v908
        %1016 = vmatpush1.bf16.msra.mxu0 %v907
        %1017 = vmatprep.subr.bf16.mxu0 %v896
        %1018 = vmatpush1.bf16.msra.mxu0 %v895
        %1019 = vmatprep.subr.bf16.mxu0 %v884
        %1020 = vmatpush1.bf16.msra.mxu0 %v883
        %1021 = vmatprep.subr.bf16.mxu0 %v872
        %1022 = vmatpush1.bf16.msra.mxu0 %v871
        %1023 = vmatprep.subr.bf16.mxu0 %v860
        %1024 = vmatpush1.bf16.msra.mxu0 %v859
        %1025 = vmatprep.subr.bf16.mxu0 %v848
        %1026 = vmatpush1.bf16.msra.mxu0 %v847
        %1027 = vmatprep.subr.bf16.mxu0 %v836
        %1028 = vmatpush1.bf16.msra.mxu0 %v835
        %1029 = vmatprep.subr.bf16.mxu0 %v824
        %1030 = vmatpush1.bf16.msra.mxu0 %v823
        %1031 = vmatprep.subr.bf16.mxu0 0
        %1032 = vmatpush2.bf16.msra.mxu0 0
        %1033 = vmatprep.subr.bf16.mxu0 0
        %1034 = vmatpush2.bf16.msra.mxu0 0
        %1035 = vmatprep.subr.bf16.mxu0 0
        %1036 = vmatpush2.bf16.msra.mxu0 0
        %1037 = vmatprep.subr.bf16.mxu0 0
        %1038 = vmatpush2.bf16.msra.mxu0 0
        %1039 = vmatprep.subr.bf16.mxu0 0
        %1040 = vmatpush2.bf16.msra.mxu0 0
        %1041 = vmatprep.subr.bf16.mxu0 0
        %1042 = vmatpush2.bf16.msra.mxu0 0
        %1043 = vmatprep.subr.bf16.mxu0 0
        %1044 = vmatpush2.bf16.msra.mxu0 0
        %1045 = vmatprep.subr.bf16.mxu0 0
        %1046 = vmatpush2.bf16.msra.mxu0 0
        %1047 = vmatprep.mubr.bf16.mxu0 0
        %1048 = vmatmul.mubr.bf16.gmra.mxu0 %v438
        %v1049 = vpop.f32.mrf.mxu0
        %v1050 = vadd.f32 0.0, %v1049
        %v1051 = vpop.f32.mrf.mxu0
        %v1052 = vadd.f32 0.0, %v1051
        %v1053 = vpop.f32.mrf.mxu0
        %v1054 = vpop.f32.mrf.mxu0
        %1055 = vdwg.mxu0
        %1056 = vmatprep.subr.bf16.mxu0 %v910
        %1057 = vmatpush1.bf16.msra.mxu0 %v909
        %1058 = vmatprep.subr.bf16.mxu0 %v898
        %1059 = vmatpush1.bf16.msra.mxu0 %v897
        %1060 = vmatprep.subr.bf16.mxu0 %v886
        %1061 = vmatpush1.bf16.msra.mxu0 %v885
        %1062 = vmatprep.subr.bf16.mxu0 %v874
        %1063 = vmatpush1.bf16.msra.mxu0 %v873
        %1064 = vmatprep.subr.bf16.mxu0 %v862
        %1065 = vmatpush1.bf16.msra.mxu0 %v861
        %1066 = vmatprep.subr.bf16.mxu0 %v850
        %1067 = vmatpush1.bf16.msra.mxu0 %v849
        %1068 = vmatprep.subr.bf16.mxu0 %v838
        %1069 = vmatpush1.bf16.msra.mxu0 %v837
        %1070 = vmatprep.subr.bf16.mxu0 %v826
        %1071 = vmatpush1.bf16.msra.mxu0 %v825
        %1072 = vmatprep.subr.bf16.mxu0 0
        %1073 = vmatpush2.bf16.msra.mxu0 0
        %1074 = vmatprep.subr.bf16.mxu0 0
        %1075 = vmatpush2.bf16.msra.mxu0 0
        %1076 = vmatprep.subr.bf16.mxu0 0
        %1077 = vmatpush2.bf16.msra.mxu0 0
        %1078 = vmatprep.subr.bf16.mxu0 0
        %1079 = vmatpush2.bf16.msra.mxu0 0
        %1080 = vmatprep.subr.bf16.mxu0 0
        %1081 = vmatpush2.bf16.msra.mxu0 0
        %1082 = vmatprep.subr.bf16.mxu0 0
        %1083 = vmatpush2.bf16.msra.mxu0 0
        %1084 = vmatprep.subr.bf16.mxu0 0
        %1085 = vmatpush2.bf16.msra.mxu0 0
        %1086 = vmatprep.subr.bf16.mxu0 0
        %1087 = vmatpush2.bf16.msra.mxu0 0
        %1088 = vmatprep.mubr.bf16.mxu0 0
        %1089 = vmatmul.mubr.bf16.gmra.mxu0 %v438
        %v1090 = vpop.f32.mrf.mxu0
        %v1091 = vadd.f32 0.0, %v1090
        %v1092 = vpop.f32.mrf.mxu0
        %v1093 = vadd.f32 0.0, %v1092
        %v1094 = vpop.f32.mrf.mxu0
        %v1095 = vpop.f32.mrf.mxu0
        %1096 = vdwg.mxu0
        %1097 = vmatprep.subr.bf16.mxu0 %v912
        %1098 = vmatpush1.bf16.msra.mxu0 %v911
        %1099 = vmatprep.subr.bf16.mxu0 %v900
        %1100 = vmatpush1.bf16.msra.mxu0 %v899
        %1101 = vmatprep.subr.bf16.mxu0 %v888
        %1102 = vmatpush1.bf16.msra.mxu0 %v887
        %1103 = vmatprep.subr.bf16.mxu0 %v876
        %1104 = vmatpush1.bf16.msra.mxu0 %v875
        %1105 = vmatprep.subr.bf16.mxu0 %v864
        %1106 = vmatpush1.bf16.msra.mxu0 %v863
        %1107 = vmatprep.subr.bf16.mxu0 %v852
        %1108 = vmatpush1.bf16.msra.mxu0 %v851
        %1109 = vmatprep.subr.bf16.mxu0 %v840
        %1110 = vmatpush1.bf16.msra.mxu0 %v839
        %1111 = vmatprep.subr.bf16.mxu0 %v828
        %1112 = vmatpush1.bf16.msra.mxu0 %v827
        %1113 = vmatprep.subr.bf16.mxu0 0
        %1114 = vmatpush2.bf16.msra.mxu0 0
        %1115 = vmatprep.subr.bf16.mxu0 0
        %1116 = vmatpush2.bf16.msra.mxu0 0
        %1117 = vmatprep.subr.bf16.mxu0 0
        %1118 = vmatpush2.bf16.msra.mxu0 0
        %1119 = vmatprep.subr.bf16.mxu0 0
        %1120 = vmatpush2.bf16.msra.mxu0 0
        %1121 = vmatprep.subr.bf16.mxu0 0
        %1122 = vmatpush2.bf16.msra.mxu0 0
        %1123 = vmatprep.subr.bf16.mxu0 0
        %1124 = vmatpush2.bf16.msra.mxu0 0
        %1125 = vmatprep.subr.bf16.mxu0 0
        %1126 = vmatpush2.bf16.msra.mxu0 0
        %1127 = vmatprep.subr.bf16.mxu0 0
        %1128 = vmatpush2.bf16.msra.mxu0 0
        %1129 = vmatprep.mubr.bf16.mxu0 0
        %1130 = vmatmul.mubr.bf16.gmra.mxu0 %v438
        %v1131 = vpop.f32.mrf.mxu0
        %v1132 = vadd.f32 0.0, %v1131
        %v1133 = vpop.f32.mrf.mxu0
        %v1134 = vadd.f32 0.0, %v1133
        %v1135 = vpop.f32.mrf.mxu0
        %v1136 = vpop.f32.mrf.mxu0
        %1137 = vdwg.mxu0
        %1138 = vmatprep.subr.bf16.mxu0 %v914
        %1139 = vmatpush1.bf16.msra.mxu0 %v913
        %1140 = vmatprep.subr.bf16.mxu0 %v902
        %1141 = vmatpush1.bf16.msra.mxu0 %v901
        %1142 = vmatprep.subr.bf16.mxu0 %v890
        %1143 = vmatpush1.bf16.msra.mxu0 %v889
        %1144 = vmatprep.subr.bf16.mxu0 %v878
        %1145 = vmatpush1.bf16.msra.mxu0 %v877
        %1146 = vmatprep.subr.bf16.mxu0 %v866
        %1147 = vmatpush1.bf16.msra.mxu0 %v865
        %1148 = vmatprep.subr.bf16.mxu0 %v854
        %1149 = vmatpush1.bf16.msra.mxu0 %v853
        %1150 = vmatprep.subr.bf16.mxu0 %v842
        %1151 = vmatpush1.bf16.msra.mxu0 %v841
        %1152 = vmatprep.subr.bf16.mxu0 %v830
        %1153 = vmatpush1.bf16.msra.mxu0 %v829
        %1154 = vmatprep.subr.bf16.mxu0 0
        %1155 = vmatpush2.bf16.msra.mxu0 0
        %1156 = vmatprep.subr.bf16.mxu0 0
        %1157 = vmatpush2.bf16.msra.mxu0 0
        %1158 = vmatprep.subr.bf16.mxu0 0
        %1159 = vmatpush2.bf16.msra.mxu0 0
        %1160 = vmatprep.subr.bf16.mxu0 0
        %1161 = vmatpush2.bf16.msra.mxu0 0
        %1162 = vmatprep.subr.bf16.mxu0 0
        %1163 = vmatpush2.bf16.msra.mxu0 0
        %1164 = vmatprep.subr.bf16.mxu0 0
        %1165 = vmatpush2.bf16.msra.mxu0 0
        %1166 = vmatprep.subr.bf16.mxu0 0
        %1167 = vmatpush2.bf16.msra.mxu0 0
        %1168 = vmatprep.subr.bf16.mxu0 0
        %1169 = vmatpush2.bf16.msra.mxu0 0
        %1170 = vmatprep.mubr.bf16.mxu0 0
        %1171 = vmatmul.mubr.bf16.gmra.mxu0 %v438
        %v1172 = vpop.f32.mrf.mxu0
        %v1173 = vadd.f32 0.0, %v1172
        %v1174 = vpop.f32.mrf.mxu0
        %v1175 = vadd.f32 0.0, %v1174
        %v1176 = vpop.f32.mrf.mxu0
        %v1177 = vpop.f32.mrf.mxu0
        %1178 = vdwg.mxu0
        %1179 = vmatprep.subr.bf16.mxu0 %v916
        %1180 = vmatpush1.bf16.msra.mxu0 %v915
        %1181 = vmatprep.subr.bf16.mxu0 %v904
        %1182 = vmatpush1.bf16.msra.mxu0 %v903
        %1183 = vmatprep.subr.bf16.mxu0 %v892
        %1184 = vmatpush1.bf16.msra.mxu0 %v891
        %1185 = vmatprep.subr.bf16.mxu0 %v880
        %1186 = vmatpush1.bf16.msra.mxu0 %v879
        %1187 = vmatprep.subr.bf16.mxu0 %v868
        %1188 = vmatpush1.bf16.msra.mxu0 %v867
        %1189 = vmatprep.subr.bf16.mxu0 %v856
        %1190 = vmatpush1.bf16.msra.mxu0 %v855
        %1191 = vmatprep.subr.bf16.mxu0 %v844
        %1192 = vmatpush1.bf16.msra.mxu0 %v843
        %1193 = vmatprep.subr.bf16.mxu0 %v832
        %1194 = vmatpush1.bf16.msra.mxu0 %v831
        %1195 = vmatprep.subr.bf16.mxu0 0
        %1196 = vmatpush2.bf16.msra.mxu0 0
        %1197 = vmatprep.subr.bf16.mxu0 0
        %1198 = vmatpush2.bf16.msra.mxu0 0
        %1199 = vmatprep.subr.bf16.mxu0 0
        %1200 = vmatpush2.bf16.msra.mxu0 0
        %1201 = vmatprep.subr.bf16.mxu0 0
        %1202 = vmatpush2.bf16.msra.mxu0 0
        %1203 = vmatprep.subr.bf16.mxu0 0
        %1204 = vmatpush2.bf16.msra.mxu0 0
        %1205 = vmatprep.subr.bf16.mxu0 0
        %1206 = vmatpush2.bf16.msra.mxu0 0
        %1207 = vmatprep.subr.bf16.mxu0 0
        %1208 = vmatpush2.bf16.msra.mxu0 0
        %1209 = vmatprep.subr.bf16.mxu0 0
        %1210 = vmatpush2.bf16.msra.mxu0 0
        %1211 = vmatprep.mubr.bf16.mxu0 0
        %1212 = vmatmul.mubr.bf16.gmra.mxu0 %v438
        %v1213 = vpop.f32.mrf.mxu0
        %v1214 = vadd.f32 0.0, %v1213
        %v1215 = vpop.f32.mrf.mxu0
        %v1216 = vadd.f32 0.0, %v1215
        %v1217 = vpop.f32.mrf.mxu0
        %v1218 = vpop.f32.mrf.mxu0
        %1219 = vdwg.mxu0
        %1220 = vmatprep.subr.bf16.mxu0 %v918
        %1221 = vmatpush1.bf16.msra.mxu0 %v917
        %1222 = vmatprep.subr.bf16.mxu0 %v906
        %1223 = vmatpush1.bf16.msra.mxu0 %v905
        %1224 = vmatprep.subr.bf16.mxu0 %v894
        %1225 = vmatpush1.bf16.msra.mxu0 %v893
        %1226 = vmatprep.subr.bf16.mxu0 %v882
        %1227 = vmatpush1.bf16.msra.mxu0 %v881
        %1228 = vmatprep.subr.bf16.mxu0 %v870
        %1229 = vmatpush1.bf16.msra.mxu0 %v869
        %1230 = vmatprep.subr.bf16.mxu0 %v858
        %1231 = vmatpush1.bf16.msra.mxu0 %v857
        %1232 = vmatprep.subr.bf16.mxu0 %v846
        %1233 = vmatpush1.bf16.msra.mxu0 %v845
        %1234 = vmatprep.subr.bf16.mxu0 %v834
        %1235 = vmatpush1.bf16.msra.mxu0 %v833
        %1236 = vmatprep.subr.bf16.mxu0 0
        %1237 = vmatpush2.bf16.msra.mxu0 0
        %1238 = vmatprep.subr.bf16.mxu0 0
        %1239 = vmatpush2.bf16.msra.mxu0 0
        %1240 = vmatprep.subr.bf16.mxu0 0
        %1241 = vmatpush2.bf16.msra.mxu0 0
        %1242 = vmatprep.subr.bf16.mxu0 0
        %1243 = vmatpush2.bf16.msra.mxu0 0
        %1244 = vmatprep.subr.bf16.mxu0 0
        %1245 = vmatpush2.bf16.msra.mxu0 0
        %1246 = vmatprep.subr.bf16.mxu0 0
        %1247 = vmatpush2.bf16.msra.mxu0 0
        %1248 = vmatprep.subr.bf16.mxu0 0
        %1249 = vmatpush2.bf16.msra.mxu0 0
        %1250 = vmatprep.subr.bf16.mxu0 0
        %1251 = vmatpush2.bf16.msra.mxu0 0
        %1252 = vmatprep.mubr.bf16.mxu0 0
        %1253 = vmatmul.mubr.bf16.gmra.mxu0 %v438
        %v1254 = vpop.f32.mrf.mxu0
        %v1255 = vadd.f32 0.0, %v1254
        %v1256 = vpop.f32.mrf.mxu0
        %v1257 = vadd.f32 0.0, %v1256
        %v1258 = vpop.f32.mrf.mxu0
        %v1259 = vpop.f32.mrf.mxu0
        %1260 = vdwg.mxu0
        %v1261 = vmax.f32 %v1050, %v1093
        %v1262 = vmax.f32 %v1052, %v1132
        %v1263 = vmax.f32 %v1091, %v1134
        %v1264 = vmin.f32 %v1050, %v1093
        %v1265 = vmin.f32 %v1052, %v1132
        %v1266 = vmin.f32 %v1091, %v1134
        %v1267 = vmax.f32 %v1261, %v1173
        %v1268 = vmax.f32 %v1262, %v1175
        %v1269 = vmax.f32 %v1263, %v1214
        %v1270 = vmin.f32 %v1264, %v1173
        %v1271 = vmin.f32 %v1265, %v1175
        %v1272 = vmin.f32 %v1266, %v1214
        %v1273 = vmax.f32 %v1267, %v1216
        %v1274 = vmax.f32 %v1268, %v1255
        %v1275 = vmax.f32 %v1269, %v1257
        %v1276 = vmin.f32 %v1270, %v1216
        %v1277 = vmin.f32 %v1271, %v1255
        %v1278 = vmin.f32 %v1272, %v1257
        %v1279 = vld [vmem:[%s3] sm:$0xf]
        %vm1280 = vcmp.ge.f32.partialorder %v1279, 0.0
        %v1281 = vsel %vm1280, 1, 0
        %1282 = vset.pattern.permute.xlu0 0
        %1283 = vperm.xlu0 %1282, %v1281
        %v1284 = vpop.permute.xlu0 %1283
        %vm1285 = vcmp.eq.s32.totalorder %v1284, 1
        %v1286 = vsel %vm1285, %v1273, %v1276
        %v1287 = vsel %vm1285, %v1274, %v1277
        %v1288 = vsel %vm1285, %v1275, %v1278
        %v1289 = vld [vmem:[%s2] sm:$0xf]
        %1291 = vset.pattern.permute.xlu0 0
        %1292 = vperm.xlu0 %1291, %v1289
        %v1293 = vpop.permute.xlu0 %1292
        %v1295 = vadd.f32 %v1286, %v1293
        %v1296 = vadd.f32 %v1287, %v1293
        %v1297 = vadd.f32 %v1288, %v1293
        %vm1298 = vcmp.gt.f32.partialorder %v1295, 0.0
        %vm1299 = vcmp.gt.f32.partialorder %v1296, 0.0
        %vm1300 = vcmp.gt.f32.partialorder %v1297, 0.0
        %v1301 = vmin.f32 %v1295, 0.0
        %v1302 = vmin.f32 %v1296, 0.0
        %v1303 = vmin.f32 %v1297, 0.0
        %v1304 = vmul.f32 %v1301, 1.442695
        %v1305 = vpow.pop %v1304
        %v1306 = vmul.f32 %v1302, 1.442695
        %v1307 = vpow.pop %v1306
        %v1308 = vmul.f32 %v1303, 1.442695
        %v1309 = vpow.pop %v1308
        %v1310 = vsub.f32 %v1305, 1.0
        %v1311 = vsub.f32 %v1307, 1.0
        %v1312 = vsub.f32 %v1309, 1.0
        %v1313 = vsel %vm1298, %v1295, %v1310
        %v1314 = vsel %vm1299, %v1296, %v1311
        %v1315 = vsel %vm1300, %v1297, %v1312
        %1317 = vset.pattern.permute.xlu0 0
        %1318 = vperm.xlu0 %1317, %v1279
        %v1319 = vpop.permute.xlu0 %1318
        %v1321 = vmul.f32 %v1313, %v1319
        %v1322 = vmul.f32 %v1314, %v1319
        %v1323 = vmul.f32 %v1315, %v1319
        %v1324 = vld [vmem:[%s4] sm:$0xf]
        %1326 = vset.pattern.permute.xlu0 0
        %1327 = vperm.xlu0 %1326, %v1324
        %v1328 = vpop.permute.xlu0 %1327
        %v1330 = vadd.f32 %v1321, %v1328
        %v1331 = vadd.f32 %v1322, %v1328
        %v1332 = vadd.f32 %v1323, %v1328
        %v1333 = vpack.c.bf16 %v1330, %v1330
        %v1334 = vpack.c.bf16 %v1331, %v1331
        %v1335 = vpack.c.bf16 %v1332, %v1332
        %v1339 = vcombine.low %v1333, %v1334
        %v1341 = vunpack.c.l.s4 1983009808
        %v1342 = vunpack.c.0.s8 %v1341
        %v1343 = vlaneseq
        %v1344 = vshrl.u32 %v1343, 7
        %v1345 = vsub.s32 %v1342, %v1344
        %v1346 = vrot.slane %v1339, %v1345
        %v1348 = vunpack.c.l.s4 1983009808
        %v1349 = vunpack.c.0.s8 %v1348
        %v1350 = vlaneseq
        %v1351 = vshrl.u32 %v1350, 7
        %v1352 = vsub.s32 %v1349, %v1351
        %v1353 = vrot.slane %v1335, %v1352
        %v1354 = vcombine.low %v1346, %v1353
        %1356 = vst [vmem:[%s435] sm:$0x3f] %v1354
        %s1357 = smul.u32 3, %s16
        %p1358 = scmp.lt.s32.totalorder %s1357, 5
        %s1359 = scalar_select %p1358, %s1357, 5
        %s1360 = smul.addr %s1359, 2
        %s1361 = scalar_lea.vmem %s5, %s1360
        // Predicated region
        $region64: #{s_backbone_forward.4} parent=58 // pred_check
          %p1362 = pneg %p144
        $region65: #{s_backbone_forward.4} parent=58 // pred_check_branch
          %1364 = sbr.rel (%p1362) target = $region67
        $region66: #{s_backbone_forward.4} parent=58 // pred_region
          %s1365 = smul.u32 3, %s16
        $region67: #{s_backbone_forward.4} parent=58 // pred_fallthru
          _
      $region59: #{s_backbone_forward.4} parent=5 // pred_fallthru
        _
      %p1366 = scmp.le.s32.totalorder 2, %s11
      // Predicated region
      $region68: #{s_backbone_forward.4} parent=5 // pred_check
        %p1367 = pneg %p1366
      $region69: #{s_backbone_forward.4} parent=5 // pred_check_branch
        %1369 = sbr.rel (%p1367) target = $region71
      $region70: #{s_backbone_forward.4} parent=5 // pred_region
        %s1370 = ssub.s32 %s11, 2
        // Predicated region
        $region72: #{s_backbone_forward.4} parent=70 // pred_check
          %p1371 = pneg %p150
        $region73: #{s_backbone_forward.4} parent=70 // pred_check_branch
          %1373 = sbr.rel (%p1371) target = $region75
        $region74: #{s_backbone_forward.4} parent=70 // pred_region
          %s1374 = smul.u32 3, %s17
          %p1375 = scmp.lt.s32.totalorder %s1374, 5
          %s1376 = scalar_select %p1375, %s1374, 5
          %s1377 = smul.addr %s1376, 2
          %s1378 = scalar_lea.vmem %s5, %s1377
        $region75: #{s_backbone_forward.4} parent=70 // pred_fallthru
          _
      $region71: #{s_backbone_forward.4} parent=5 // pred_fallthru
        _
    $region6: #{s_backbone_forward.4} parent=1 // loop_footer
      %s15 = sadd.s32 1, %s11
    $region7: #{s_backbone_forward.4} parent=1 // loop_footer_branch
      %10 = sbr.rel target = $region3
    $region8: #{s_backbone_forward.4} parent=1 // loop_exit
      _

// kernel: s_backbone_forward.5
$region0: #{s_backbone_forward.5}
  #allocation0 [shape = 'u32[]', space=smem, size = 0x4, offset = 0x4, fixed_abs, tag = 'smem constant byte address 0x4 - core index']
  #allocation1 [shape = 'u32[144,128]{1,0:T(1,128)}', space=vmem, size = 0x12000, scoped, tag = 'internal scratch']
  %s0 = inlined_call_operand.vmem [shape: bf16[1024,512], index: 0, kind: input, shape index: {}]
  %s1 = inlined_call_operand.vmem [shape: bf16[4,1024], index: 1, kind: input, shape index: {}]
  %s2 = inlined_call_operand.vmem [shape: f32[4,1], index: 2, kind: input, shape index: {}]
  %s3 = inlined_call_operand.vmem [shape: f32[4,1], index: 3, kind: input, shape index: {}]
  %s4 = inlined_call_operand.vmem [shape: f32[4,1], index: 4, kind: input, shape index: {}]
  %s5 = inlined_call_operand.vmem [shape: f32[128,20], index: 5, kind: input, shape index: {}]
  %s6 = inlined_call_operand.vmem [shape: f32[1,20], index: 6, kind: input, shape index: {}]
  %s7 = inlined_call_operand.hbm [shape: f32[2,1,20], index: 7, kind: output, shape index: {}]
  %s8 = sld [smem:[#allocation0]]
  $region99: #{s_backbone_forward.5} parent=0
    _
  %s10 = ssub.s32 1, %s8
  %s11 = scalar_select 0, %s10, %s8
  $region1: #{s_backbone_forward.5} parent=0
    #allocation2 [shape = 'u8[1048576]{0}', space=vmem, size = 0x100000, scoped, tag = 'input window, operand 0']
    #allocation3 [shape = 'u8[1024]{0}', space=vmem, size = 0x400, scoped, tag = 'output window, operand 0']
    #allocation4 [shape = 's32[2]{0}', space=sflag, size = 0x8, scoped, tag = 'scoped memory for s_backbone_forward.5']
    %12 = vsyncpa [#allocation4], 0
    %s13 = scalar_lea.sflag [#allocation4], 1
    %14 = vsyncpa %s13, 0
    loop: start=0, step=1, limit=4
    $region2: #{s_backbone_forward.5} parent=1 // loop_pre_header
      _
    $region3: #{s_backbone_forward.5} parent=1 // loop_header
      %s16 = sphi 0, %s20
      %p17 = scmp.ge.s32.totalorder %s16, 4
      %s26 = sphi 0, %s28
      %s29 = sphi 0, %s26
      %s30 = sphi 0, %s29
      %s46 = sphi 0, %s30
      %s50 = sphi 0, %s50
      %s52 = sphi 0, %s50
      %s53 = sphi 0, %s52
      %s67 = sphi 0, %s53
      %s71 = sphi 0, %s71
      %s73 = sphi 0, %s71
      %s74 = sphi 0, %s73
      %s88 = sphi 0, %s74
      %s92 = sphi 0, %s92
      %s94 = sphi 0, %s92
      %s95 = sphi 0, %s94
      %s109 = sphi 0, %s95
      %s113 = sphi 0, %s113
      %s115 = sphi 0, %s113
      %s116 = sphi 0, %s115
      %s130 = sphi 0, %s116
      %s134 = sphi 0, %s134
      %s136 = sphi 0, %s134
      %s137 = sphi 0, %s136
      %s151 = sphi 0, %s137
      %s155 = sphi 0, %s155
      %s157 = sphi 0, %s155
      %s158 = sphi 0, %s157
      %s172 = sphi 0, %s158
      %s178 = sphi 0, %s180
      %s181 = sphi 0, %s178
      %s182 = sphi 0, %s181
      %s198 = sphi 0, %s182
    $region4: #{s_backbone_forward.5} parent=1 // loop_header_branch
      %19 = sbr.rel (%p17) target = $region8
    $region5: #{s_backbone_forward.5} parent=1 // loop_body
      %s21 = ssub.s32 %s16, 1
      %s22 = ssub.s32 %s16, 2
      %s23 = sadd.s32 %s16, 1
      %s24 = ssub.s32 %s16, %s23
      %p25 = scmp.eq.s32.totalorder %s24, 0
      %s27 = sadd.s32 %s26, 1
      %s28 = scalar_select %p25, %s26, %s27
      %p31 = pneg %p25
      %p32 = scmp.eq.s32.totalorder %s16, 1
      %p33 = por %p31, %p32
      %p34 = scmp.ne.s32.totalorder %s26, %s29
      %p35 = scmp.eq.s32.totalorder %s16, 0
      %p36 = por %p34, %p35
      %p37 = scmp.ne.s32.totalorder %s26, %s29
      %p38 = scmp.eq.s32.totalorder %s21, 1
      %p39 = por %p37, %p38
      %p40 = scmp.ne.s32.totalorder %s29, %s30
      %p41 = scmp.eq.s32.totalorder %s21, 0
      %p42 = por %p40, %p41
      %p43 = scmp.ne.s32.totalorder %s29, %s30
      %p44 = scmp.eq.s32.totalorder %s22, 1
      %p45 = por %p43, %p44
      %p47 = scmp.ne.s32.totalorder %s30, %s46
      %p48 = scmp.eq.s32.totalorder %s22, 0
      %p49 = por %p47, %p48
      %s51 = sadd.s32 %s50, 1
      %p54 = scmp.eq.s32.totalorder %s16, 1
      %p55 = scmp.ne.s32.totalorder %s50, %s52
      %p56 = scmp.eq.s32.totalorder %s16, 0
      %p57 = por %p55, %p56
      %p58 = scmp.ne.s32.totalorder %s50, %s52
      %p59 = scmp.eq.s32.totalorder %s21, 1
      %p60 = por %p58, %p59
      %p61 = scmp.ne.s32.totalorder %s52, %s53
      %p62 = scmp.eq.s32.totalorder %s21, 0
      %p63 = por %p61, %p62
      %p64 = scmp.ne.s32.totalorder %s52, %s53
      %p65 = scmp.eq.s32.totalorder %s22, 1
      %p66 = por %p64, %p65
      %p68 = scmp.ne.s32.totalorder %s53, %s67
      %p69 = scmp.eq.s32.totalorder %s22, 0
      %p70 = por %p68, %p69
      %s72 = sadd.s32 %s71, 1
      %p75 = scmp.eq.s32.totalorder %s16, 1
      %p76 = scmp.ne.s32.totalorder %s71, %s73
      %p77 = scmp.eq.s32.totalorder %s16, 0
      %p78 = por %p76, %p77
      %p79 = scmp.ne.s32.totalorder %s71, %s73
      %p80 = scmp.eq.s32.totalorder %s21, 1
      %p81 = por %p79, %p80
      %p82 = scmp.ne.s32.totalorder %s73, %s74
      %p83 = scmp.eq.s32.totalorder %s21, 0
      %p84 = por %p82, %p83
      %p85 = scmp.ne.s32.totalorder %s73, %s74
      %p86 = scmp.eq.s32.totalorder %s22, 1
      %p87 = por %p85, %p86
      %p89 = scmp.ne.s32.totalorder %s74, %s88
      %p90 = scmp.eq.s32.totalorder %s22, 0
      %p91 = por %p89, %p90
      %s93 = sadd.s32 %s92, 1
      %p96 = scmp.eq.s32.totalorder %s16, 1
      %p97 = scmp.ne.s32.totalorder %s92, %s94
      %p98 = scmp.eq.s32.totalorder %s16, 0
      %p99 = por %p97, %p98
      %p100 = scmp.ne.s32.totalorder %s92, %s94
      %p101 = scmp.eq.s32.totalorder %s21, 1
      %p102 = por %p100, %p101
      %p103 = scmp.ne.s32.totalorder %s94, %s95
      %p104 = scmp.eq.s32.totalorder %s21, 0
      %p105 = por %p103, %p104
      %p106 = scmp.ne.s32.totalorder %s94, %s95
      %p107 = scmp.eq.s32.totalorder %s22, 1
      %p108 = por %p106, %p107
      %p110 = scmp.ne.s32.totalorder %s95, %s109
      %p111 = scmp.eq.s32.totalorder %s22, 0
      %p112 = por %p110, %p111
      %s114 = sadd.s32 %s113, 1
      %p117 = scmp.eq.s32.totalorder %s16, 1
      %p118 = scmp.ne.s32.totalorder %s113, %s115
      %p119 = scmp.eq.s32.totalorder %s16, 0
      %p120 = por %p118, %p119
      %p121 = scmp.ne.s32.totalorder %s113, %s115
      %p122 = scmp.eq.s32.totalorder %s21, 1
      %p123 = por %p121, %p122
      %p124 = scmp.ne.s32.totalorder %s115, %s116
      %p125 = scmp.eq.s32.totalorder %s21, 0
      %p126 = por %p124, %p125
      %p127 = scmp.ne.s32.totalorder %s115, %s116
      %p128 = scmp.eq.s32.totalorder %s22, 1
      %p129 = por %p127, %p128
      %p131 = scmp.ne.s32.totalorder %s116, %s130
      %p132 = scmp.eq.s32.totalorder %s22, 0
      %p133 = por %p131, %p132
      %s135 = sadd.s32 %s134, 1
      %p138 = scmp.eq.s32.totalorder %s16, 1
      %p139 = scmp.ne.s32.totalorder %s134, %s136
      %p140 = scmp.eq.s32.totalorder %s16, 0
      %p141 = por %p139, %p140
      %p142 = scmp.ne.s32.totalorder %s134, %s136
      %p143 = scmp.eq.s32.totalorder %s21, 1
      %p144 = por %p142, %p143
      %p145 = scmp.ne.s32.totalorder %s136, %s137
      %p146 = scmp.eq.s32.totalorder %s21, 0
      %p147 = por %p145, %p146
      %p148 = scmp.ne.s32.totalorder %s136, %s137
      %p149 = scmp.eq.s32.totalorder %s22, 1
      %p150 = por %p148, %p149
      %p152 = scmp.ne.s32.totalorder %s137, %s151
      %p153 = scmp.eq.s32.totalorder %s22, 0
      %p154 = por %p152, %p153
      %s156 = sadd.s32 %s155, 1
      %p159 = scmp.eq.s32.totalorder %s16, 1
      %p160 = scmp.ne.s32.totalorder %s155, %s157
      %p161 = scmp.eq.s32.totalorder %s16, 0
      %p162 = por %p160, %p161
      %p163 = scmp.ne.s32.totalorder %s155, %s157
      %p164 = scmp.eq.s32.totalorder %s21, 1
      %p165 = por %p163, %p164
      %p166 = scmp.ne.s32.totalorder %s157, %s158
      %p167 = scmp.eq.s32.totalorder %s21, 0
      %p168 = por %p166, %p167
      %p169 = scmp.ne.s32.totalorder %s157, %s158
      %p170 = scmp.eq.s32.totalorder %s22, 1
      %p171 = por %p169, %p170
      %p173 = scmp.ne.s32.totalorder %s158, %s172
      %p174 = scmp.eq.s32.totalorder %s22, 0
      %p175 = por %p173, %p174
      %s176 = ssub.s32 %s16, %s23
      %p177 = scmp.eq.s32.totalorder %s176, 0
      %s179 = sadd.s32 %s178, 1
      %s180 = scalar_select %p177, %s178, %s179
      %p183 = pneg %p177
      %p184 = scmp.eq.s32.totalorder %s16, 1
      %p185 = por %p183, %p184
      %p186 = scmp.ne.s32.totalorder %s178, %s181
      %p187 = scmp.eq.s32.totalorder %s16, 0
      %p188 = por %p186, %p187
      %p189 = scmp.ne.s32.totalorder %s178, %s181
      %p190 = scmp.eq.s32.totalorder %s21, 1
      %p191 = por %p189, %p190
      %p192 = scmp.ne.s32.totalorder %s181, %s182
      %p193 = scmp.eq.s32.totalorder %s21, 0
      %p194 = por %p192, %p193
      %p195 = scmp.ne.s32.totalorder %s181, %s182
      %p196 = scmp.eq.s32.totalorder %s22, 1
      %p197 = por %p195, %p196
      %p199 = scmp.ne.s32.totalorder %s182, %s198
      %p200 = scmp.eq.s32.totalorder %s22, 0
      %p201 = por %p199, %p200
      %p202 = scmp.le.s32.totalorder 1, %s16
      %p203 = scmp.lt.s32.totalorder %s16, 3
      %p204 = pnand %p202, %p203
      %p205 = pneg %p204
      // Predicated region
      $region9: #{s_backbone_forward.5} parent=5 // pred_check
        _
      $region10: #{s_backbone_forward.5} parent=5 // pred_check_branch
        %207 = sbr.rel (%p204) target = $region12
      $region11: #{s_backbone_forward.5} parent=5 // pred_region
        %s208 = ssub.s32 %s16, 1
        // Predicated region
        $region13: #{s_backbone_forward.5} parent=11 // pred_check
          %p209 = pneg %p63
        $region14: #{s_backbone_forward.5} parent=11 // pred_check_branch
          %211 = sbr.rel (%p209) target = $region16
        $region15: #{s_backbone_forward.5} parent=11 // pred_region
          _
        $region16: #{s_backbone_forward.5} parent=11 // pred_fallthru
          _
        // Predicated region
        $region17: #{s_backbone_forward.5} parent=11 // pred_check
          %p212 = pneg %p84
        $region18: #{s_backbone_forward.5} parent=11 // pred_check_branch
          %214 = sbr.rel (%p212) target = $region20
        $region19: #{s_backbone_forward.5} parent=11 // pred_region
          _
        $region20: #{s_backbone_forward.5} parent=11 // pred_fallthru
          _
        // Predicated region
        $region21: #{s_backbone_forward.5} parent=11 // pred_check
          %p215 = pneg %p105
        $region22: #{s_backbone_forward.5} parent=11 // pred_check_branch
          %217 = sbr.rel (%p215) target = $region24
        $region23: #{s_backbone_forward.5} parent=11 // pred_region
          _
        $region24: #{s_backbone_forward.5} parent=11 // pred_fallthru
          _
        // Predicated region
        $region25: #{s_backbone_forward.5} parent=11 // pred_check
          %p218 = pneg %p126
        $region26: #{s_backbone_forward.5} parent=11 // pred_check_branch
          %220 = sbr.rel (%p218) target = $region28
        $region27: #{s_backbone_forward.5} parent=11 // pred_region
          _
        $region28: #{s_backbone_forward.5} parent=11 // pred_fallthru
          _
        // Predicated region
        $region29: #{s_backbone_forward.5} parent=11 // pred_check
          %p221 = pneg %p147
        $region30: #{s_backbone_forward.5} parent=11 // pred_check_branch
          %223 = sbr.rel (%p221) target = $region32
        $region31: #{s_backbone_forward.5} parent=11 // pred_region
          _
        $region32: #{s_backbone_forward.5} parent=11 // pred_fallthru
          _
        // Predicated region
        $region33: #{s_backbone_forward.5} parent=11 // pred_check
          %p224 = pneg %p168
        $region34: #{s_backbone_forward.5} parent=11 // pred_check_branch
          %226 = sbr.rel (%p224) target = $region36
        $region35: #{s_backbone_forward.5} parent=11 // pred_region
          _
        $region36: #{s_backbone_forward.5} parent=11 // pred_fallthru
          _
      $region12: #{s_backbone_forward.5} parent=5 // pred_fallthru
        _
      %p227 = scmp.lt.s32.totalorder %s16, 2
      // Predicated region
      $region37: #{s_backbone_forward.5} parent=5 // pred_check
        %p228 = pneg %p227
      $region38: #{s_backbone_forward.5} parent=5 // pred_check_branch
        %230 = sbr.rel (%p228) target = $region40
      $region39: #{s_backbone_forward.5} parent=5 // pred_region
        // Predicated region
        $region41: #{s_backbone_forward.5} parent=39 // pred_check
          %p231 = pneg %p36
        $region42: #{s_backbone_forward.5} parent=39 // pred_check_branch
          %233 = sbr.rel (%p231) target = $region44
        $region43: #{s_backbone_forward.5} parent=39 // pred_region
          %s234 = sand.u32 %s26, 1
          %s235 = sand.u32 %s26, 1
          %s236 = smul.addr %s235, 1024
          %s237 = scalar_lea.vmem [#allocation2], %s236
          %s238 = smul.u32 2, %s16
          %s239 = smul.addr %s238, 4
          %s240 = scalar_lea.vmem %s0, %s239
          // Predicated region
          $region45: #{s_backbone_forward.5} parent=43 // pred_check
            _
          $region46: #{s_backbone_forward.5} parent=43 // pred_check_branch
            %242 = sbr.rel (0) target = $region48
          $region47: #{s_backbone_forward.5} parent=43 // pred_region
            // Predicated region
            $region49: #{s_backbone_forward.5} parent=47 // pred_check
              _
            $region50: #{s_backbone_forward.5} parent=47 // pred_check_branch
              %244 = sbr.rel (0) target = $region52
            $region51: #{s_backbone_forward.5} parent=47 // pred_region
              // Predicated region
              $region64: #{s_backbone_forward.5} parent=51 // pred_check
                _
              $region65: #{s_backbone_forward.5} parent=51 // pred_check_branch
                %514 = sbr.rel (0) target = $region67
              $region66: #{s_backbone_forward.5} parent=51 // pred_region
                loop: start=0, step=1, limit=1
                $region68: #{s_backbone_forward.5} parent=66 // loop_pre_header
                  _
                $region69: #{s_backbone_forward.5} parent=66 // loop_header
                  %s516 = sphi 0, %s520
                  %p517 = scmp.ge.s32.totalorder %s516, 1
                  %s521 = sphi %s240, %s240
                  %s522 = sphi %s237, %s237
                $region70: #{s_backbone_forward.5} parent=66 // loop_header_branch
                  %519 = sbr.rel (%p517) target = $region74
                $region71: #{s_backbone_forward.5} parent=66 // loop_body
                  %v523 = vld [vmem:[%s521] sm:$0xff]
                  %524 = vst [vmem:[%s522] sm:$0xff] %v523
                  %v525 = vld [vmem:[%s521 + $0x10] sm:$0xff]
                  %526 = vst [vmem:[%s522 + $0x8] sm:$0xff] %v525
                  %v527 = vld [vmem:[%s521 + $0x20] sm:$0xff]
                  %528 = vst [vmem:[%s522 + $0x10] sm:$0xff] %v527
                  %v529 = vld [vmem:[%s521 + $0x30] sm:$0xff]
                  %530 = vst [vmem:[%s522 + $0x18] sm:$0xff] %v529
                  %v531 = vld [vmem:[%s521 + $0x40] sm:$0xff]
                  %532 = vst [vmem:[%s522 + $0x20] sm:$0xff] %v531
                  %v533 = vld [vmem:[%s521 + $0x50] sm:$0xff]
                  %534 = vst [vmem:[%s522 + $0x28] sm:$0xff] %v533
                  %v535 = vld [vmem:[%s521 + $0x60] sm:$0xff]
                  %536 = vst [vmem:[%s522 + $0x30] sm:$0xff] %v535
                  %v537 = vld [vmem:[%s521 + $0x70] sm:$0xff]
                  %538 = vst [vmem:[%s522 + $0x38] sm:$0xff] %v537
                  %v539 = vld [vmem:[%s521 + $0x80] sm:$0xff]
                  %540 = vst [vmem:[%s522 + $0x40] sm:$0xff] %v539
                  %v541 = vld [vmem:[%s521 + $0x90] sm:$0xff]
                  %542 = vst [vmem:[%s522 + $0x48] sm:$0xff] %v541
                  %v543 = vld [vmem:[%s521 + $0xa0] sm:$0xff]
                  %544 = vst [vmem:[%s522 + $0x50] sm:$0xff] %v543
                  %v545 = vld [vmem:[%s521 + $0xb0] sm:$0xff]
                  %546 = vst [vmem:[%s522 + $0x58] sm:$0xff] %v545
                  %v547 = vld [vmem:[%s521 + $0xc0] sm:$0xff]
                  %548 = vst [vmem:[%s522 + $0x60] sm:$0xff] %v547
                  %v549 = vld [vmem:[%s521 + $0xd0] sm:$0xff]
                  %550 = vst [vmem:[%s522 + $0x68] sm:$0xff] %v549
                  %v551 = vld [vmem:[%s521 + $0xe0] sm:$0xff]
                  %552 = vst [vmem:[%s522 + $0x70] sm:$0xff] %v551
                  %v553 = vld [vmem:[%s521 + $0xf0] sm:$0xff]
                  %554 = vst [vmem:[%s522 + $0x78] sm:$0xff] %v553
                  %v555 = vld [vmem:[%s521 + $0x100] sm:$0xff]
                  %556 = vst [vmem:[%s522 + $0x80] sm:$0xff] %v555
                  %v557 = vld [vmem:[%s521 + $0x110] sm:$0xff]
                  %558 = vst [vmem:[%s522 + $0x88] sm:$0xff] %v557
                  %v559 = vld [vmem:[%s521 + $0x120] sm:$0xff]
                  %560 = vst [vmem:[%s522 + $0x90] sm:$0xff] %v559
                  %v561 = vld [vmem:[%s521 + $0x130] sm:$0xff]
                  %562 = vst [vmem:[%s522 + $0x98] sm:$0xff] %v561
                  %v563 = vld [vmem:[%s521 + $0x140] sm:$0xff]
                  %564 = vst [vmem:[%s522 + $0xa0] sm:$0xff] %v563
                  %v565 = vld [vmem:[%s521 + $0x150] sm:$0xff]
                  %566 = vst [vmem:[%s522 + $0xa8] sm:$0xff] %v565
                  %v567 = vld [vmem:[%s521 + $0x160] sm:$0xff]
                  %568 = vst [vmem:[%s522 + $0xb0] sm:$0xff] %v567
                  %v569 = vld [vmem:[%s521 + $0x170] sm:$0xff]
                  %570 = vst [vmem:[%s522 + $0xb8] sm:$0xff] %v569
                  %v571 = vld [vmem:[%s521 + $0x180] sm:$0xff]
                  %572 = vst [vmem:[%s522 + $0xc0] sm:$0xff] %v571
                  %v573 = vld [vmem:[%s521 + $0x190] sm:$0xff]
                  %574 = vst [vmem:[%s522 + $0xc8] sm:$0xff] %v573
                  %v575 = vld [vmem:[%s521 + $0x1a0] sm:$0xff]
                  %576 = vst [vmem:[%s522 + $0xd0] sm:$0xff] %v575
                  %v577 = vld [vmem:[%s521 + $0x1b0] sm:$0xff]
                  %578 = vst [vmem:[%s522 + $0xd8] sm:$0xff] %v577
                  %v579 = vld [vmem:[%s521 + $0x1c0] sm:$0xff]
                  %580 = vst [vmem:[%s522 + $0xe0] sm:$0xff] %v579
                  %v581 = vld [vmem:[%s521 + $0x1d0] sm:$0xff]
                  %582 = vst [vmem:[%s522 + $0xe8] sm:$0xff] %v581
                  %v583 = vld [vmem:[%s521 + $0x1e0] sm:$0xff]
                  %584 = vst [vmem:[%s522 + $0xf0] sm:$0xff] %v583
                  %v585 = vld [vmem:[%s521 + $0x1f0] sm:$0xff]
                  %586 = vst [vmem:[%s522 + $0xf8] sm:$0xff] %v585
                  %v587 = vld [vmem:[%s521 + $0x200] sm:$0xff]
                  %588 = vst [vmem:[%s522 + $0x100] sm:$0xff] %v587
                  %v589 = vld [vmem:[%s521 + $0x210] sm:$0xff]
                  %590 = vst [vmem:[%s522 + $0x108] sm:$0xff] %v589
                  %v591 = vld [vmem:[%s521 + $0x220] sm:$0xff]
                  %592 = vst [vmem:[%s522 + $0x110] sm:$0xff] %v591
                  %v593 = vld [vmem:[%s521 + $0x230] sm:$0xff]
                  %594 = vst [vmem:[%s522 + $0x118] sm:$0xff] %v593
                  %v595 = vld [vmem:[%s521 + $0x240] sm:$0xff]
                  %596 = vst [vmem:[%s522 + $0x120] sm:$0xff] %v595
                  %v597 = vld [vmem:[%s521 + $0x250] sm:$0xff]
                  %598 = vst [vmem:[%s522 + $0x128] sm:$0xff] %v597
                  %v599 = vld [vmem:[%s521 + $0x260] sm:$0xff]
                  %600 = vst [vmem:[%s522 + $0x130] sm:$0xff] %v599
                  %v601 = vld [vmem:[%s521 + $0x270] sm:$0xff]
                  %602 = vst [vmem:[%s522 + $0x138] sm:$0xff] %v601
                  %v603 = vld [vmem:[%s521 + $0x280] sm:$0xff]
                  %604 = vst [vmem:[%s522 + $0x140] sm:$0xff] %v603
                  %v605 = vld [vmem:[%s521 + $0x290] sm:$0xff]
                  %606 = vst [vmem:[%s522 + $0x148] sm:$0xff] %v605
                  %v607 = vld [vmem:[%s521 + $0x2a0] sm:$0xff]
                  %608 = vst [vmem:[%s522 + $0x150] sm:$0xff] %v607
                  %v609 = vld [vmem:[%s521 + $0x2b0] sm:$0xff]
                  %610 = vst [vmem:[%s522 + $0x158] sm:$0xff] %v609
                  %v611 = vld [vmem:[%s521 + $0x2c0] sm:$0xff]
                  %612 = vst [vmem:[%s522 + $0x160] sm:$0xff] %v611
                  %v613 = vld [vmem:[%s521 + $0x2d0] sm:$0xff]
                  %614 = vst [vmem:[%s522 + $0x168] sm:$0xff] %v613
                  %v615 = vld [vmem:[%s521 + $0x2e0] sm:$0xff]
                  %616 = vst [vmem:[%s522 + $0x170] sm:$0xff] %v615
                  %v617 = vld [vmem:[%s521 + $0x2f0] sm:$0xff]
                  %618 = vst [vmem:[%s522 + $0x178] sm:$0xff] %v617
                  %v619 = vld [vmem:[%s521 + $0x300] sm:$0xff]
                  %620 = vst [vmem:[%s522 + $0x180] sm:$0xff] %v619
                  %v621 = vld [vmem:[%s521 + $0x310] sm:$0xff]
                  %622 = vst [vmem:[%s522 + $0x188] sm:$0xff] %v621
                  %v623 = vld [vmem:[%s521 + $0x320] sm:$0xff]
                  %624 = vst [vmem:[%s522 + $0x190] sm:$0xff] %v623
                  %v625 = vld [vmem:[%s521 + $0x330] sm:$0xff]
                  %626 = vst [vmem:[%s522 + $0x198] sm:$0xff] %v625
                  %v627 = vld [vmem:[%s521 + $0x340] sm:$0xff]
                  %628 = vst [vmem:[%s522 + $0x1a0] sm:$0xff] %v627
                  %v629 = vld [vmem:[%s521 + $0x350] sm:$0xff]
                  %630 = vst [vmem:[%s522 + $0x1a8] sm:$0xff] %v629
                  %v631 = vld [vmem:[%s521 + $0x360] sm:$0xff]
                  %632 = vst [vmem:[%s522 + $0x1b0] sm:$0xff] %v631
                  %v633 = vld [vmem:[%s521 + $0x370] sm:$0xff]
                  %634 = vst [vmem:[%s522 + $0x1b8] sm:$0xff] %v633
                  %v635 = vld [vmem:[%s521 + $0x380] sm:$0xff]
                  %636 = vst [vmem:[%s522 + $0x1c0] sm:$0xff] %v635
                  %v637 = vld [vmem:[%s521 + $0x390] sm:$0xff]
                  %638 = vst [vmem:[%s522 + $0x1c8] sm:$0xff] %v637
                  %v639 = vld [vmem:[%s521 + $0x3a0] sm:$0xff]
                  %640 = vst [vmem:[%s522 + $0x1d0] sm:$0xff] %v639
                  %v641 = vld [vmem:[%s521 + $0x3b0] sm:$0xff]
                  %642 = vst [vmem:[%s522 + $0x1d8] sm:$0xff] %v641
                  %v643 = vld [vmem:[%s521 + $0x3c0] sm:$0xff]
                  %644 = vst [vmem:[%s522 + $0x1e0] sm:$0xff] %v643
                  %v645 = vld [vmem:[%s521 + $0x3d0] sm:$0xff]
                  %646 = vst [vmem:[%s522 + $0x1e8] sm:$0xff] %v645
                  %v647 = vld [vmem:[%s521 + $0x3e0] sm:$0xff]
                  %648 = vst [vmem:[%s522 + $0x1f0] sm:$0xff] %v647
                  %v649 = vld [vmem:[%s521 + $0x3f0] sm:$0xff]
                  %650 = vst [vmem:[%s522 + $0x1f8] sm:$0xff] %v649
                  %v651 = vld [vmem:[%s521 + $0x400] sm:$0xff]
                  %652 = vst [vmem:[%s522 + $0x200] sm:$0xff] %v651
                  %v653 = vld [vmem:[%s521 + $0x410] sm:$0xff]
                  %654 = vst [vmem:[%s522 + $0x208] sm:$0xff] %v653
                  %v655 = vld [vmem:[%s521 + $0x420] sm:$0xff]
                  %656 = vst [vmem:[%s522 + $0x210] sm:$0xff] %v655
                  %v657 = vld [vmem:[%s521 + $0x430] sm:$0xff]
                  %658 = vst [vmem:[%s522 + $0x218] sm:$0xff] %v657
                  %v659 = vld [vmem:[%s521 + $0x440] sm:$0xff]
                  %660 = vst [vmem:[%s522 + $0x220] sm:$0xff] %v659
                  %v661 = vld [vmem:[%s521 + $0x450] sm:$0xff]
                  %662 = vst [vmem:[%s522 + $0x228] sm:$0xff] %v661
                  %v663 = vld [vmem:[%s521 + $0x460] sm:$0xff]
                  %664 = vst [vmem:[%s522 + $0x230] sm:$0xff] %v663
                  %v665 = vld [vmem:[%s521 + $0x470] sm:$0xff]
                  %666 = vst [vmem:[%s522 + $0x238] sm:$0xff] %v665
                  %v667 = vld [vmem:[%s521 + $0x480] sm:$0xff]
                  %668 = vst [vmem:[%s522 + $0x240] sm:$0xff] %v667
                  %v669 = vld [vmem:[%s521 + $0x490] sm:$0xff]
                  %670 = vst [vmem:[%s522 + $0x248] sm:$0xff] %v669
                  %v671 = vld [vmem:[%s521 + $0x4a0] sm:$0xff]
                  %672 = vst [vmem:[%s522 + $0x250] sm:$0xff] %v671
                  %v673 = vld [vmem:[%s521 + $0x4b0] sm:$0xff]
                  %674 = vst [vmem:[%s522 + $0x258] sm:$0xff] %v673
                  %v675 = vld [vmem:[%s521 + $0x4c0] sm:$0xff]
                  %676 = vst [vmem:[%s522 + $0x260] sm:$0xff] %v675
                  %v677 = vld [vmem:[%s521 + $0x4d0] sm:$0xff]
                  %678 = vst [vmem:[%s522 + $0x268] sm:$0xff] %v677
                  %v679 = vld [vmem:[%s521 + $0x4e0] sm:$0xff]
                  %680 = vst [vmem:[%s522 + $0x270] sm:$0xff] %v679
                  %v681 = vld [vmem:[%s521 + $0x4f0] sm:$0xff]
                  %682 = vst [vmem:[%s522 + $0x278] sm:$0xff] %v681
                  %v683 = vld [vmem:[%s521 + $0x500] sm:$0xff]
                  %684 = vst [vmem:[%s522 + $0x280] sm:$0xff] %v683
                  %v685 = vld [vmem:[%s521 + $0x510] sm:$0xff]
                  %686 = vst [vmem:[%s522 + $0x288] sm:$0xff] %v685
                  %v687 = vld [vmem:[%s521 + $0x520] sm:$0xff]
                  %688 = vst [vmem:[%s522 + $0x290] sm:$0xff] %v687
                  %v689 = vld [vmem:[%s521 + $0x530] sm:$0xff]
                  %690 = vst [vmem:[%s522 + $0x298] sm:$0xff] %v689
                  %v691 = vld [vmem:[%s521 + $0x540] sm:$0xff]
                  %692 = vst [vmem:[%s522 + $0x2a0] sm:$0xff] %v691
                  %v693 = vld [vmem:[%s521 + $0x550] sm:$0xff]
                  %694 = vst [vmem:[%s522 + $0x2a8] sm:$0xff] %v693
                  %v695 = vld [vmem:[%s521 + $0x560] sm:$0xff]
                  %696 = vst [vmem:[%s522 + $0x2b0] sm:$0xff] %v695
                  %v697 = vld [vmem:[%s521 + $0x570] sm:$0xff]
                  %698 = vst [vmem:[%s522 + $0x2b8] sm:$0xff] %v697
                  %v699 = vld [vmem:[%s521 + $0x580] sm:$0xff]
                  %700 = vst [vmem:[%s522 + $0x2c0] sm:$0xff] %v699
                  %v701 = vld [vmem:[%s521 + $0x590] sm:$0xff]
                  %702 = vst [vmem:[%s522 + $0x2c8] sm:$0xff] %v701
                  %v703 = vld [vmem:[%s521 + $0x5a0] sm:$0xff]
                  %704 = vst [vmem:[%s522 + $0x2d0] sm:$0xff] %v703
                  %v705 = vld [vmem:[%s521 + $0x5b0] sm:$0xff]
                  %706 = vst [vmem:[%s522 + $0x2d8] sm:$0xff] %v705
                  %v707 = vld [vmem:[%s521 + $0x5c0] sm:$0xff]
                  %708 = vst [vmem:[%s522 + $0x2e0] sm:$0xff] %v707
                  %v709 = vld [vmem:[%s521 + $0x5d0] sm:$0xff]
                  %710 = vst [vmem:[%s522 + $0x2e8] sm:$0xff] %v709
                  %v711 = vld [vmem:[%s521 + $0x5e0] sm:$0xff]
                  %712 = vst [vmem:[%s522 + $0x2f0] sm:$0xff] %v711
                  %v713 = vld [vmem:[%s521 + $0x5f0] sm:$0xff]
                  %714 = vst [vmem:[%s522 + $0x2f8] sm:$0xff] %v713
                  %v715 = vld [vmem:[%s521 + $0x600] sm:$0xff]
                  %716 = vst [vmem:[%s522 + $0x300] sm:$0xff] %v715
                  %v717 = vld [vmem:[%s521 + $0x610] sm:$0xff]
                  %718 = vst [vmem:[%s522 + $0x308] sm:$0xff] %v717
                  %v719 = vld [vmem:[%s521 + $0x620] sm:$0xff]
                  %720 = vst [vmem:[%s522 + $0x310] sm:$0xff] %v719
                  %v721 = vld [vmem:[%s521 + $0x630] sm:$0xff]
                  %722 = vst [vmem:[%s522 + $0x318] sm:$0xff] %v721
                  %v723 = vld [vmem:[%s521 + $0x640] sm:$0xff]
                  %724 = vst [vmem:[%s522 + $0x320] sm:$0xff] %v723
                  %v725 = vld [vmem:[%s521 + $0x650] sm:$0xff]
                  %726 = vst [vmem:[%s522 + $0x328] sm:$0xff] %v725
                  %v727 = vld [vmem:[%s521 + $0x660] sm:$0xff]
                  %728 = vst [vmem:[%s522 + $0x330] sm:$0xff] %v727
                  %v729 = vld [vmem:[%s521 + $0x670] sm:$0xff]
                  %730 = vst [vmem:[%s522 + $0x338] sm:$0xff] %v729
                  %v731 = vld [vmem:[%s521 + $0x680] sm:$0xff]
                  %732 = vst [vmem:[%s522 + $0x340] sm:$0xff] %v731
                  %v733 = vld [vmem:[%s521 + $0x690] sm:$0xff]
                  %734 = vst [vmem:[%s522 + $0x348] sm:$0xff] %v733
                  %v735 = vld [vmem:[%s521 + $0x6a0] sm:$0xff]
                  %736 = vst [vmem:[%s522 + $0x350] sm:$0xff] %v735
                  %v737 = vld [vmem:[%s521 + $0x6b0] sm:$0xff]
                  %738 = vst [vmem:[%s522 + $0x358] sm:$0xff] %v737
                  %v739 = vld [vmem:[%s521 + $0x6c0] sm:$0xff]
                  %740 = vst [vmem:[%s522 + $0x360] sm:$0xff] %v739
                  %v741 = vld [vmem:[%s521 + $0x6d0] sm:$0xff]
                  %742 = vst [vmem:[%s522 + $0x368] sm:$0xff] %v741
                  %v743 = vld [vmem:[%s521 + $0x6e0] sm:$0xff]
                  %744 = vst [vmem:[%s522 + $0x370] sm:$0xff] %v743
                  %v745 = vld [vmem:[%s521 + $0x6f0] sm:$0xff]
                  %746 = vst [vmem:[%s522 + $0x378] sm:$0xff] %v745
                  %v747 = vld [vmem:[%s521 + $0x700] sm:$0xff]
                  %748 = vst [vmem:[%s522 + $0x380] sm:$0xff] %v747
                  %v749 = vld [vmem:[%s521 + $0x710] sm:$0xff]
                  %750 = vst [vmem:[%s522 + $0x388] sm:$0xff] %v749
                  %v751 = vld [vmem:[%s521 + $0x720] sm:$0xff]
                  %752 = vst [vmem:[%s522 + $0x390] sm:$0xff] %v751
                  %v753 = vld [vmem:[%s521 + $0x730] sm:$0xff]
                  %754 = vst [vmem:[%s522 + $0x398] sm:$0xff] %v753
                  %v755 = vld [vmem:[%s521 + $0x740] sm:$0xff]
                  %756 = vst [vmem:[%s522 + $0x3a0] sm:$0xff] %v755
                  %v757 = vld [vmem:[%s521 + $0x750] sm:$0xff]
                  %758 = vst [vmem:[%s522 + $0x3a8] sm:$0xff] %v757
                  %v759 = vld [vmem:[%s521 + $0x760] sm:$0xff]
                  %760 = vst [vmem:[%s522 + $0x3b0] sm:$0xff] %v759
                  %v761 = vld [vmem:[%s521 + $0x770] sm:$0xff]
                  %762 = vst [vmem:[%s522 + $0x3b8] sm:$0xff] %v761
                  %v763 = vld [vmem:[%s521 + $0x780] sm:$0xff]
                  %764 = vst [vmem:[%s522 + $0x3c0] sm:$0xff] %v763
                  %v765 = vld [vmem:[%s521 + $0x790] sm:$0xff]
                  %766 = vst [vmem:[%s522 + $0x3c8] sm:$0xff] %v765
                  %v767 = vld [vmem:[%s521 + $0x7a0] sm:$0xff]
                  %768 = vst [vmem:[%s522 + $0x3d0] sm:$0xff] %v767
                  %v769 = vld [vmem:[%s521 + $0x7b0] sm:$0xff]
                  %770 = vst [vmem:[%s522 + $0x3d8] sm:$0xff] %v769
                  %v771 = vld [vmem:[%s521 + $0x7c0] sm:$0xff]
                  %772 = vst [vmem:[%s522 + $0x3e0] sm:$0xff] %v771
                  %v773 = vld [vmem:[%s521 + $0x7d0] sm:$0xff]
                  %774 = vst [vmem:[%s522 + $0x3e8] sm:$0xff] %v773
                  %v775 = vld [vmem:[%s521 + $0x7e0] sm:$0xff]
                  %776 = vst [vmem:[%s522 + $0x3f0] sm:$0xff] %v775
                  %v777 = vld [vmem:[%s521 + $0x7f0] sm:$0xff]
                  %778 = vst [vmem:[%s522 + $0x3f8] sm:$0xff] %v777
                $region72: #{s_backbone_forward.5} parent=66 // loop_footer
                  %s520 = sadd.s32 1, %s516
                $region73: #{s_backbone_forward.5} parent=66 // loop_footer_branch
                  %515 = sbr.rel target = $region69
                $region74: #{s_backbone_forward.5} parent=66 // loop_exit
                  _
              $region67: #{s_backbone_forward.5} parent=51 // pred_fallthru
                _
              // Predicated region
              $region75: #{s_backbone_forward.5} parent=51 // pred_check
                _
              $region76: #{s_backbone_forward.5} parent=51 // pred_check_branch
                %780 = sbr.rel target = $region78
              $region77: #{s_backbone_forward.5} parent=51 // pred_region
                _
              $region78: #{s_backbone_forward.5} parent=51 // pred_fallthru
                _
            $region52: #{s_backbone_forward.5} parent=47 // pred_fallthru
              _
            // Predicated region
            $region53: #{s_backbone_forward.5} parent=47 // pred_check
              _
            $region54: #{s_backbone_forward.5} parent=47 // pred_check_branch
              %246 = sbr.rel target = $region56
            $region55: #{s_backbone_forward.5} parent=47 // pred_region
              %s248 = ssub.s32 256, 1
              loop: start=0, step=1, limit=1
              $region57: #{s_backbone_forward.5} parent=55 // loop_pre_header
                _
              $region58: #{s_backbone_forward.5} parent=55 // loop_header
                %s250 = sphi 0, %s254
                %p251 = scmp.ge.s32.totalorder %s250, 1
                %s255 = sphi %s240, %s240
                %s256 = sphi %s237, %s237
              $region59: #{s_backbone_forward.5} parent=55 // loop_header_branch
                %253 = sbr.rel (%p251) target = $region63
              $region60: #{s_backbone_forward.5} parent=55 // loop_body
                %v257 = vld [vmem:[%s255] sm:%s248]
                %258 = vst [vmem:[%s256] sm:%s248] %v257
                %v259 = vld [vmem:[%s255 + $0x10] sm:%s248]
                %260 = vst [vmem:[%s256 + $0x8] sm:%s248] %v259
                %v261 = vld [vmem:[%s255 + $0x20] sm:%s248]
                %262 = vst [vmem:[%s256 + $0x10] sm:%s248] %v261
                %v263 = vld [vmem:[%s255 + $0x30] sm:%s248]
                %264 = vst [vmem:[%s256 + $0x18] sm:%s248] %v263
                %v265 = vld [vmem:[%s255 + $0x40] sm:%s248]
                %266 = vst [vmem:[%s256 + $0x20] sm:%s248] %v265
                %v267 = vld [vmem:[%s255 + $0x50] sm:%s248]
                %268 = vst [vmem:[%s256 + $0x28] sm:%s248] %v267
                %v269 = vld [vmem:[%s255 + $0x60] sm:%s248]
                %270 = vst [vmem:[%s256 + $0x30] sm:%s248] %v269
                %v271 = vld [vmem:[%s255 + $0x70] sm:%s248]
                %272 = vst [vmem:[%s256 + $0x38] sm:%s248] %v271
                %v273 = vld [vmem:[%s255 + $0x80] sm:%s248]
                %274 = vst [vmem:[%s256 + $0x40] sm:%s248] %v273
                %v275 = vld [vmem:[%s255 + $0x90] sm:%s248]
                %276 = vst [vmem:[%s256 + $0x48] sm:%s248] %v275
                %v277 = vld [vmem:[%s255 + $0xa0] sm:%s248]
                %278 = vst [vmem:[%s256 + $0x50] sm:%s248] %v277
                %v279 = vld [vmem:[%s255 + $0xb0] sm:%s248]
                %280 = vst [vmem:[%s256 + $0x58] sm:%s248] %v279
                %v281 = vld [vmem:[%s255 + $0xc0] sm:%s248]
                %282 = vst [vmem:[%s256 + $0x60] sm:%s248] %v281
                %v283 = vld [vmem:[%s255 + $0xd0] sm:%s248]
                %284 = vst [vmem:[%s256 + $0x68] sm:%s248] %v283
                %v285 = vld [vmem:[%s255 + $0xe0] sm:%s248]
                %286 = vst [vmem:[%s256 + $0x70] sm:%s248] %v285
                %v287 = vld [vmem:[%s255 + $0xf0] sm:%s248]
                %288 = vst [vmem:[%s256 + $0x78] sm:%s248] %v287
                %v289 = vld [vmem:[%s255 + $0x100] sm:%s248]
                %290 = vst [vmem:[%s256 + $0x80] sm:%s248] %v289
                %v291 = vld [vmem:[%s255 + $0x110] sm:%s248]
                %292 = vst [vmem:[%s256 + $0x88] sm:%s248] %v291
                %v293 = vld [vmem:[%s255 + $0x120] sm:%s248]
                %294 = vst [vmem:[%s256 + $0x90] sm:%s248] %v293
                %v295 = vld [vmem:[%s255 + $0x130] sm:%s248]
                %296 = vst [vmem:[%s256 + $0x98] sm:%s248] %v295
                %v297 = vld [vmem:[%s255 + $0x140] sm:%s248]
                %298 = vst [vmem:[%s256 + $0xa0] sm:%s248] %v297
                %v299 = vld [vmem:[%s255 + $0x150] sm:%s248]
                %300 = vst [vmem:[%s256 + $0xa8] sm:%s248] %v299
                %v301 = vld [vmem:[%s255 + $0x160] sm:%s248]
                %302 = vst [vmem:[%s256 + $0xb0] sm:%s248] %v301
                %v303 = vld [vmem:[%s255 + $0x170] sm:%s248]
                %304 = vst [vmem:[%s256 + $0xb8] sm:%s248] %v303
                %v305 = vld [vmem:[%s255 + $0x180] sm:%s248]
                %306 = vst [vmem:[%s256 + $0xc0] sm:%s248] %v305
                %v307 = vld [vmem:[%s255 + $0x190] sm:%s248]
                %308 = vst [vmem:[%s256 + $0xc8] sm:%s248] %v307
                %v309 = vld [vmem:[%s255 + $0x1a0] sm:%s248]
                %310 = vst [vmem:[%s256 + $0xd0] sm:%s248] %v309
                %v311 = vld [vmem:[%s255 + $0x1b0] sm:%s248]
                %312 = vst [vmem:[%s256 + $0xd8] sm:%s248] %v311
                %v313 = vld [vmem:[%s255 + $0x1c0] sm:%s248]
                %314 = vst [vmem:[%s256 + $0xe0] sm:%s248] %v313
                %v315 = vld [vmem:[%s255 + $0x1d0] sm:%s248]
                %316 = vst [vmem:[%s256 + $0xe8] sm:%s248] %v315
                %v317 = vld [vmem:[%s255 + $0x1e0] sm:%s248]
                %318 = vst [vmem:[%s256 + $0xf0] sm:%s248] %v317
                %v319 = vld [vmem:[%s255 + $0x1f0] sm:%s248]
                %320 = vst [vmem:[%s256 + $0xf8] sm:%s248] %v319
                %v321 = vld [vmem:[%s255 + $0x200] sm:%s248]
                %322 = vst [vmem:[%s256 + $0x100] sm:%s248] %v321
                %v323 = vld [vmem:[%s255 + $0x210] sm:%s248]
                %324 = vst [vmem:[%s256 + $0x108] sm:%s248] %v323
                %v325 = vld [vmem:[%s255 + $0x220] sm:%s248]
                %326 = vst [vmem:[%s256 + $0x110] sm:%s248] %v325
                %v327 = vld [vmem:[%s255 + $0x230] sm:%s248]
                %328 = vst [vmem:[%s256 + $0x118] sm:%s248] %v327
                %v329 = vld [vmem:[%s255 + $0x240] sm:%s248]
                %330 = vst [vmem:[%s256 + $0x120] sm:%s248] %v329
                %v331 = vld [vmem:[%s255 + $0x250] sm:%s248]
                %332 = vst [vmem:[%s256 + $0x128] sm:%s248] %v331
                %v333 = vld [vmem:[%s255 + $0x260] sm:%s248]
                %334 = vst [vmem:[%s256 + $0x130] sm:%s248] %v333
                %v335 = vld [vmem:[%s255 + $0x270] sm:%s248]
                %336 = vst [vmem:[%s256 + $0x138] sm:%s248] %v335
                %v337 = vld [vmem:[%s255 + $0x280] sm:%s248]
                %338 = vst [vmem:[%s256 + $0x140] sm:%s248] %v337
                %v339 = vld [vmem:[%s255 + $0x290] sm:%s248]
                %340 = vst [vmem:[%s256 + $0x148] sm:%s248] %v339
                %v341 = vld [vmem:[%s255 + $0x2a0] sm:%s248]
                %342 = vst [vmem:[%s256 + $0x150] sm:%s248] %v341
                %v343 = vld [vmem:[%s255 + $0x2b0] sm:%s248]
                %344 = vst [vmem:[%s256 + $0x158] sm:%s248] %v343
                %v345 = vld [vmem:[%s255 + $0x2c0] sm:%s248]
                %346 = vst [vmem:[%s256 + $0x160] sm:%s248] %v345
                %v347 = vld [vmem:[%s255 + $0x2d0] sm:%s248]
                %348 = vst [vmem:[%s256 + $0x168] sm:%s248] %v347
                %v349 = vld [vmem:[%s255 + $0x2e0] sm:%s248]
                %350 = vst [vmem:[%s256 + $0x170] sm:%s248] %v349
                %v351 = vld [vmem:[%s255 + $0x2f0] sm:%s248]
                %352 = vst [vmem:[%s256 + $0x178] sm:%s248] %v351
                %v353 = vld [vmem:[%s255 + $0x300] sm:%s248]
                %354 = vst [vmem:[%s256 + $0x180] sm:%s248] %v353
                %v355 = vld [vmem:[%s255 + $0x310] sm:%s248]
                %356 = vst [vmem:[%s256 + $0x188] sm:%s248] %v355
                %v357 = vld [vmem:[%s255 + $0x320] sm:%s248]
                %358 = vst [vmem:[%s256 + $0x190] sm:%s248] %v357
                %v359 = vld [vmem:[%s255 + $0x330] sm:%s248]
                %360 = vst [vmem:[%s256 + $0x198] sm:%s248] %v359
                %v361 = vld [vmem:[%s255 + $0x340] sm:%s248]
                %362 = vst [vmem:[%s256 + $0x1a0] sm:%s248] %v361
                %v363 = vld [vmem:[%s255 + $0x350] sm:%s248]
                %364 = vst [vmem:[%s256 + $0x1a8] sm:%s248] %v363
                %v365 = vld [vmem:[%s255 + $0x360] sm:%s248]
                %366 = vst [vmem:[%s256 + $0x1b0] sm:%s248] %v365
                %v367 = vld [vmem:[%s255 + $0x370] sm:%s248]
                %368 = vst [vmem:[%s256 + $0x1b8] sm:%s248] %v367
                %v369 = vld [vmem:[%s255 + $0x380] sm:%s248]
                %370 = vst [vmem:[%s256 + $0x1c0] sm:%s248] %v369
                %v371 = vld [vmem:[%s255 + $0x390] sm:%s248]
                %372 = vst [vmem:[%s256 + $0x1c8] sm:%s248] %v371
                %v373 = vld [vmem:[%s255 + $0x3a0] sm:%s248]
                %374 = vst [vmem:[%s256 + $0x1d0] sm:%s248] %v373
                %v375 = vld [vmem:[%s255 + $0x3b0] sm:%s248]
                %376 = vst [vmem:[%s256 + $0x1d8] sm:%s248] %v375
                %v377 = vld [vmem:[%s255 + $0x3c0] sm:%s248]
                %378 = vst [vmem:[%s256 + $0x1e0] sm:%s248] %v377
                %v379 = vld [vmem:[%s255 + $0x3d0] sm:%s248]
                %380 = vst [vmem:[%s256 + $0x1e8] sm:%s248] %v379
                %v381 = vld [vmem:[%s255 + $0x3e0] sm:%s248]
                %382 = vst [vmem:[%s256 + $0x1f0] sm:%s248] %v381
                %v383 = vld [vmem:[%s255 + $0x3f0] sm:%s248]
                %384 = vst [vmem:[%s256 + $0x1f8] sm:%s248] %v383
                %v385 = vld [vmem:[%s255 + $0x400] sm:%s248]
                %386 = vst [vmem:[%s256 + $0x200] sm:%s248] %v385
                %v387 = vld [vmem:[%s255 + $0x410] sm:%s248]
                %388 = vst [vmem:[%s256 + $0x208] sm:%s248] %v387
                %v389 = vld [vmem:[%s255 + $0x420] sm:%s248]
                %390 = vst [vmem:[%s256 + $0x210] sm:%s248] %v389
                %v391 = vld [vmem:[%s255 + $0x430] sm:%s248]
                %392 = vst [vmem:[%s256 + $0x218] sm:%s248] %v391
                %v393 = vld [vmem:[%s255 + $0x440] sm:%s248]
                %394 = vst [vmem:[%s256 + $0x220] sm:%s248] %v393
                %v395 = vld [vmem:[%s255 + $0x450] sm:%s248]
                %396 = vst [vmem:[%s256 + $0x228] sm:%s248] %v395
                %v397 = vld [vmem:[%s255 + $0x460] sm:%s248]
                %398 = vst [vmem:[%s256 + $0x230] sm:%s248] %v397
                %v399 = vld [vmem:[%s255 + $0x470] sm:%s248]
                %400 = vst [vmem:[%s256 + $0x238] sm:%s248] %v399
                %v401 = vld [vmem:[%s255 + $0x480] sm:%s248]
                %402 = vst [vmem:[%s256 + $0x240] sm:%s248] %v401
                %v403 = vld [vmem:[%s255 + $0x490] sm:%s248]
                %404 = vst [vmem:[%s256 + $0x248] sm:%s248] %v403
                %v405 = vld [vmem:[%s255 + $0x4a0] sm:%s248]
                %406 = vst [vmem:[%s256 + $0x250] sm:%s248] %v405
                %v407 = vld [vmem:[%s255 + $0x4b0] sm:%s248]
                %408 = vst [vmem:[%s256 + $0x258] sm:%s248] %v407
                %v409 = vld [vmem:[%s255 + $0x4c0] sm:%s248]
                %410 = vst [vmem:[%s256 + $0x260] sm:%s248] %v409
                %v411 = vld [vmem:[%s255 + $0x4d0] sm:%s248]
                %412 = vst [vmem:[%s256 + $0x268] sm:%s248] %v411
                %v413 = vld [vmem:[%s255 + $0x4e0] sm:%s248]
                %414 = vst [vmem:[%s256 + $0x270] sm:%s248] %v413
                %v415 = vld [vmem:[%s255 + $0x4f0] sm:%s248]
                %416 = vst [vmem:[%s256 + $0x278] sm:%s248] %v415
                %v417 = vld [vmem:[%s255 + $0x500] sm:%s248]
                %418 = vst [vmem:[%s256 + $0x280] sm:%s248] %v417
                %v419 = vld [vmem:[%s255 + $0x510] sm:%s248]
                %420 = vst [vmem:[%s256 + $0x288] sm:%s248] %v419
                %v421 = vld [vmem:[%s255 + $0x520] sm:%s248]
                %422 = vst [vmem:[%s256 + $0x290] sm:%s248] %v421
                %v423 = vld [vmem:[%s255 + $0x530] sm:%s248]
                %424 = vst [vmem:[%s256 + $0x298] sm:%s248] %v423
                %v425 = vld [vmem:[%s255 + $0x540] sm:%s248]
                %426 = vst [vmem:[%s256 + $0x2a0] sm:%s248] %v425
                %v427 = vld [vmem:[%s255 + $0x550] sm:%s248]
                %428 = vst [vmem:[%s256 + $0x2a8] sm:%s248] %v427
                %v429 = vld [vmem:[%s255 + $0x560] sm:%s248]
                %430 = vst [vmem:[%s256 + $0x2b0] sm:%s248] %v429
                %v431 = vld [vmem:[%s255 + $0x570] sm:%s248]
                %432 = vst [vmem:[%s256 + $0x2b8] sm:%s248] %v431
                %v433 = vld [vmem:[%s255 + $0x580] sm:%s248]
                %434 = vst [vmem:[%s256 + $0x2c0] sm:%s248] %v433
                %v435 = vld [vmem:[%s255 + $0x590] sm:%s248]
                %436 = vst [vmem:[%s256 + $0x2c8] sm:%s248] %v435
                %v437 = vld [vmem:[%s255 + $0x5a0] sm:%s248]
                %438 = vst [vmem:[%s256 + $0x2d0] sm:%s248] %v437
                %v439 = vld [vmem:[%s255 + $0x5b0] sm:%s248]
                %440 = vst [vmem:[%s256 + $0x2d8] sm:%s248] %v439
                %v441 = vld [vmem:[%s255 + $0x5c0] sm:%s248]
                %442 = vst [vmem:[%s256 + $0x2e0] sm:%s248] %v441
                %v443 = vld [vmem:[%s255 + $0x5d0] sm:%s248]
                %444 = vst [vmem:[%s256 + $0x2e8] sm:%s248] %v443
                %v445 = vld [vmem:[%s255 + $0x5e0] sm:%s248]
                %446 = vst [vmem:[%s256 + $0x2f0] sm:%s248] %v445
                %v447 = vld [vmem:[%s255 + $0x5f0] sm:%s248]
                %448 = vst [vmem:[%s256 + $0x2f8] sm:%s248] %v447
                %v449 = vld [vmem:[%s255 + $0x600] sm:%s248]
                %450 = vst [vmem:[%s256 + $0x300] sm:%s248] %v449
                %v451 = vld [vmem:[%s255 + $0x610] sm:%s248]
                %452 = vst [vmem:[%s256 + $0x308] sm:%s248] %v451
                %v453 = vld [vmem:[%s255 + $0x620] sm:%s248]
                %454 = vst [vmem:[%s256 + $0x310] sm:%s248] %v453
                %v455 = vld [vmem:[%s255 + $0x630] sm:%s248]
                %456 = vst [vmem:[%s256 + $0x318] sm:%s248] %v455
                %v457 = vld [vmem:[%s255 + $0x640] sm:%s248]
                %458 = vst [vmem:[%s256 + $0x320] sm:%s248] %v457
                %v459 = vld [vmem:[%s255 + $0x650] sm:%s248]
                %460 = vst [vmem:[%s256 + $0x328] sm:%s248] %v459
                %v461 = vld [vmem:[%s255 + $0x660] sm:%s248]
                %462 = vst [vmem:[%s256 + $0x330] sm:%s248] %v461
                %v463 = vld [vmem:[%s255 + $0x670] sm:%s248]
                %464 = vst [vmem:[%s256 + $0x338] sm:%s248] %v463
                %v465 = vld [vmem:[%s255 + $0x680] sm:%s248]
                %466 = vst [vmem:[%s256 + $0x340] sm:%s248] %v465
                %v467 = vld [vmem:[%s255 + $0x690] sm:%s248]
                %468 = vst [vmem:[%s256 + $0x348] sm:%s248] %v467
                %v469 = vld [vmem:[%s255 + $0x6a0] sm:%s248]
                %470 = vst [vmem:[%s256 + $0x350] sm:%s248] %v469
                %v471 = vld [vmem:[%s255 + $0x6b0] sm:%s248]
                %472 = vst [vmem:[%s256 + $0x358] sm:%s248] %v471
                %v473 = vld [vmem:[%s255 + $0x6c0] sm:%s248]
                %474 = vst [vmem:[%s256 + $0x360] sm:%s248] %v473
                %v475 = vld [vmem:[%s255 + $0x6d0] sm:%s248]
                %476 = vst [vmem:[%s256 + $0x368] sm:%s248] %v475
                %v477 = vld [vmem:[%s255 + $0x6e0] sm:%s248]
                %478 = vst [vmem:[%s256 + $0x370] sm:%s248] %v477
                %v479 = vld [vmem:[%s255 + $0x6f0] sm:%s248]
                %480 = vst [vmem:[%s256 + $0x378] sm:%s248] %v479
                %v481 = vld [vmem:[%s255 + $0x700] sm:%s248]
                %482 = vst [vmem:[%s256 + $0x380] sm:%s248] %v481
                %v483 = vld [vmem:[%s255 + $0x710] sm:%s248]
                %484 = vst [vmem:[%s256 + $0x388] sm:%s248] %v483
                %v485 = vld [vmem:[%s255 + $0x720] sm:%s248]
                %486 = vst [vmem:[%s256 + $0x390] sm:%s248] %v485
                %v487 = vld [vmem:[%s255 + $0x730] sm:%s248]
                %488 = vst [vmem:[%s256 + $0x398] sm:%s248] %v487
                %v489 = vld [vmem:[%s255 + $0x740] sm:%s248]
                %490 = vst [vmem:[%s256 + $0x3a0] sm:%s248] %v489
                %v491 = vld [vmem:[%s255 + $0x750] sm:%s248]
                %492 = vst [vmem:[%s256 + $0x3a8] sm:%s248] %v491
                %v493 = vld [vmem:[%s255 + $0x760] sm:%s248]
                %494 = vst [vmem:[%s256 + $0x3b0] sm:%s248] %v493
                %v495 = vld [vmem:[%s255 + $0x770] sm:%s248]
                %496 = vst [vmem:[%s256 + $0x3b8] sm:%s248] %v495
                %v497 = vld [vmem:[%s255 + $0x780] sm:%s248]
                %498 = vst [vmem:[%s256 + $0x3c0] sm:%s248] %v497
                %v499 = vld [vmem:[%s255 + $0x790] sm:%s248]
                %500 = vst [vmem:[%s256 + $0x3c8] sm:%s248] %v499
                %v501 = vld [vmem:[%s255 + $0x7a0] sm:%s248]
                %502 = vst [vmem:[%s256 + $0x3d0] sm:%s248] %v501
                %v503 = vld [vmem:[%s255 + $0x7b0] sm:%s248]
                %504 = vst [vmem:[%s256 + $0x3d8] sm:%s248] %v503
                %v505 = vld [vmem:[%s255 + $0x7c0] sm:%s248]
                %506 = vst [vmem:[%s256 + $0x3e0] sm:%s248] %v505
                %v507 = vld [vmem:[%s255 + $0x7d0] sm:%s248]
                %508 = vst [vmem:[%s256 + $0x3e8] sm:%s248] %v507
                %v509 = vld [vmem:[%s255 + $0x7e0] sm:%s248]
                %510 = vst [vmem:[%s256 + $0x3f0] sm:%s248] %v509
                %v511 = vld [vmem:[%s255 + $0x7f0] sm:%s248]
                %512 = vst [vmem:[%s256 + $0x3f8] sm:%s248] %v511
              $region61: #{s_backbone_forward.5} parent=55 // loop_footer
                %s254 = sadd.s32 1, %s250
              $region62: #{s_backbone_forward.5} parent=55 // loop_footer_branch
                %249 = sbr.rel target = $region58
              $region63: #{s_backbone_forward.5} parent=55 // loop_exit
                _
            $region56: #{s_backbone_forward.5} parent=47 // pred_fallthru
              _
          $region48: #{s_backbone_forward.5} parent=43 // pred_fallthru
            _
          %781 = vnop
        $region44: #{s_backbone_forward.5} parent=39 // pred_fallthru
          _
      $region40: #{s_backbone_forward.5} parent=5 // pred_fallthru
        _
      %p782 = scmp.le.s32.totalorder 1, %s16
      %p783 = scmp.lt.s32.totalorder %s16, 3
      %p784 = pnand %p782, %p783
      %p785 = pneg %p784
      // Predicated region
      $region79: #{s_backbone_forward.5} parent=5 // pred_check
        _
      $region80: #{s_backbone_forward.5} parent=5 // pred_check_branch
        %787 = sbr.rel (%p784) target = $region82
      $region81: #{s_backbone_forward.5} parent=5 // pred_region
        %s788 = ssub.s32 %s16, 1
        %s789 = sand.u32 %s29, 1
        %s790 = sand.u32 %s29, 1
        %s791 = smul.addr %s790, 1024
        %s792 = scalar_lea.vmem [#allocation2], %s791
        // Predicated region
        $region83: #{s_backbone_forward.5} parent=81 // pred_check
          %p793 = pneg %p42
        $region84: #{s_backbone_forward.5} parent=81 // pred_check_branch
          %795 = sbr.rel (%p793) target = $region86
        $region85: #{s_backbone_forward.5} parent=81 // pred_region
          _
        $region86: #{s_backbone_forward.5} parent=81 // pred_fallthru
          _
        %s796 = sand.u32 %s29, 1
        %s797 = sand.u32 %s29, 1
        %s798 = smul.addr %s797, 1024
        %s799 = scalar_lea.vmem [#allocation2], %s798
        %p800 = pneg %p42
        %p801 = pneg %p39
        %p802 = pneg %p63
        %p803 = pneg %p60
        %p804 = pneg %p84
        %p805 = pneg %p81
        %p806 = pneg %p105
        %p807 = pneg %p102
        %p808 = pneg %p126
        %p809 = pneg %p123
        %p810 = pneg %p147
        %p811 = pneg %p144
        %p812 = pneg %p168
        %p813 = pneg %p165
        %p814 = pneg %p194
        %p815 = pneg %p191
        %s816 = sand.u32 %s181, 1
        %s817 = scalar_lea.sflag [#allocation4], %s816
        %s818 = sand.u32 %s181, 1
        %s819 = scalar_lea.vmem [#allocation3], %s818
        %s820 = smul.u32 2, %s21
        %v821 = vld [vmem:[%s1] sm:$0xff]
        %v822 = vld [vmem:[%s1 + $0x8] sm:$0xff]
        %v823 = vld [vmem:[%s792] sm:$0xff]
        %v824 = vld [vmem:[%s792 + $0x8] sm:$0xff]
        %v825 = vld [vmem:[%s792 + $0x10] sm:$0xff]
        %v826 = vld [vmem:[%s792 + $0x18] sm:$0xff]
        %v827 = vld [vmem:[%s792 + $0x20] sm:$0xff]
        %v828 = vld [vmem:[%s792 + $0x28] sm:$0xff]
        %v829 = vld [vmem:[%s792 + $0x30] sm:$0xff]
        %v830 = vld [vmem:[%s792 + $0x38] sm:$0xff]
        %v831 = vld [vmem:[%s792 + $0x40] sm:$0xff]
        %v832 = vld [vmem:[%s792 + $0x48] sm:$0xff]
        %v833 = vld [vmem:[%s792 + $0x50] sm:$0xff]
        %v834 = vld [vmem:[%s792 + $0x58] sm:$0xff]
        %v835 = vld [vmem:[%s792 + $0x60] sm:$0xff]
        %v836 = vld [vmem:[%s792 + $0x68] sm:$0xff]
        %v837 = vld [vmem:[%s792 + $0x70] sm:$0xff]
        %v838 = vld [vmem:[%s792 + $0x78] sm:$0xff]
        %v839 = vld [vmem:[%s792 + $0x80] sm:$0xff]
        %v840 = vld [vmem:[%s792 + $0x88] sm:$0xff]
        %v841 = vld [vmem:[%s792 + $0x90] sm:$0xff]
        %v842 = vld [vmem:[%s792 + $0x98] sm:$0xff]
        %v843 = vld [vmem:[%s792 + $0xa0] sm:$0xff]
        %v844 = vld [vmem:[%s792 + $0xa8] sm:$0xff]
        %v845 = vld [vmem:[%s792 + $0xb0] sm:$0xff]
        %v846 = vld [vmem:[%s792 + $0xb8] sm:$0xff]
        %v847 = vld [vmem:[%s792 + $0xc0] sm:$0xff]
        %v848 = vld [vmem:[%s792 + $0xc8] sm:$0xff]
        %v849 = vld [vmem:[%s792 + $0xd0] sm:$0xff]
        %v850 = vld [vmem:[%s792 + $0xd8] sm:$0xff]
        %v851 = vld [vmem:[%s792 + $0xe0] sm:$0xff]
        %v852 = vld [vmem:[%s792 + $0xe8] sm:$0xff]
        %v853 = vld [vmem:[%s792 + $0xf0] sm:$0xff]
        %v854 = vld [vmem:[%s792 + $0xf8] sm:$0xff]
        %v855 = vld [vmem:[%s792 + $0x100] sm:$0xff]
        %v856 = vld [vmem:[%s792 + $0x108] sm:$0xff]
        %v857 = vld [vmem:[%s792 + $0x110] sm:$0xff]
        %v858 = vld [vmem:[%s792 + $0x118] sm:$0xff]
        %v859 = vld [vmem:[%s792 + $0x120] sm:$0xff]
        %v860 = vld [vmem:[%s792 + $0x128] sm:$0xff]
        %v861 = vld [vmem:[%s792 + $0x130] sm:$0xff]
        %v862 = vld [vmem:[%s792 + $0x138] sm:$0xff]
        %v863 = vld [vmem:[%s792 + $0x140] sm:$0xff]
        %v864 = vld [vmem:[%s792 + $0x148] sm:$0xff]
        %v865 = vld [vmem:[%s792 + $0x150] sm:$0xff]
        %v866 = vld [vmem:[%s792 + $0x158] sm:$0xff]
        %v867 = vld [vmem:[%s792 + $0x160] sm:$0xff]
        %v868 = vld [vmem:[%s792 + $0x168] sm:$0xff]
        %v869 = vld [vmem:[%s792 + $0x170] sm:$0xff]
        %v870 = vld [vmem:[%s792 + $0x178] sm:$0xff]
        %v871 = vld [vmem:[%s792 + $0x180] sm:$0xff]
        %v872 = vld [vmem:[%s792 + $0x188] sm:$0xff]
        %v873 = vld [vmem:[%s792 + $0x190] sm:$0xff]
        %v874 = vld [vmem:[%s792 + $0x198] sm:$0xff]
        %v875 = vld [vmem:[%s792 + $0x1a0] sm:$0xff]
        %v876 = vld [vmem:[%s792 + $0x1a8] sm:$0xff]
        %v877 = vld [vmem:[%s792 + $0x1b0] sm:$0xff]
        %v878 = vld [vmem:[%s792 + $0x1b8] sm:$0xff]
        %v879 = vld [vmem:[%s792 + $0x1c0] sm:$0xff]
        %v880 = vld [vmem:[%s792 + $0x1c8] sm:$0xff]
        %v881 = vld [vmem:[%s792 + $0x1d0] sm:$0xff]
        %v882 = vld [vmem:[%s792 + $0x1d8] sm:$0xff]
        %v883 = vld [vmem:[%s792 + $0x1e0] sm:$0xff]
        %v884 = vld [vmem:[%s792 + $0x1e8] sm:$0xff]
        %v885 = vld [vmem:[%s792 + $0x1f0] sm:$0xff]
        %v886 = vld [vmem:[%s792 + $0x1f8] sm:$0xff]
        %v887 = vld [vmem:[%s792 + $0x200] sm:$0xff]
        %v888 = vld [vmem:[%s792 + $0x208] sm:$0xff]
        %v889 = vld [vmem:[%s792 + $0x210] sm:$0xff]
        %v890 = vld [vmem:[%s792 + $0x218] sm:$0xff]
        %v891 = vld [vmem:[%s792 + $0x220] sm:$0xff]
        %v892 = vld [vmem:[%s792 + $0x228] sm:$0xff]
        %v893 = vld [vmem:[%s792 + $0x230] sm:$0xff]
        %v894 = vld [vmem:[%s792 + $0x238] sm:$0xff]
        %v895 = vld [vmem:[%s792 + $0x240] sm:$0xff]
        %v896 = vld [vmem:[%s792 + $0x248] sm:$0xff]
        %v897 = vld [vmem:[%s792 + $0x250] sm:$0xff]
        %v898 = vld [vmem:[%s792 + $0x258] sm:$0xff]
        %v899 = vld [vmem:[%s792 + $0x260] sm:$0xff]
        %v900 = vld [vmem:[%s792 + $0x268] sm:$0xff]
        %v901 = vld [vmem:[%s792 + $0x270] sm:$0xff]
        %v902 = vld [vmem:[%s792 + $0x278] sm:$0xff]
        %v903 = vld [vmem:[%s792 + $0x280] sm:$0xff]
        %v904 = vld [vmem:[%s792 + $0x288] sm:$0xff]
        %v905 = vld [vmem:[%s792 + $0x290] sm:$0xff]
        %v906 = vld [vmem:[%s792 + $0x298] sm:$0xff]
        %v907 = vld [vmem:[%s792 + $0x2a0] sm:$0xff]
        %v908 = vld [vmem:[%s792 + $0x2a8] sm:$0xff]
        %v909 = vld [vmem:[%s792 + $0x2b0] sm:$0xff]
        %v910 = vld [vmem:[%s792 + $0x2b8] sm:$0xff]
        %v911 = vld [vmem:[%s792 + $0x2c0] sm:$0xff]
        %v912 = vld [vmem:[%s792 + $0x2c8] sm:$0xff]
        %v913 = vld [vmem:[%s792 + $0x2d0] sm:$0xff]
        %v914 = vld [vmem:[%s792 + $0x2d8] sm:$0xff]
        %v915 = vld [vmem:[%s792 + $0x2e0] sm:$0xff]
        %v916 = vld [vmem:[%s792 + $0x2e8] sm:$0xff]
        %v917 = vld [vmem:[%s792 + $0x2f0] sm:$0xff]
        %v918 = vld [vmem:[%s792 + $0x2f8] sm:$0xff]
        %v919 = vld [vmem:[%s792 + $0x300] sm:$0xff]
        %v920 = vld [vmem:[%s792 + $0x308] sm:$0xff]
        %v921 = vld [vmem:[%s792 + $0x310] sm:$0xff]
        %v922 = vld [vmem:[%s792 + $0x318] sm:$0xff]
        %v923 = vld [vmem:[%s792 + $0x320] sm:$0xff]
        %v924 = vld [vmem:[%s792 + $0x328] sm:$0xff]
        %v925 = vld [vmem:[%s792 + $0x330] sm:$0xff]
        %v926 = vld [vmem:[%s792 + $0x338] sm:$0xff]
        %v927 = vld [vmem:[%s792 + $0x340] sm:$0xff]
        %v928 = vld [vmem:[%s792 + $0x348] sm:$0xff]
        %v929 = vld [vmem:[%s792 + $0x350] sm:$0xff]
        %v930 = vld [vmem:[%s792 + $0x358] sm:$0xff]
        %v931 = vld [vmem:[%s792 + $0x360] sm:$0xff]
        %v932 = vld [vmem:[%s792 + $0x368] sm:$0xff]
        %v933 = vld [vmem:[%s792 + $0x370] sm:$0xff]
        %v934 = vld [vmem:[%s792 + $0x378] sm:$0xff]
        %v935 = vld [vmem:[%s792 + $0x380] sm:$0xff]
        %v936 = vld [vmem:[%s792 + $0x388] sm:$0xff]
        %v937 = vld [vmem:[%s792 + $0x390] sm:$0xff]
        %v938 = vld [vmem:[%s792 + $0x398] sm:$0xff]
        %v939 = vld [vmem:[%s792 + $0x3a0] sm:$0xff]
        %v940 = vld [vmem:[%s792 + $0x3a8] sm:$0xff]
        %v941 = vld [vmem:[%s792 + $0x3b0] sm:$0xff]
        %v942 = vld [vmem:[%s792 + $0x3b8] sm:$0xff]
        %v943 = vld [vmem:[%s792 + $0x3c0] sm:$0xff]
        %v944 = vld [vmem:[%s792 + $0x3c8] sm:$0xff]
        %v945 = vld [vmem:[%s792 + $0x3d0] sm:$0xff]
        %v946 = vld [vmem:[%s792 + $0x3d8] sm:$0xff]
        %v947 = vld [vmem:[%s792 + $0x3e0] sm:$0xff]
        %v948 = vld [vmem:[%s792 + $0x3e8] sm:$0xff]
        %v949 = vld [vmem:[%s792 + $0x3f0] sm:$0xff]
        %v950 = vld [vmem:[%s792 + $0x3f8] sm:$0xff]
        %v953 = vcombine.high %v821, %v821
        %v955 = vunpack.c.l.s4 1983009808
        %v956 = vunpack.c.0.s8 %v955
        %v957 = vlaneseq
        %v958 = vshrl.u32 %v957, 7
        %v959 = vsub.s32 %v956, %v958
        %v960 = vrot.slane %v821, %v959
        %v962 = vunpack.c.l.s4 1983009808
        %v963 = vunpack.c.0.s8 %v962
        %v964 = vlaneseq
        %v965 = vshrl.u32 %v964, 7
        %v966 = vsub.s32 %v963, %v965
        %v967 = vrot.slane %v953, %v966
        %v968 = vcombine.high %v960, %v960
        %v969 = vcombine.high %v967, %v967
        %v970 = vcombine.high %v822, %v822
        %v972 = vunpack.c.l.s4 1983009808
        %v973 = vunpack.c.0.s8 %v972
        %v974 = vlaneseq
        %v975 = vshrl.u32 %v974, 7
        %v976 = vsub.s32 %v973, %v975
        %v977 = vrot.slane %v822, %v976
        %v979 = vunpack.c.l.s4 1983009808
        %v980 = vunpack.c.0.s8 %v979
        %v981 = vlaneseq
        %v982 = vshrl.u32 %v981, 7
        %v983 = vsub.s32 %v980, %v982
        %v984 = vrot.slane %v970, %v983
        %v985 = vcombine.high %v977, %v977
        %v986 = vcombine.high %v984, %v984
        %v1123 = vunpack.c.l.b16 %v823
        %v1124 = vunpack.c.h.b16 %v823
        %v1125 = vunpack.c.l.b16 %v824
        %v1126 = vunpack.c.h.b16 %v824
        %v1127 = vunpack.c.l.b16 %v825
        %v1128 = vunpack.c.h.b16 %v825
        %v1129 = vunpack.c.l.b16 %v826
        %v1130 = vunpack.c.h.b16 %v826
        %v1131 = vunpack.c.l.b16 %v827
        %v1132 = vunpack.c.h.b16 %v827
        %v1133 = vunpack.c.l.b16 %v828
        %v1134 = vunpack.c.h.b16 %v828
        %v1135 = vunpack.c.l.b16 %v829
        %v1136 = vunpack.c.h.b16 %v829
        %v1137 = vunpack.c.l.b16 %v830
        %v1138 = vunpack.c.h.b16 %v830
        %v1139 = vunpack.c.l.b16 %v831
        %v1140 = vunpack.c.h.b16 %v831
        %v1141 = vunpack.c.l.b16 %v832
        %v1142 = vunpack.c.h.b16 %v832
        %v1143 = vunpack.c.l.b16 %v833
        %v1144 = vunpack.c.h.b16 %v833
        %v1145 = vunpack.c.l.b16 %v834
        %v1146 = vunpack.c.h.b16 %v834
        %v1147 = vunpack.c.l.b16 %v835
        %v1148 = vunpack.c.h.b16 %v835
        %v1149 = vunpack.c.l.b16 %v836
        %v1150 = vunpack.c.h.b16 %v836
        %v1151 = vunpack.c.l.b16 %v837
        %v1152 = vunpack.c.h.b16 %v837
        %v1153 = vunpack.c.l.b16 %v838
        %v1154 = vunpack.c.h.b16 %v838
        %v1155 = vunpack.c.l.b16 %v839
        %v1156 = vunpack.c.h.b16 %v839
        %v1157 = vunpack.c.l.b16 %v840
        %v1158 = vunpack.c.h.b16 %v840
        %v1159 = vunpack.c.l.b16 %v841
        %v1160 = vunpack.c.h.b16 %v841
        %v1161 = vunpack.c.l.b16 %v842
        %v1162 = vunpack.c.h.b16 %v842
        %v1163 = vunpack.c.l.b16 %v843
        %v1164 = vunpack.c.h.b16 %v843
        %v1165 = vunpack.c.l.b16 %v844
        %v1166 = vunpack.c.h.b16 %v844
        %v1167 = vunpack.c.l.b16 %v845
        %v1168 = vunpack.c.h.b16 %v845
        %v1169 = vunpack.c.l.b16 %v846
        %v1170 = vunpack.c.h.b16 %v846
        %v1171 = vunpack.c.l.b16 %v847
        %v1172 = vunpack.c.h.b16 %v847
        %v1173 = vunpack.c.l.b16 %v848
        %v1174 = vunpack.c.h.b16 %v848
        %v1175 = vunpack.c.l.b16 %v849
        %v1176 = vunpack.c.h.b16 %v849
        %v1177 = vunpack.c.l.b16 %v850
        %v1178 = vunpack.c.h.b16 %v850
        %v1179 = vunpack.c.l.b16 %v851
        %v1180 = vunpack.c.h.b16 %v851
        %v1181 = vunpack.c.l.b16 %v852
        %v1182 = vunpack.c.h.b16 %v852
        %v1183 = vunpack.c.l.b16 %v853
        %v1184 = vunpack.c.h.b16 %v853
        %v1185 = vunpack.c.l.b16 %v854
        %v1186 = vunpack.c.h.b16 %v854
        %v1187 = vunpack.c.l.b16 %v855
        %v1188 = vunpack.c.h.b16 %v855
        %v1189 = vunpack.c.l.b16 %v856
        %v1190 = vunpack.c.h.b16 %v856
        %v1191 = vunpack.c.l.b16 %v857
        %v1192 = vunpack.c.h.b16 %v857
        %v1193 = vunpack.c.l.b16 %v858
        %v1194 = vunpack.c.h.b16 %v858
        %v1195 = vunpack.c.l.b16 %v859
        %v1196 = vunpack.c.h.b16 %v859
        %v1197 = vunpack.c.l.b16 %v860
        %v1198 = vunpack.c.h.b16 %v860
        %v1199 = vunpack.c.l.b16 %v861
        %v1200 = vunpack.c.h.b16 %v861
        %v1201 = vunpack.c.l.b16 %v862
        %v1202 = vunpack.c.h.b16 %v862
        %v1203 = vunpack.c.l.b16 %v863
        %v1204 = vunpack.c.h.b16 %v863
        %v1205 = vunpack.c.l.b16 %v864
        %v1206 = vunpack.c.h.b16 %v864
        %v1207 = vunpack.c.l.b16 %v865
        %v1208 = vunpack.c.h.b16 %v865
        %v1209 = vunpack.c.l.b16 %v866
        %v1210 = vunpack.c.h.b16 %v866
        %v1211 = vunpack.c.l.b16 %v867
        %v1212 = vunpack.c.h.b16 %v867
        %v1213 = vunpack.c.l.b16 %v868
        %v1214 = vunpack.c.h.b16 %v868
        %v1215 = vunpack.c.l.b16 %v869
        %v1216 = vunpack.c.h.b16 %v869
        %v1217 = vunpack.c.l.b16 %v870
        %v1218 = vunpack.c.h.b16 %v870
        %v1219 = vunpack.c.l.b16 %v871
        %v1220 = vunpack.c.h.b16 %v871
        %v1221 = vunpack.c.l.b16 %v872
        %v1222 = vunpack.c.h.b16 %v872
        %v1223 = vunpack.c.l.b16 %v873
        %v1224 = vunpack.c.h.b16 %v873
        %v1225 = vunpack.c.l.b16 %v874
        %v1226 = vunpack.c.h.b16 %v874
        %v1227 = vunpack.c.l.b16 %v875
        %v1228 = vunpack.c.h.b16 %v875
        %v1229 = vunpack.c.l.b16 %v876
        %v1230 = vunpack.c.h.b16 %v876
        %v1231 = vunpack.c.l.b16 %v877
        %v1232 = vunpack.c.h.b16 %v877
        %v1233 = vunpack.c.l.b16 %v878
        %v1234 = vunpack.c.h.b16 %v878
        %v1235 = vunpack.c.l.b16 %v879
        %v1236 = vunpack.c.h.b16 %v879
        %v1237 = vunpack.c.l.b16 %v880
        %v1238 = vunpack.c.h.b16 %v880
        %v1239 = vunpack.c.l.b16 %v881
        %v1240 = vunpack.c.h.b16 %v881
        %v1241 = vunpack.c.l.b16 %v882
        %v1242 = vunpack.c.h.b16 %v882
        %v1243 = vunpack.c.l.b16 %v883
        %v1244 = vunpack.c.h.b16 %v883
        %v1245 = vunpack.c.l.b16 %v884
        %v1246 = vunpack.c.h.b16 %v884
        %v1247 = vunpack.c.l.b16 %v885
        %v1248 = vunpack.c.h.b16 %v885
        %v1249 = vunpack.c.l.b16 %v886
        %v1250 = vunpack.c.h.b16 %v886
        %v1251 = vunpack.c.l.b16 %v887
        %v1252 = vunpack.c.h.b16 %v887
        %v1253 = vunpack.c.l.b16 %v888
        %v1254 = vunpack.c.h.b16 %v888
        %v1255 = vunpack.c.l.b16 %v889
        %v1256 = vunpack.c.h.b16 %v889
        %v1257 = vunpack.c.l.b16 %v890
        %v1258 = vunpack.c.h.b16 %v890
        %v1259 = vunpack.c.l.b16 %v891
        %v1260 = vunpack.c.h.b16 %v891
        %v1261 = vunpack.c.l.b16 %v892
        %v1262 = vunpack.c.h.b16 %v892
        %v1263 = vunpack.c.l.b16 %v893
        %v1264 = vunpack.c.h.b16 %v893
        %v1265 = vunpack.c.l.b16 %v894
        %v1266 = vunpack.c.h.b16 %v894
        %v1267 = vunpack.c.l.b16 %v895
        %v1268 = vunpack.c.h.b16 %v895
        %v1269 = vunpack.c.l.b16 %v896
        %v1270 = vunpack.c.h.b16 %v896
        %v1271 = vunpack.c.l.b16 %v897
        %v1272 = vunpack.c.h.b16 %v897
        %v1273 = vunpack.c.l.b16 %v898
        %v1274 = vunpack.c.h.b16 %v898
        %v1275 = vunpack.c.l.b16 %v899
        %v1276 = vunpack.c.h.b16 %v899
        %v1277 = vunpack.c.l.b16 %v900
        %v1278 = vunpack.c.h.b16 %v900
        %v1279 = vunpack.c.l.b16 %v901
        %v1280 = vunpack.c.h.b16 %v901
        %v1281 = vunpack.c.l.b16 %v902
        %v1282 = vunpack.c.h.b16 %v902
        %v1283 = vunpack.c.l.b16 %v903
        %v1284 = vunpack.c.h.b16 %v903
        %v1285 = vunpack.c.l.b16 %v904
        %v1286 = vunpack.c.h.b16 %v904
        %v1287 = vunpack.c.l.b16 %v905
        %v1288 = vunpack.c.h.b16 %v905
        %v1289 = vunpack.c.l.b16 %v906
        %v1290 = vunpack.c.h.b16 %v906
        %v1291 = vunpack.c.l.b16 %v907
        %v1292 = vunpack.c.h.b16 %v907
        %v1293 = vunpack.c.l.b16 %v908
        %v1294 = vunpack.c.h.b16 %v908
        %v1295 = vunpack.c.l.b16 %v909
        %v1296 = vunpack.c.h.b16 %v909
        %v1297 = vunpack.c.l.b16 %v910
        %v1298 = vunpack.c.h.b16 %v910
        %v1299 = vunpack.c.l.b16 %v911
        %v1300 = vunpack.c.h.b16 %v911
        %v1301 = vunpack.c.l.b16 %v912
        %v1302 = vunpack.c.h.b16 %v912
        %v1303 = vunpack.c.l.b16 %v913
        %v1304 = vunpack.c.h.b16 %v913
        %v1305 = vunpack.c.l.b16 %v914
        %v1306 = vunpack.c.h.b16 %v914
        %v1307 = vunpack.c.l.b16 %v915
        %v1308 = vunpack.c.h.b16 %v915
        %v1309 = vunpack.c.l.b16 %v916
        %v1310 = vunpack.c.h.b16 %v916
        %v1311 = vunpack.c.l.b16 %v917
        %v1312 = vunpack.c.h.b16 %v917
        %v1313 = vunpack.c.l.b16 %v918
        %v1314 = vunpack.c.h.b16 %v918
        %v1315 = vunpack.c.l.b16 %v919
        %v1316 = vunpack.c.h.b16 %v919
        %v1317 = vunpack.c.l.b16 %v920
        %v1318 = vunpack.c.h.b16 %v920
        %v1319 = vunpack.c.l.b16 %v921
        %v1320 = vunpack.c.h.b16 %v921
        %v1321 = vunpack.c.l.b16 %v922
        %v1322 = vunpack.c.h.b16 %v922
        %v1323 = vunpack.c.l.b16 %v923
        %v1324 = vunpack.c.h.b16 %v923
        %v1325 = vunpack.c.l.b16 %v924
        %v1326 = vunpack.c.h.b16 %v924
        %v1327 = vunpack.c.l.b16 %v925
        %v1328 = vunpack.c.h.b16 %v925
        %v1329 = vunpack.c.l.b16 %v926
        %v1330 = vunpack.c.h.b16 %v926
        %v1331 = vunpack.c.l.b16 %v927
        %v1332 = vunpack.c.h.b16 %v927
        %v1333 = vunpack.c.l.b16 %v928
        %v1334 = vunpack.c.h.b16 %v928
        %v1335 = vunpack.c.l.b16 %v929
        %v1336 = vunpack.c.h.b16 %v929
        %v1337 = vunpack.c.l.b16 %v930
        %v1338 = vunpack.c.h.b16 %v930
        %v1339 = vunpack.c.l.b16 %v931
        %v1340 = vunpack.c.h.b16 %v931
        %v1341 = vunpack.c.l.b16 %v932
        %v1342 = vunpack.c.h.b16 %v932
        %v1343 = vunpack.c.l.b16 %v933
        %v1344 = vunpack.c.h.b16 %v933
        %v1345 = vunpack.c.l.b16 %v934
        %v1346 = vunpack.c.h.b16 %v934
        %v1347 = vunpack.c.l.b16 %v935
        %v1348 = vunpack.c.h.b16 %v935
        %v1349 = vunpack.c.l.b16 %v936
        %v1350 = vunpack.c.h.b16 %v936
        %v1351 = vunpack.c.l.b16 %v937
        %v1352 = vunpack.c.h.b16 %v937
        %v1353 = vunpack.c.l.b16 %v938
        %v1354 = vunpack.c.h.b16 %v938
        %v1355 = vunpack.c.l.b16 %v939
        %v1356 = vunpack.c.h.b16 %v939
        %v1357 = vunpack.c.l.b16 %v940
        %v1358 = vunpack.c.h.b16 %v940
        %v1359 = vunpack.c.l.b16 %v941
        %v1360 = vunpack.c.h.b16 %v941
        %v1361 = vunpack.c.l.b16 %v942
        %v1362 = vunpack.c.h.b16 %v942
        %v1363 = vunpack.c.l.b16 %v943
        %v1364 = vunpack.c.h.b16 %v943
        %v1365 = vunpack.c.l.b16 %v944
        %v1366 = vunpack.c.h.b16 %v944
        %v1367 = vunpack.c.l.b16 %v945
        %v1368 = vunpack.c.h.b16 %v945
        %v1369 = vunpack.c.l.b16 %v946
        %v1370 = vunpack.c.h.b16 %v946
        %v1371 = vunpack.c.l.b16 %v947
        %v1372 = vunpack.c.h.b16 %v947
        %v1373 = vunpack.c.l.b16 %v948
        %v1374 = vunpack.c.h.b16 %v948
        %v1375 = vunpack.c.l.b16 %v949
        %v1376 = vunpack.c.h.b16 %v949
        %v1377 = vunpack.c.l.b16 %v950
        %v1378 = vunpack.c.h.b16 %v950
        %v1379 = vpack.c.b16 %v1125, %v1123
        %v1380 = vpack.c.b16 %v1126, %v1124
        %v1381 = vpack.c.b16 %v1129, %v1127
        %v1382 = vpack.c.b16 %v1130, %v1128
        %v1383 = vpack.c.b16 %v1133, %v1131
        %v1384 = vpack.c.b16 %v1134, %v1132
        %v1385 = vpack.c.b16 %v1137, %v1135
        %v1386 = vpack.c.b16 %v1138, %v1136
        %v1387 = vpack.c.b16 %v1141, %v1139
        %v1388 = vpack.c.b16 %v1142, %v1140
        %v1389 = vpack.c.b16 %v1145, %v1143
        %v1390 = vpack.c.b16 %v1146, %v1144
        %v1391 = vpack.c.b16 %v1149, %v1147
        %v1392 = vpack.c.b16 %v1150, %v1148
        %v1393 = vpack.c.b16 %v1153, %v1151
        %v1394 = vpack.c.b16 %v1154, %v1152
        %v1395 = vpack.c.b16 %v1157, %v1155
        %v1396 = vpack.c.b16 %v1158, %v1156
        %v1397 = vpack.c.b16 %v1161, %v1159
        %v1398 = vpack.c.b16 %v1162, %v1160
        %v1399 = vpack.c.b16 %v1165, %v1163
        %v1400 = vpack.c.b16 %v1166, %v1164
        %v1401 = vpack.c.b16 %v1169, %v1167
        %v1402 = vpack.c.b16 %v1170, %v1168
        %v1403 = vpack.c.b16 %v1173, %v1171
        %v1404 = vpack.c.b16 %v1174, %v1172
        %v1405 = vpack.c.b16 %v1177, %v1175
        %v1406 = vpack.c.b16 %v1178, %v1176
        %v1407 = vpack.c.b16 %v1181, %v1179
        %v1408 = vpack.c.b16 %v1182, %v1180
        %v1409 = vpack.c.b16 %v1185, %v1183
        %v1410 = vpack.c.b16 %v1186, %v1184
        %v1411 = vpack.c.b16 %v1189, %v1187
        %v1412 = vpack.c.b16 %v1190, %v1188
        %v1413 = vpack.c.b16 %v1193, %v1191
        %v1414 = vpack.c.b16 %v1194, %v1192
        %v1415 = vpack.c.b16 %v1197, %v1195
        %v1416 = vpack.c.b16 %v1198, %v1196
        %v1417 = vpack.c.b16 %v1201, %v1199
        %v1418 = vpack.c.b16 %v1202, %v1200
        %v1419 = vpack.c.b16 %v1205, %v1203
        %v1420 = vpack.c.b16 %v1206, %v1204
        %v1421 = vpack.c.b16 %v1209, %v1207
        %v1422 = vpack.c.b16 %v1210, %v1208
        %v1423 = vpack.c.b16 %v1213, %v1211
        %v1424 = vpack.c.b16 %v1214, %v1212
        %v1425 = vpack.c.b16 %v1217, %v1215
        %v1426 = vpack.c.b16 %v1218, %v1216
        %v1427 = vpack.c.b16 %v1221, %v1219
        %v1428 = vpack.c.b16 %v1222, %v1220
        %v1429 = vpack.c.b16 %v1225, %v1223
        %v1430 = vpack.c.b16 %v1226, %v1224
        %v1431 = vpack.c.b16 %v1229, %v1227
        %v1432 = vpack.c.b16 %v1230, %v1228
        %v1433 = vpack.c.b16 %v1233, %v1231
        %v1434 = vpack.c.b16 %v1234, %v1232
        %v1435 = vpack.c.b16 %v1237, %v1235
        %v1436 = vpack.c.b16 %v1238, %v1236
        %v1437 = vpack.c.b16 %v1241, %v1239
        %v1438 = vpack.c.b16 %v1242, %v1240
        %v1439 = vpack.c.b16 %v1245, %v1243
        %v1440 = vpack.c.b16 %v1246, %v1244
        %v1441 = vpack.c.b16 %v1249, %v1247
        %v1442 = vpack.c.b16 %v1250, %v1248
        %v1443 = vpack.c.b16 %v1253, %v1251
        %v1444 = vpack.c.b16 %v1254, %v1252
        %v1445 = vpack.c.b16 %v1257, %v1255
        %v1446 = vpack.c.b16 %v1258, %v1256
        %v1447 = vpack.c.b16 %v1261, %v1259
        %v1448 = vpack.c.b16 %v1262, %v1260
        %v1449 = vpack.c.b16 %v1265, %v1263
        %v1450 = vpack.c.b16 %v1266, %v1264
        %v1451 = vpack.c.b16 %v1269, %v1267
        %v1452 = vpack.c.b16 %v1270, %v1268
        %v1453 = vpack.c.b16 %v1273, %v1271
        %v1454 = vpack.c.b16 %v1274, %v1272
        %v1455 = vpack.c.b16 %v1277, %v1275
        %v1456 = vpack.c.b16 %v1278, %v1276
        %v1457 = vpack.c.b16 %v1281, %v1279
        %v1458 = vpack.c.b16 %v1282, %v1280
        %v1459 = vpack.c.b16 %v1285, %v1283
        %v1460 = vpack.c.b16 %v1286, %v1284
        %v1461 = vpack.c.b16 %v1289, %v1287
        %v1462 = vpack.c.b16 %v1290, %v1288
        %v1463 = vpack.c.b16 %v1293, %v1291
        %v1464 = vpack.c.b16 %v1294, %v1292
        %v1465 = vpack.c.b16 %v1297, %v1295
        %v1466 = vpack.c.b16 %v1298, %v1296
        %v1467 = vpack.c.b16 %v1301, %v1299
        %v1468 = vpack.c.b16 %v1302, %v1300
        %v1469 = vpack.c.b16 %v1305, %v1303
        %v1470 = vpack.c.b16 %v1306, %v1304
        %v1471 = vpack.c.b16 %v1309, %v1307
        %v1472 = vpack.c.b16 %v1310, %v1308
        %v1473 = vpack.c.b16 %v1313, %v1311
        %v1474 = vpack.c.b16 %v1314, %v1312
        %v1475 = vpack.c.b16 %v1317, %v1315
        %v1476 = vpack.c.b16 %v1318, %v1316
        %v1477 = vpack.c.b16 %v1321, %v1319
        %v1478 = vpack.c.b16 %v1322, %v1320
        %v1479 = vpack.c.b16 %v1325, %v1323
        %v1480 = vpack.c.b16 %v1326, %v1324
        %v1481 = vpack.c.b16 %v1329, %v1327
        %v1482 = vpack.c.b16 %v1330, %v1328
        %v1483 = vpack.c.b16 %v1333, %v1331
        %v1484 = vpack.c.b16 %v1334, %v1332
        %v1485 = vpack.c.b16 %v1337, %v1335
        %v1486 = vpack.c.b16 %v1338, %v1336
        %v1487 = vpack.c.b16 %v1341, %v1339
        %v1488 = vpack.c.b16 %v1342, %v1340
        %v1489 = vpack.c.b16 %v1345, %v1343
        %v1490 = vpack.c.b16 %v1346, %v1344
        %v1491 = vpack.c.b16 %v1349, %v1347
        %v1492 = vpack.c.b16 %v1350, %v1348
        %v1493 = vpack.c.b16 %v1353, %v1351
        %v1494 = vpack.c.b16 %v1354, %v1352
        %v1495 = vpack.c.b16 %v1357, %v1355
        %v1496 = vpack.c.b16 %v1358, %v1356
        %v1497 = vpack.c.b16 %v1361, %v1359
        %v1498 = vpack.c.b16 %v1362, %v1360
        %v1499 = vpack.c.b16 %v1365, %v1363
        %v1500 = vpack.c.b16 %v1366, %v1364
        %v1501 = vpack.c.b16 %v1369, %v1367
        %v1502 = vpack.c.b16 %v1370, %v1368
        %v1503 = vpack.c.b16 %v1373, %v1371
        %v1504 = vpack.c.b16 %v1374, %v1372
        %v1505 = vpack.c.b16 %v1377, %v1375
        %v1506 = vpack.c.b16 %v1378, %v1376
        %1635 = vmatprep.subr.bf16.mxu0 %v1394
        %1636 = vmatpush1.bf16.msra.mxu0 %v1393
        %1637 = vmatprep.subr.bf16.mxu0 %v1392
        %1638 = vmatpush1.bf16.msra.mxu0 %v1391
        %1639 = vmatprep.subr.bf16.mxu0 %v1390
        %1640 = vmatpush1.bf16.msra.mxu0 %v1389
        %1641 = vmatprep.subr.bf16.mxu0 %v1388
        %1642 = vmatpush1.bf16.msra.mxu0 %v1387
        %1643 = vmatprep.subr.bf16.mxu0 %v1386
        %1644 = vmatpush1.bf16.msra.mxu0 %v1385
        %1645 = vmatprep.subr.bf16.mxu0 %v1384
        %1646 = vmatpush1.bf16.msra.mxu0 %v1383
        %1647 = vmatprep.subr.bf16.mxu0 %v1382
        %1648 = vmatpush1.bf16.msra.mxu0 %v1381
        %1649 = vmatprep.subr.bf16.mxu0 %v1380
        %1650 = vmatpush1.bf16.msra.mxu0 %v1379
        %1651 = vmatprep.subr.bf16.mxu0 %v1410
        %1652 = vmatpush2.bf16.msra.mxu0 %v1409
        %1653 = vmatprep.subr.bf16.mxu0 %v1408
        %1654 = vmatpush2.bf16.msra.mxu0 %v1407
        %1655 = vmatprep.subr.bf16.mxu0 %v1406
        %1656 = vmatpush2.bf16.msra.mxu0 %v1405
        %1657 = vmatprep.subr.bf16.mxu0 %v1404
        %1658 = vmatpush2.bf16.msra.mxu0 %v1403
        %1659 = vmatprep.subr.bf16.mxu0 %v1402
        %1660 = vmatpush2.bf16.msra.mxu0 %v1401
        %1661 = vmatprep.subr.bf16.mxu0 %v1400
        %1662 = vmatpush2.bf16.msra.mxu0 %v1399
        %1663 = vmatprep.subr.bf16.mxu0 %v1398
        %1664 = vmatpush2.bf16.msra.mxu0 %v1397
        %1665 = vmatprep.subr.bf16.mxu0 %v1396
        %1666 = vmatpush2.bf16.msra.mxu0 %v1395
        %1667 = vmatprep.mubr.bf16.mxu0 %v968
        %1668 = vmatmul.mubr.bf16.gmra.mxu0 %v960
        %v1669 = vpop.f32.mrf.mxu0
        %v1670 = vadd.f32 0.0, %v1669
        %v1671 = vpop.f32.mrf.mxu0
        %v1672 = vadd.f32 0.0, %v1671
        %v1673 = vpop.f32.mrf.mxu0
        %v1674 = vpop.f32.mrf.mxu0
        %1675 = vdwg.mxu0
        %1676 = vmatprep.subr.bf16.mxu0 %v1426
        %1677 = vmatpush1.bf16.msra.mxu0 %v1425
        %1678 = vmatprep.subr.bf16.mxu0 %v1424
        %1679 = vmatpush1.bf16.msra.mxu0 %v1423
        %1680 = vmatprep.subr.bf16.mxu0 %v1422
        %1681 = vmatpush1.bf16.msra.mxu0 %v1421
        %1682 = vmatprep.subr.bf16.mxu0 %v1420
        %1683 = vmatpush1.bf16.msra.mxu0 %v1419
        %1684 = vmatprep.subr.bf16.mxu0 %v1418
        %1685 = vmatpush1.bf16.msra.mxu0 %v1417
        %1686 = vmatprep.subr.bf16.mxu0 %v1416
        %1687 = vmatpush1.bf16.msra.mxu0 %v1415
        %1688 = vmatprep.subr.bf16.mxu0 %v1414
        %1689 = vmatpush1.bf16.msra.mxu0 %v1413
        %1690 = vmatprep.subr.bf16.mxu0 %v1412
        %1691 = vmatpush1.bf16.msra.mxu0 %v1411
        %1692 = vmatprep.subr.bf16.mxu0 %v1442
        %1693 = vmatpush2.bf16.msra.mxu0 %v1441
        %1694 = vmatprep.subr.bf16.mxu0 %v1440
        %1695 = vmatpush2.bf16.msra.mxu0 %v1439
        %1696 = vmatprep.subr.bf16.mxu0 %v1438
        %1697 = vmatpush2.bf16.msra.mxu0 %v1437
        %1698 = vmatprep.subr.bf16.mxu0 %v1436
        %1699 = vmatpush2.bf16.msra.mxu0 %v1435
        %1700 = vmatprep.subr.bf16.mxu0 %v1434
        %1701 = vmatpush2.bf16.msra.mxu0 %v1433
        %1702 = vmatprep.subr.bf16.mxu0 %v1432
        %1703 = vmatpush2.bf16.msra.mxu0 %v1431
        %1704 = vmatprep.subr.bf16.mxu0 %v1430
        %1705 = vmatpush2.bf16.msra.mxu0 %v1429
        %1706 = vmatprep.subr.bf16.mxu0 %v1428
        %1707 = vmatpush2.bf16.msra.mxu0 %v1427
        %1708 = vmatprep.mubr.bf16.mxu0 %v969
        %1709 = vmatmul.mubr.bf16.gmra.mxu0 %v967
        %v1710 = vpop.f32.mrf.mxu0
        %v1711 = vadd.f32 %v1670, %v1710
        %v1712 = vpop.f32.mrf.mxu0
        %v1713 = vadd.f32 %v1672, %v1712
        %v1714 = vpop.f32.mrf.mxu0
        %v1715 = vpop.f32.mrf.mxu0
        %1716 = vdwg.mxu0
        %1717 = vmatprep.subr.bf16.mxu0 %v1458
        %1718 = vmatpush1.bf16.msra.mxu0 %v1457
        %1719 = vmatprep.subr.bf16.mxu0 %v1456
        %1720 = vmatpush1.bf16.msra.mxu0 %v1455
        %1721 = vmatprep.subr.bf16.mxu0 %v1454
        %1722 = vmatpush1.bf16.msra.mxu0 %v1453
        %1723 = vmatprep.subr.bf16.mxu0 %v1452
        %1724 = vmatpush1.bf16.msra.mxu0 %v1451
        %1725 = vmatprep.subr.bf16.mxu0 %v1450
        %1726 = vmatpush1.bf16.msra.mxu0 %v1449
        %1727 = vmatprep.subr.bf16.mxu0 %v1448
        %1728 = vmatpush1.bf16.msra.mxu0 %v1447
        %1729 = vmatprep.subr.bf16.mxu0 %v1446
        %1730 = vmatpush1.bf16.msra.mxu0 %v1445
        %1731 = vmatprep.subr.bf16.mxu0 %v1444
        %1732 = vmatpush1.bf16.msra.mxu0 %v1443
        %1733 = vmatprep.subr.bf16.mxu0 %v1474
        %1734 = vmatpush2.bf16.msra.mxu0 %v1473
        %1735 = vmatprep.subr.bf16.mxu0 %v1472
        %1736 = vmatpush2.bf16.msra.mxu0 %v1471
        %1737 = vmatprep.subr.bf16.mxu0 %v1470
        %1738 = vmatpush2.bf16.msra.mxu0 %v1469
        %1739 = vmatprep.subr.bf16.mxu0 %v1468
        %1740 = vmatpush2.bf16.msra.mxu0 %v1467
        %1741 = vmatprep.subr.bf16.mxu0 %v1466
        %1742 = vmatpush2.bf16.msra.mxu0 %v1465
        %1743 = vmatprep.subr.bf16.mxu0 %v1464
        %1744 = vmatpush2.bf16.msra.mxu0 %v1463
        %1745 = vmatprep.subr.bf16.mxu0 %v1462
        %1746 = vmatpush2.bf16.msra.mxu0 %v1461
        %1747 = vmatprep.subr.bf16.mxu0 %v1460
        %1748 = vmatpush2.bf16.msra.mxu0 %v1459
        %1749 = vmatprep.mubr.bf16.mxu0 %v985
        %1750 = vmatmul.mubr.bf16.gmra.mxu0 %v977
        %v1751 = vpop.f32.mrf.mxu0
        %v1752 = vadd.f32 %v1711, %v1751
        %v1753 = vpop.f32.mrf.mxu0
        %v1754 = vadd.f32 %v1713, %v1753
        %v1755 = vpop.f32.mrf.mxu0
        %v1756 = vpop.f32.mrf.mxu0
        %1757 = vdwg.mxu0
        %1758 = vmatprep.subr.bf16.mxu0 %v1490
        %1759 = vmatpush1.bf16.msra.mxu0 %v1489
        %1760 = vmatprep.subr.bf16.mxu0 %v1488
        %1761 = vmatpush1.bf16.msra.mxu0 %v1487
        %1762 = vmatprep.subr.bf16.mxu0 %v1486
        %1763 = vmatpush1.bf16.msra.mxu0 %v1485
        %1764 = vmatprep.subr.bf16.mxu0 %v1484
        %1765 = vmatpush1.bf16.msra.mxu0 %v1483
        %1766 = vmatprep.subr.bf16.mxu0 %v1482
        %1767 = vmatpush1.bf16.msra.mxu0 %v1481
        %1768 = vmatprep.subr.bf16.mxu0 %v1480
        %1769 = vmatpush1.bf16.msra.mxu0 %v1479
        %1770 = vmatprep.subr.bf16.mxu0 %v1478
        %1771 = vmatpush1.bf16.msra.mxu0 %v1477
        %1772 = vmatprep.subr.bf16.mxu0 %v1476
        %1773 = vmatpush1.bf16.msra.mxu0 %v1475
        %1774 = vmatprep.subr.bf16.mxu0 %v1506
        %1775 = vmatpush2.bf16.msra.mxu0 %v1505
        %1776 = vmatprep.subr.bf16.mxu0 %v1504
        %1777 = vmatpush2.bf16.msra.mxu0 %v1503
        %1778 = vmatprep.subr.bf16.mxu0 %v1502
        %1779 = vmatpush2.bf16.msra.mxu0 %v1501
        %1780 = vmatprep.subr.bf16.mxu0 %v1500
        %1781 = vmatpush2.bf16.msra.mxu0 %v1499
        %1782 = vmatprep.subr.bf16.mxu0 %v1498
        %1783 = vmatpush2.bf16.msra.mxu0 %v1497
        %1784 = vmatprep.subr.bf16.mxu0 %v1496
        %1785 = vmatpush2.bf16.msra.mxu0 %v1495
        %1786 = vmatprep.subr.bf16.mxu0 %v1494
        %1787 = vmatpush2.bf16.msra.mxu0 %v1493
        %1788 = vmatprep.subr.bf16.mxu0 %v1492
        %1789 = vmatpush2.bf16.msra.mxu0 %v1491
        %1790 = vmatprep.mubr.bf16.mxu0 %v986
        %1791 = vmatmul.mubr.bf16.gmra.mxu0 %v984
        %v1792 = vpop.f32.mrf.mxu0
        %v1793 = vadd.f32 %v1752, %v1792
        %v1794 = vpop.f32.mrf.mxu0
        %v1795 = vadd.f32 %v1754, %v1794
        %v1796 = vpop.f32.mrf.mxu0
        %v1797 = vpop.f32.mrf.mxu0
        %1798 = vdwg.mxu0
        %1800 = vrot.lane.b32.xlu0 %v1793, 96
        %v1801 = vpop.permute.xlu0 %1800
        %v1803 = vmax.f32 %v1793, %v1801
        %v1804 = vmin.f32 %v1793, %v1801
        %1805 = vrot.lane.b32.xlu0 %v1793, 64
        %v1806 = vpop.permute.xlu0 %1805
        %v1808 = vmax.f32 %v1803, %v1806
        %v1809 = vmin.f32 %v1804, %v1806
        %1810 = vrot.lane.b32.xlu0 %v1793, 32
        %v1811 = vpop.permute.xlu0 %1810
        %v1813 = vmax.f32 %v1808, %v1811
        %v1814 = vmin.f32 %v1809, %v1811
        %v1815 = vmax.f32 %v1813, %v1795
        %v1816 = vmin.f32 %v1814, %v1795
        %1818 = vrot.lane.b32.xlu0 %v1795, 96
        %v1819 = vpop.permute.xlu0 %1818
        %v1821 = vmax.f32 %v1815, %v1819
        %v1822 = vmin.f32 %v1816, %v1819
        %1823 = vrot.lane.b32.xlu0 %v1795, 64
        %v1824 = vpop.permute.xlu0 %1823
        %v1826 = vmax.f32 %v1821, %v1824
        %v1827 = vmin.f32 %v1822, %v1824
        %1828 = vrot.lane.b32.xlu0 %v1795, 32
        %v1829 = vpop.permute.xlu0 %1828
        %v1831 = vmax.f32 %v1826, %v1829
        %v1832 = vmin.f32 %v1827, %v1829
        %v1833 = vld [vmem:[%s3] sm:$0xf]
        %vm1834 = vcmp.ge.f32.partialorder %v1833, 0.0
        %v1835 = vsel %vm1834, 1, 0
        %1836 = vset.pattern.permute.xlu0 0
        %1837 = vperm.xlu0 %1836, %v1835
        %v1838 = vpop.permute.xlu0 %1837
        %vm1839 = vcmp.eq.s32.totalorder %v1838, 1
        %v1840 = vsel %vm1839, %v1831, %v1832
        %v1841 = vld [vmem:[%s2] sm:$0xf]
        %1843 = vset.pattern.permute.xlu0 0
        %1844 = vperm.xlu0 %1843, %v1841
        %v1845 = vpop.permute.xlu0 %1844
        %v1847 = vadd.f32 %v1840, %v1845
        %vm1848 = vcmp.gt.f32.partialorder %v1847, 0.0
        %v1849 = vmin.f32 %v1847, 0.0
        %v1850 = vmul.f32 %v1849, 1.442695
        %v1851 = vpow.pop %v1850
        %v1852 = vsub.f32 %v1851, 1.0
        %v1853 = vsel %vm1848, %v1847, %v1852
        %1855 = vset.pattern.permute.xlu0 0
        %1856 = vperm.xlu0 %1855, %v1833
        %v1857 = vpop.permute.xlu0 %1856
        %v1859 = vmul.f32 %v1853, %v1857
        %v1860 = vld [vmem:[%s4] sm:$0xf]
        %1862 = vset.pattern.permute.xlu0 0
        %1863 = vperm.xlu0 %1862, %v1860
        %v1864 = vpop.permute.xlu0 %1863
        %v1866 = vadd.f32 %v1859, %v1864
        %v1868 = vrot.slane %v1866, 1
        %1869 = vrot.lane.b32.xlu0 %v1868, 32
        %v1870 = vpop.permute.xlu0 %1869
        %v1872 = vrot.slane %v1866, 2
        %1873 = vrot.lane.b32.xlu0 %v1872, 64
        %v1874 = vpop.permute.xlu0 %1873
        %v1876 = vrot.slane %v1866, 3
        %1877 = vrot.lane.b32.xlu0 %v1876, 96
        %v1878 = vpop.permute.xlu0 %1877
        %vm1880 = vcmask 261120
        %v1881 = vsel %vm1880, %v1866, %v1870
        %vm1882 = vcmask 523264
        %v1883 = vsel %vm1882, %v1881, %v1874
        %vm1884 = vcmask 785408
        %v1885 = vsel %vm1884, %v1883, %v1878
        %v1886 = vld [vmem:[%s5] sm:$0xff]
        %v1887 = vld [vmem:[%s5 + $0x8] sm:$0xff]
        %v1888 = vld [vmem:[%s5 + $0x10] sm:$0xff]
        %v1889 = vld [vmem:[%s5 + $0x18] sm:$0xff]
        %v1890 = vld [vmem:[%s5 + $0x20] sm:$0xff]
        %v1891 = vld [vmem:[%s5 + $0x28] sm:$0xff]
        %v1892 = vld [vmem:[%s5 + $0x30] sm:$0xff]
        %v1893 = vld [vmem:[%s5 + $0x38] sm:$0xff]
        %v1894 = vld [vmem:[%s5 + $0x40] sm:$0xff]
        %v1895 = vld [vmem:[%s5 + $0x48] sm:$0xff]
        %v1896 = vld [vmem:[%s5 + $0x50] sm:$0xff]
        %v1897 = vld [vmem:[%s5 + $0x58] sm:$0xff]
        %v1898 = vld [vmem:[%s5 + $0x60] sm:$0xff]
        %v1899 = vld [vmem:[%s5 + $0x68] sm:$0xff]
        %v1900 = vld [vmem:[%s5 + $0x70] sm:$0xff]
        %v1901 = vld [vmem:[%s5 + $0x78] sm:$0xff]
        %v1902 = vld [vmem:[%s6] sm:$0x1]
        %1903 = vmatprep.subr.mxu0 0.0
        %1904 = vmatpush1.msra.mxu0 %v1901
        %1905 = vmatprep.subr.mxu0 0.0
        %1906 = vmatpush1.msra.mxu0 %v1900
        %1907 = vmatprep.subr.mxu0 0.0
        %1908 = vmatpush1.msra.mxu0 %v1899
        %1909 = vmatprep.subr.mxu0 0.0
        %1910 = vmatpush1.msra.mxu0 %v1898
        %1911 = vmatprep.subr.mxu0 0.0
        %1912 = vmatpush1.msra.mxu0 %v1897
        %1913 = vmatprep.subr.mxu0 0.0
        %1914 = vmatpush1.msra.mxu0 %v1896
        %1915 = vmatprep.subr.mxu0 0.0
        %1916 = vmatpush1.msra.mxu0 %v1895
        %1917 = vmatprep.subr.mxu0 0.0
        %1918 = vmatpush1.msra.mxu0 %v1894
        %1919 = vmatprep.subr.mxu0 0.0
        %1920 = vmatpush1.msra.mxu0 %v1893
        %1921 = vmatprep.subr.mxu0 0.0
        %1922 = vmatpush1.msra.mxu0 %v1892
        %1923 = vmatprep.subr.mxu0 0.0
        %1924 = vmatpush1.msra.mxu0 %v1891
        %1925 = vmatprep.subr.mxu0 0.0
        %1926 = vmatpush1.msra.mxu0 %v1890
        %1927 = vmatprep.subr.mxu0 0.0
        %1928 = vmatpush1.msra.mxu0 %v1889
        %1929 = vmatprep.subr.mxu0 0.0
        %1930 = vmatpush1.msra.mxu0 %v1888
        %1931 = vmatprep.subr.mxu0 0.0
        %1932 = vmatpush1.msra.mxu0 %v1887
        %1933 = vmatprep.subr.mxu0 0.0
        %1934 = vmatpush1.msra.mxu0 %v1886
        %1935 = vmatprep.subr.mxu0 0.0
        %1936 = vmatpush2.msra.mxu0 0.0
        %1937 = vmatprep.subr.mxu0 0.0
        %1938 = vmatpush2.msra.mxu0 0.0
        %1939 = vmatprep.subr.mxu0 0.0
        %1940 = vmatpush2.msra.mxu0 0.0
        %1941 = vmatprep.subr.mxu0 0.0
        %1942 = vmatpush2.msra.mxu0 0.0
        %1943 = vmatprep.subr.mxu0 0.0
        %1944 = vmatpush2.msra.mxu0 0.0
        %1945 = vmatprep.subr.mxu0 0.0
        %1946 = vmatpush2.msra.mxu0 0.0
        %1947 = vmatprep.subr.mxu0 0.0
        %1948 = vmatpush2.msra.mxu0 0.0
        %1949 = vmatprep.subr.mxu0 0.0
        %1950 = vmatpush2.msra.mxu0 0.0
        %1951 = vmatprep.subr.mxu0 0.0
        %1952 = vmatpush2.msra.mxu0 0.0
        %1953 = vmatprep.subr.mxu0 0.0
        %1954 = vmatpush2.msra.mxu0 0.0
        %1955 = vmatprep.subr.mxu0 0.0
        %1956 = vmatpush2.msra.mxu0 0.0
        %1957 = vmatprep.subr.mxu0 0.0
        %1958 = vmatpush2.msra.mxu0 0.0
        %1959 = vmatprep.subr.mxu0 0.0
        %1960 = vmatpush2.msra.mxu0 0.0
        %1961 = vmatprep.subr.mxu0 0.0
        %1962 = vmatpush2.msra.mxu0 0.0
        %1963 = vmatprep.subr.mxu0 0.0
        %1964 = vmatpush2.msra.mxu0 0.0
        %1965 = vmatprep.subr.mxu0 0.0
        %1966 = vmatpush2.msra.mxu0 0.0
        %1967 = vmatprep.mubr.f32.mxu0 0.0
        %1968 = vmatmul.mubr.f32.gmra.mxu0 %v1885
        %v1969 = vpop.f32.mrf.mxu0
        %v1970 = vadd.f32 %v1902, %v1969
        %v1971 = vpop.f32.mrf.mxu0
        %1972 = vdwg.mxu0
        %v1973 = vsub.f32 0.0, %v1970
        %v1974 = vmin.f32 %v1973, 60.0
        %v1975 = vmul.f32 %v1974, 1.442695
        %v1976 = vpow.pop %v1975
        %v1977 = vadd.f32 %v1976, 1.0
        %v1978 = vrcp.pop %v1977
        %v1979 = vmul.f32 1.0, %v1978
        %vm1980 = vcmask 155648
        %1981 = vst.msk [vmem:[%s819] sm:$0x1] %vm1980, %v1979
        %s1982 = sand.u32 %s181, 1
        %s1983 = scalar_lea.sflag [#allocation4], %s1982
        %s1984 = sand.u32 %s181, 1
        %s1985 = scalar_lea.vmem [#allocation3], %s1984
        // Predicated region
        $region87: #{s_backbone_forward.5} parent=81 // pred_check
          %p1986 = pneg %p191
        $region88: #{s_backbone_forward.5} parent=81 // pred_check_branch
          %1988 = sbr.rel (%p1986) target = $region90
        $region89: #{s_backbone_forward.5} parent=81 // pred_region
          %s1990 = ssub.s32 16, 16
          %1991 = vsyncadd %s1983, %s1990
          %s1992 = smul.addr %s21, 16
          %s1993 = scalar_lea.hbm %s7, %s1992
          %s1995 = sshll.u32 %s1985, 4
          %s1996 = int_to_ptr.vmem [resolvable:$true] %s1995
          %1998 = dma.vmem_to_hbm [thread:$0]  %s1996, 16, %s1993, %s1983
        $region90: #{s_backbone_forward.5} parent=81 // pred_fallthru
          _
      $region82: #{s_backbone_forward.5} parent=5 // pred_fallthru
        _
      %p1999 = scmp.le.s32.totalorder 2, %s16
      // Predicated region
      $region91: #{s_backbone_forward.5} parent=5 // pred_check
        %p2000 = pneg %p1999
      $region92: #{s_backbone_forward.5} parent=5 // pred_check_branch
        %2002 = sbr.rel (%p2000) target = $region94
      $region93: #{s_backbone_forward.5} parent=5 // pred_region
        %s2003 = ssub.s32 %s16, 2
        // Predicated region
        $region95: #{s_backbone_forward.5} parent=93 // pred_check
          %p2004 = pneg %p197
        $region96: #{s_backbone_forward.5} parent=93 // pred_check_branch
          %2006 = sbr.rel (%p2004) target = $region98
        $region97: #{s_backbone_forward.5} parent=93 // pred_region
          %s2007 = sand.u32 %s182, 1
          %s2008 = scalar_lea.sflag [#allocation4], %s2007
          %s2009 = sand.u32 %s182, 1
          %s2010 = scalar_lea.vmem [#allocation3], %s2009
          %2011 = dma.done %s2008, 16
        $region98: #{s_backbone_forward.5} parent=93 // pred_fallthru
          _
      $region94: #{s_backbone_forward.5} parent=5 // pred_fallthru
        _
    $region6: #{s_backbone_forward.5} parent=1 // loop_footer
      %s20 = sadd.s32 1, %s16
    $region7: #{s_backbone_forward.5} parent=1 // loop_footer_branch
      %15 = sbr.rel target = $region3
    $region8: #{s_backbone_forward.5} parent=1 // loop_exit
      _
    %2012 = vsyncpa [#allocation4], 1
    %s2013 = scalar_lea.sflag [#allocation4], 1
    %2014 = vsyncpa %s2013, 1

</llo_original>
